<compile_context>
chip_gen: v6e
topology: v6e:2x2x1
jax: 0.10.0
libtpu: 0.0.40
codegen_flags: <defaults>
</compile_context>

<pallas_src>
import math

import numpy as np
import jax
import jax.numpy as jnp
from jax.experimental import pallas as pl
from jax.experimental.pallas import tpu as pltpu


# ----------------------------------------------------------------------------
# Kernel
# ----------------------------------------------------------------------------
def _make_attention_kernel(rp, n_perm, use_group_max, approx_recip):
    """rp = R * H * H * D  (lane width of each of q_exp / k_exp / v_exp)."""

    def kernel(x_ref, wexp_ref, bexp_ref, cred_ref, csum_ref, perm_ref,
               datt_ref, wfo_ref, bo_ref, o_ref, qkv_scr):
        # Fused projection + head-pair expansion: ONE (TM, R*E) @ (R*E, 3*R*P)
        # MXU matmul (bf16 operands, f32 accumulation), bias added once.
        # Column layout: [ q_exp | k_exp | v_exp ].  Kept in a VMEM scratch so
        # the three expanded slabs need not all be register-live at once.
        qkv_scr[...] = jnp.dot(x_ref[...], wexp_ref[...],
                               preferred_element_type=jnp.float32) + bexp_ref[...]

        q_exp = qkv_scr[:, pl.ds(0, rp)]
        k_exp = qkv_scr[:, pl.ds(rp, rp)]

        # scores[m, g*H*H + i*H + j] = scale * <q_g[i,:], k_g[j,:]>
        # (softmax scale folded into cred on the host).
        scores = jnp.dot(q_exp * k_exp, cred_ref[...],
                         preferred_element_type=jnp.float32)

        if use_group_max:
            # Exact per-(row, head) max via an XOR butterfly of 0/1 permutation
            # matmuls (each softmax group is H contiguous lanes).  Guarantees
            # den >= 1, so no underflow / inf path.
            gmax = scores
            for t in range(n_perm):
                gmax = jnp.maximum(
                    gmax,
                    jnp.dot(gmax, perm_ref[t],
                            preferred_element_type=jnp.float32))
            e = jnp.exp(scores - gmax)
            den = jnp.dot(e, csum_ref[...], preferred_element_type=jnp.float32)
        else:
            # Fallback (H not a power of two): global row max + eps clamp.
            m_row = jnp.max(scores, axis=-1, keepdims=True)
            e = jnp.exp(scores - m_row)
            den = jnp.maximum(
                jnp.dot(e, csum_ref[...], preferred_element_type=jnp.float32),
                1e-30)

        if approx_recip:
            attn = e * pl.reciprocal(den, approx=True)   # EUP slot
        else:
            attn = e / den

        # Broadcast attn over d, weight v, and apply the fused (f_out @ Wo^T)
        # output projection in ONE matmul.  v_exp is sliced late on purpose.
        attn_exp = jnp.dot(attn, datt_ref[...],
                           preferred_element_type=jnp.float32)
        v_exp = qkv_scr[:, pl.ds(2 * rp, rp)]
        weighted = (attn_exp * v_exp).astype(wfo_ref.dtype)
        y = jnp.dot(weighted, wfo_ref[...],
                    preferred_element_type=jnp.float32) + bo_ref[...]
        o_ref[...] = y.astype(o_ref.dtype)

    return kernel


# ----------------------------------------------------------------------------
# Host-side constant construction
# ----------------------------------------------------------------------------
def _head_pair_helpers(num_heads, head_dim, scale):
    """0/1 helper matrices for the (H x H) head-pair expansion (one row)."""
    H, D = num_heads, head_dim
    E, HH = H * D, H * H
    P = HH * D
    a_q = np.zeros((3 * E, P), np.float32)     # q[i,d] -> col (i*H+j)*D+d
    b_k = np.zeros((3 * E, P), np.float32)     # k[j,d] -> col (i*H+j)*D+d
    c_v = np.zeros((3 * E, P), np.float32)     # v[j,d] -> col (i*H+j)*D+d
    c_red = np.zeros((P, HH), np.float32)      # sum_d (* scale)  -> col i*H+j
    c_sum = np.zeros((HH, HH), np.float32)     # sum_j within head group i
    d_att = np.zeros((HH, P), np.float32)      # attn[i,j] -> col (i*H+j)*D+d
    f_out = np.zeros((P, E), np.float32)       # sum_j -> col i*D+d
    for i in range(H):
        for j in range(H):
            c = i * H + j
            c_sum[i * H:(i + 1) * H, c] = 1.0
            for d in range(D):
                col = c * D + d
                a_q[i * D + d, col] = 1.0
                b_k[E + j * D + d, col] = 1.0
                c_v[2 * E + j * D + d, col] = 1.0
                c_red[col, c] = scale
                d_att[c, col] = 1.0
                f_out[col, i * D + d] = 1.0
    return a_q, b_k, c_v, c_red, c_sum, d_att, f_out


def _block_diag(mat, reps):
    a, b = mat.shape
    out = np.zeros((reps * a, reps * b), mat.dtype)
    for g in range(reps):
        out[g * a:(g + 1) * a, g * b:(g + 1) * b] = mat
    return out


def _build_constants(params, num_heads, head_dim, reps, matmul_dtype):
    """Fuse the expansion matrices into the projection weights (exact 0/1
    gathers) and pack everything R-way block-diagonally for lane-dense rows."""
    H, D, R = num_heads, head_dim, reps
    E, HH = H * D, H * H
    P = HH * D
    scale = 1.0 / math.sqrt(D)

    wq, wk, wv, wo, bq, bk, bv, bo = [np.asarray(p, np.float32) for p in params]
    wqkv = np.concatenate([wq.T, wk.T, wv.T], axis=1)            # (E, 3E)
    bqkv = np.concatenate([bq, bk, bv])[None, :]                 # (1, 3E)
    a_q, b_k, c_v, c_red, c_sum, d_att, f_out = _head_pair_helpers(H, D, scale)

    # Each helper column/row has a single 1, so these fusions are exact
    # gathers — folding before the bf16 cast changes nothing numerically.
    w_q_exp, w_k_exp, w_v_exp = wqkv @ a_q, wqkv @ b_k, wqkv @ c_v   # (E, P)
    b_q_exp, b_k_exp, b_v_exp = bqkv @ a_q, bqkv @ b_k, bqkv @ c_v   # (1, P)
    w_fo = f_out @ wo.T                                              # (P, E)

    RE, RP, RHH = R * E, R * P, R * HH
    w_exp_blk = np.zeros((RE, 3 * RP), np.float32)
    for g in range(R):
        rows = slice(g * E, (g + 1) * E)
        w_exp_blk[rows, 0 * RP + g * P:0 * RP + (g + 1) * P] = w_q_exp
        w_exp_blk[rows, 1 * RP + g * P:1 * RP + (g + 1) * P] = w_k_exp
        w_exp_blk[rows, 2 * RP + g * P:2 * RP + (g + 1) * P] = w_v_exp
    b_exp_blk = np.concatenate([np.tile(b_q_exp, (1, R)),
                                np.tile(b_k_exp, (1, R)),
                                np.tile(b_v_exp, (1, R))], axis=1)   # (1, 3RP)
    cred_blk = _block_diag(c_red, R)                                 # (RP, RHH)
    csum_blk = _block_diag(c_sum, R)                                 # (RHH, RHH)
    datt_blk = _block_diag(d_att, R)                                 # (RHH, RP)
    wfo_blk = _block_diag(w_fo, R)                                   # (RP, RE)
    bo_blk = np.tile(bo[None, :], (1, R))                            # (1, RE)

    # XOR-butterfly permutations for the per-head-group max (H power of two).
    use_group_max = H > 1 and (H & (H - 1)) == 0
    n_perm = int(round(math.log2(H))) if use_group_max else 1
    perms = np.zeros((n_perm, RHH, RHH), np.float32)
    if use_group_max:
        idx = np.arange(RHH)
        for t in range(n_perm):
            perms[t, idx, idx ^ (1 << t)] = 1.0

    consts = (
        jnp.asarray(w_exp_blk, matmul_dtype),
        jnp.asarray(b_exp_blk, jnp.float32),
        jnp.asarray(cred_blk, jnp.float32),
        jnp.asarray(csum_blk, jnp.float32),
        jnp.asarray(perms, jnp.float32),
        jnp.asarray(datt_blk, jnp.float32),
        jnp.asarray(wfo_blk, matmul_dtype),
        jnp.asarray(bo_blk, jnp.float32),
    )
    return consts, use_group_max, n_perm


def _num_tensorcores():
    """Best-effort TensorCores-per-chip (2 on v7x, else 1); never raises."""
    try:
        info = pltpu.get_tpu_info()
        for attr in ("num_cores", "core_count", "tensorcores_per_chip"):
            v = getattr(info, attr, None)
            if isinstance(v, int) and v > 0:
                return min(int(v), 2)
    except Exception:
        pass
    try:
        v = getattr(jax.devices()[0], "num_cores", None)
        if isinstance(v, int) and v > 0:
            return min(int(v), 2)
    except Exception:
        pass
    return 1


# ----------------------------------------------------------------------------
# Wrapper
# ----------------------------------------------------------------------------
def optimized_attention_forward(x, params, num_heads, head_dim, *,
                                block_m=256, matmul_dtype=jnp.bfloat16,
                                approx_reciprocal=True):
    """x: (B, S, E) with E = num_heads * head_dim.  Returns (B, S, E)."""
    B, S, E = x.shape
    H, D = num_heads, head_dim
    assert E == H * D
    P = H * H * D
    # Head-pair expansion scales as O(H^2 * D) lanes — guard against blowing
    # VMEM on large head counts (see TODO at top of file).
    assert P <= 1024, "head-pair expansion path expects small H*H*D"

    # Lane-dense row packing: R logical rows per 128-lane physical row.
    R = (128 // E) if (E < 128 and 128 % E == 0) else 1
    RE, RP = R * E, R * P

    consts, use_group_max, n_perm = _build_constants(
        params, num_heads, head_dim, R, matmul_dtype)

    M = B * S
    M_r = pl.cdiv(M, R) * R            # logical rows rounded to packing factor
    Mp = M_r // R                      # physical rows

    x2 = x.reshape(M, E).astype(matmul_dtype)
    if M_r != M:
        x2 = jnp.pad(x2, ((0, M_r - M), (0, 0)))
    x2 = x2.reshape(Mp, RE)

    # Row tile: as big as requested; only keep >= 2 grid steps when the chip
    # actually has 2 TensorCores (v7x megacore).  On v5e/v6e the split would be
    # a serial loop that just pays per-grid-step overhead.
    gran = 16 if jnp.dtype(matmul_dtype).itemsize < 4 else 8
    ncores = _num_tensorcores()
    tm_cap = pl.cdiv(Mp, ncores) if ncores > 1 else Mp
    tm = max(gran, min(block_m, tm_cap))
    tm = pl.cdiv(tm, gran) * gran
    grid_m = pl.cdiv(Mp, tm)
    m_pad = grid_m * tm
    if m_pad != Mp:
        x2 = jnp.pad(x2, ((0, m_pad - Mp), (0, 0)))   # padded rows sliced off below

    # Derived VMEM budget: I/O blocks (double-buffered) + constants + scratch,
    # with headroom; clamped under v7x's 64 MiB physical VMEM.
    const_bytes = sum(int(c.size) * c.dtype.itemsize for c in consts)
    io_bytes = 2 * tm * RE * (jnp.dtype(matmul_dtype).itemsize
                              + jnp.dtype(x.dtype).itemsize)
    scratch_bytes = tm * 3 * RP * 4
    vmem_limit = int(1.5 * (2 * const_bytes + io_bytes + scratch_bytes)) + (2 << 20)
    vmem_limit = int(min(max(vmem_limit, 4 << 20), 64 << 20))

    kernel = _make_attention_kernel(RP, n_perm, use_group_max, approx_reciprocal)
    row_spec = pl.BlockSpec((tm, RE), lambda i: (i, 0))

    def const_spec(arr, single_buffer):
        zero = (0,) * arr.ndim
        imap = lambda i: zero
        if single_buffer:
            # Grid-invariant residents: single-buffer to halve their footprint
            # and cut per-input DMA descriptors.
            return pl.BlockSpec(arr.shape, imap, pipeline_mode=pl.Buffered(1))
        return pl.BlockSpec(arr.shape, imap)

    def build(single_buffer):
        return pl.pallas_call(
            kernel,
            out_shape=jax.ShapeDtypeStruct((m_pad, RE), x.dtype),
            grid_spec=pltpu.PrefetchScalarGridSpec(
                num_scalar_prefetch=0,
                grid=(grid_m,),
                in_specs=[row_spec] + [const_spec(c, single_buffer)
                                       for c in consts],
                out_specs=pl.BlockSpec((tm, RE), lambda i: (i, 0)),
                scratch_shapes=[pltpu.VMEM((tm, 3 * RP), jnp.float32)],
            ),
            compiler_params=pltpu.CompilerParams(
                dimension_semantics=("parallel",),
                vmem_limit_bytes=vmem_limit,
            ),
        )

    try:
        out2 = build(True)(x2, *consts)
    except Exception:
        # pl.Buffered(1) not supported by this jax version: fall back to the
        # default double-buffered constants (identical numerics).
        out2 = build(False)(x2, *consts)

    out2 = out2[:Mp].reshape(M_r, E)[:M]
    return out2.reshape(B, S, E)


# ----------------------------------------------------------------------------
# Reference / init
# ----------------------------------------------------------------------------
def init_params(key, embed_dim):
    """Deterministic xavier_uniform weights, zero biases (matches __init__)."""
    E = embed_dim
    limit = math.sqrt(6.0 / (E + E))
    ks = jax.random.split(key, 4)
    wq = jax.random.uniform(ks[0], (E, E), jnp.float32, -limit, limit)
    wk = jax.random.uniform(ks[1], (E, E), jnp.float32, -limit, limit)
    wv = jax.random.uniform(ks[2], (E, E), jnp.float32, -limit, limit)
    wo = jax.random.uniform(ks[3], (E, E), jnp.float32, -limit, limit)
    zb = jnp.zeros((E,), jnp.float32)
    return (wq, wk, wv, wo, zb, zb, zb, zb)


def reference_forward(x, params, num_heads, head_dim, matmul_dtype=jnp.float32):
    """Pure-JAX mirror of the PyTorch forward; matmul_dtype mirrors the kernel's
    bf16 MXU operands (softmax / accumulation stay f32)."""
    wq, wk, wv, wo, bq, bk, bv, bo = params
    B, S, E = x.shape
    H, D = num_heads, head_dim
    scale = 1.0 / math.sqrt(D)
    xd = x.astype(matmul_dtype)

    def proj(w, b):
        return jnp.dot(xd, w.T.astype(matmul_dtype),
                       preferred_element_type=jnp.float32) + b

    q = proj(wq, bq).reshape(B, S, H, D)
    k = proj(wk, bk).reshape(B, S, H, D)
    v = proj(wv, bv).reshape(B, S, H, D)
    scores = jnp.einsum("bsid,bsjd->bsij", q, k,
                        preferred_element_type=jnp.float32) * scale   # over heads
    attn = jax.nn.softmax(scores, axis=-1)
    out = jnp.einsum("bsij,bsjd->bsid", attn, v,
                     preferred_element_type=jnp.float32).reshape(B, S, E)
    return jnp.dot(out.astype(matmul_dtype), wo.T.astype(matmul_dtype),
                   preferred_element_type=jnp.float32) + bo


if __name__ == "__main__":
    num_heads, head_dim = 4, 8
    embed_dim = num_heads * head_dim
    batch, seq = 2, 8

    key = jax.random.PRNGKey(0)
    k_x, k_p = jax.random.split(key)
    x = jax.random.normal(k_x, (batch, seq, embed_dim), jnp.float32)
    params = init_params(k_p, embed_dim)

    out = optimized_attention_forward(x, params, num_heads, head_dim)
    out = jax.block_until_ready(out)
    assert out.shape == (batch, seq, embed_dim)
    assert bool(jnp.all(jnp.isfinite(out)))

    # Tight check vs a reference whose matmul operands match the kernel (bf16).
    ref_bf16 = reference_forward(x, params, num_heads, head_dim,
                                 matmul_dtype=jnp.bfloat16)
    err_tight = float(jnp.max(jnp.abs(out - ref_bf16)))
    assert err_tight < 2.5e-2, f"mismatch vs bf16-matched reference: {err_tight}"

    # Sanity check vs the full-f32 module semantics (tolerance covers bf16).
    ref_f32 = reference_forward(x, params, num_heads, head_dim,
                                matmul_dtype=jnp.float32)
    err_f32 = float(jnp.max(jnp.abs(out - ref_f32)))
    assert err_f32 < 2e-1, f"mismatch vs f32 reference: {err_f32}"

    print("KERNEL_OK")
</pallas_src>

<mosaic_0001>
module attributes {stable_mosaic.version = 11 : i64} {
  func.func @kernel(%arg0: i32, %arg1: memref<16x128xbf16, #tpu.memory_space<vmem>>, %arg2: memref<128x1536xbf16, #tpu.memory_space<vmem>>, %arg3: memref<1x1536xf32, #tpu.memory_space<vmem>>, %arg4: memref<512x64xf32, #tpu.memory_space<vmem>>, %arg5: memref<64x64xf32, #tpu.memory_space<vmem>>, %arg6: memref<2x64x64xf32, #tpu.memory_space<vmem>>, %arg7: memref<64x512xf32, #tpu.memory_space<vmem>>, %arg8: memref<512x128xbf16, #tpu.memory_space<vmem>>, %arg9: memref<1x128xf32, #tpu.memory_space<vmem>>, %arg10: memref<16x128xf32, #tpu.memory_space<vmem>>, %arg11: memref<16x1536xf32, #tpu.memory_space<vmem>>) attributes {dimension_semantics = [#tpu.dimension_semantics<parallel>], iteration_bounds = array<i64: 1>, scalar_prefetch = 0 : i64, scratch_operands = 1 : i64, tpu.core_type = #tpu.core_type<tc>, window_params = [{transform_indices = @transform_0, window_bounds = array<i64: 16, 128>}, {pipeline_mode = #tpu.pipeline_mode<synchronous>, transform_indices = @transform_1, window_bounds = array<i64: 128, 1536>}, {pipeline_mode = #tpu.pipeline_mode<synchronous>, transform_indices = @transform_2, window_bounds = array<i64: 1, 1536>}, {pipeline_mode = #tpu.pipeline_mode<synchronous>, transform_indices = @transform_3, window_bounds = array<i64: 512, 64>}, {pipeline_mode = #tpu.pipeline_mode<synchronous>, transform_indices = @transform_4, window_bounds = array<i64: 64, 64>}, {pipeline_mode = #tpu.pipeline_mode<synchronous>, transform_indices = @transform_5, window_bounds = array<i64: 2, 64, 64>}, {pipeline_mode = #tpu.pipeline_mode<synchronous>, transform_indices = @transform_6, window_bounds = array<i64: 64, 512>}, {pipeline_mode = #tpu.pipeline_mode<synchronous>, transform_indices = @transform_7, window_bounds = array<i64: 512, 128>}, {pipeline_mode = #tpu.pipeline_mode<synchronous>, transform_indices = @transform_8, window_bounds = array<i64: 1, 128>}, {transform_indices = @transform_9, window_bounds = array<i64: 16, 128>}]} {
    %c0 = arith.constant 0 : index
    %c0_0 = arith.constant 0 : index
    %0 = vector.load %arg1[%c0, %c0_0] : memref<16x128xbf16, #tpu.memory_space<vmem>>, vector<16x128xbf16>
    %c0_1 = arith.constant 0 : index
    %c0_2 = arith.constant 0 : index
    %1 = vector.load %arg2[%c0_1, %c0_2] : memref<128x1536xbf16, #tpu.memory_space<vmem>>, vector<128x1536xbf16>
    %cst = arith.constant dense<0.000000e+00> : vector<16x1536xf32>
    %2 = tpu.matmul %0, %1, %cst {dimension_numbers = #tpu.dot_dimension_numbers<[1], [0], [0], [1], [0, 0, 1, 1], [], []>} : vector<16x128xbf16>, vector<128x1536xbf16>, vector<16x1536xf32> -> vector<16x1536xf32>
    %c0_3 = arith.constant 0 : index
    %c0_4 = arith.constant 0 : index
    %3 = vector.load %arg3[%c0_3, %c0_4] : memref<1x1536xf32, #tpu.memory_space<vmem>>, vector<1x1536xf32>
    %4 = vector.broadcast %3 : vector<1x1536xf32> to vector<16x1536xf32>
    %5 = arith.addf %2, %4 : vector<16x1536xf32>
    %c0_5 = arith.constant 0 : index
    %c0_6 = arith.constant 0 : index
    %6 = vector.load %arg11[%c0_5, %c0_6] : memref<16x1536xf32, #tpu.memory_space<vmem>>, vector<16x1536xf32>
    tpu.vector_store %arg11[%c0_5, %c0_6], %5 {strides = array<i32>} : memref<16x1536xf32, #tpu.memory_space<vmem>>, vector<16x1536xf32>,
    %c0_7 = arith.constant 0 : index
    %c0_8 = arith.constant 0 : index
    %7 = vector.load %arg11[%c0_7, %c0_8] : memref<16x1536xf32, #tpu.memory_space<vmem>>, vector<16x512xf32>
    %c0_9 = arith.constant 0 : index
    %c512 = arith.constant 512 : index
    %8 = vector.load %arg11[%c0_9, %c512] : memref<16x1536xf32, #tpu.memory_space<vmem>>, vector<16x512xf32>
    %9 = arith.mulf %7, %8 : vector<16x512xf32>
    %c0_10 = arith.constant 0 : index
    %c0_11 = arith.constant 0 : index
    %10 = vector.load %arg4[%c0_10, %c0_11] : memref<512x64xf32, #tpu.memory_space<vmem>>, vector<512x64xf32>
    %cst_12 = arith.constant dense<0.000000e+00> : vector<16x64xf32>
    %11 = tpu.matmul %9, %10, %cst_12 {dimension_numbers = #tpu.dot_dimension_numbers<[1], [0], [0], [1], [0, 0, 1, 1], [], []>} : vector<16x512xf32>, vector<512x64xf32>, vector<16x64xf32> -> vector<16x64xf32>
    %c0_13 = arith.constant 0 : index
    %c0_14 = arith.constant 0 : index
    %c0_15 = arith.constant 0 : index
    %12 = vector.load %arg6[%c0_13, %c0_14, %c0_15] : memref<2x64x64xf32, #tpu.memory_space<vmem>>, vector<1x64x64xf32>
    %13 = vector.shape_cast %12 : vector<1x64x64xf32> to vector<64x64xf32>
    %cst_16 = arith.constant dense<0.000000e+00> : vector<16x64xf32>
    %14 = tpu.matmul %11, %13, %cst_16 {dimension_numbers = #tpu.dot_dimension_numbers<[1], [0], [0], [1], [0, 0, 1, 1], [], []>} : vector<16x64xf32>, vector<64x64xf32>, vector<16x64xf32> -> vector<16x64xf32>
    %15 = arith.maximumf %11, %14 : vector<16x64xf32>
    %c1 = arith.constant 1 : index
    %c0_17 = arith.constant 0 : index
    %c0_18 = arith.constant 0 : index
    %16 = vector.load %arg6[%c1, %c0_17, %c0_18] : memref<2x64x64xf32, #tpu.memory_space<vmem>>, vector<1x64x64xf32>
    %17 = vector.shape_cast %16 : vector<1x64x64xf32> to vector<64x64xf32>
    %cst_19 = arith.constant dense<0.000000e+00> : vector<16x64xf32>
    %18 = tpu.matmul %15, %17, %cst_19 {dimension_numbers = #tpu.dot_dimension_numbers<[1], [0], [0], [1], [0, 0, 1, 1], [], []>} : vector<16x64xf32>, vector<64x64xf32>, vector<16x64xf32> -> vector<16x64xf32>
    %19 = arith.maximumf %15, %18 : vector<16x64xf32>
    %20 = arith.subf %11, %19 : vector<16x64xf32>
    %21 = math.exp %20 : vector<16x64xf32>
    %c0_20 = arith.constant 0 : index
    %c0_21 = arith.constant 0 : index
    %22 = vector.load %arg5[%c0_20, %c0_21] : memref<64x64xf32, #tpu.memory_space<vmem>>, vector<64x64xf32>
    %cst_22 = arith.constant dense<0.000000e+00> : vector<16x64xf32>
    %23 = tpu.matmul %21, %22, %cst_22 {dimension_numbers = #tpu.dot_dimension_numbers<[1], [0], [0], [1], [0, 0, 1, 1], [], []>} : vector<16x64xf32>, vector<64x64xf32>, vector<16x64xf32> -> vector<16x64xf32>
    %24 = tpu.reciprocal %23 {approx = true} : vector<16x64xf32> -> vector<16x64xf32>
    %25 = arith.mulf %21, %24 : vector<16x64xf32>
    %c0_23 = arith.constant 0 : index
    %c0_24 = arith.constant 0 : index
    %26 = vector.load %arg7[%c0_23, %c0_24] : memref<64x512xf32, #tpu.memory_space<vmem>>, vector<64x512xf32>
    %cst_25 = arith.constant dense<0.000000e+00> : vector<16x512xf32>
    %27 = tpu.matmul %25, %26, %cst_25 {dimension_numbers = #tpu.dot_dimension_numbers<[1], [0], [0], [1], [0, 0, 1, 1], [], []>} : vector<16x64xf32>, vector<64x512xf32>, vector<16x512xf32> -> vector<16x512xf32>
    %c0_26 = arith.constant 0 : index
    %c1024 = arith.constant 1024 : index
    %28 = vector.load %arg11[%c0_26, %c1024] : memref<16x1536xf32, #tpu.memory_space<vmem>>, vector<16x512xf32>
    %29 = arith.mulf %27, %28 : vector<16x512xf32>
    %30 = arith.truncf %29 : vector<16x512xf32> to vector<16x512xbf16>
    %c0_27 = arith.constant 0 : index
    %c0_28 = arith.constant 0 : index
    %31 = vector.load %arg8[%c0_27, %c0_28] : memref<512x128xbf16, #tpu.memory_space<vmem>>, vector<512x128xbf16>
    %cst_29 = arith.constant dense<0.000000e+00> : vector<16x128xf32>
    %32 = tpu.matmul %30, %31, %cst_29 {dimension_numbers = #tpu.dot_dimension_numbers<[1], [0], [0], [1], [0, 0, 1, 1], [], []>} : vector<16x512xbf16>, vector<512x128xbf16>, vector<16x128xf32> -> vector<16x128xf32>
    %c0_30 = arith.constant 0 : index
    %c0_31 = arith.constant 0 : index
    %33 = vector.load %arg9[%c0_30, %c0_31] : memref<1x128xf32, #tpu.memory_space<vmem>>, vector<1x128xf32>
    %34 = vector.broadcast %33 : vector<1x128xf32> to vector<16x128xf32>
    %35 = arith.addf %32, %34 : vector<16x128xf32>
    %c0_32 = arith.constant 0 : index
    %c0_33 = arith.constant 0 : index
    %36 = vector.load %arg10[%c0_32, %c0_33] : memref<16x128xf32, #tpu.memory_space<vmem>>, vector<16x128xf32>
    tpu.vector_store %arg10[%c0_32, %c0_33], %35 {strides = array<i32>} : memref<16x128xf32, #tpu.memory_space<vmem>>, vector<16x128xf32>,
    return
  }
  func.func @transform_0(%arg0: i32) -> (i32, i32) {
    %c0_i32 = arith.constant 0 : i32
    %c0_i32_0 = arith.constant 0 : i32
    return %arg0, %c0_i32 : i32, i32
  }
  func.func @transform_1(%arg0: i32) -> (i32, i32) {
    %c0_i32 = arith.constant 0 : i32
    %c0_i32_0 = arith.constant 0 : i32
    %c0_i32_1 = arith.constant 0 : i32
    return %c0_i32, %c0_i32_0 : i32, i32
  }
  func.func @transform_2(%arg0: i32) -> (i32, i32) {
    %c0_i32 = arith.constant 0 : i32
    %c0_i32_0 = arith.constant 0 : i32
    %c0_i32_1 = arith.constant 0 : i32
    return %c0_i32, %c0_i32_0 : i32, i32
  }
  func.func @transform_3(%arg0: i32) -> (i32, i32) {
    %c0_i32 = arith.constant 0 : i32
    %c0_i32_0 = arith.constant 0 : i32
    %c0_i32_1 = arith.constant 0 : i32
    return %c0_i32, %c0_i32_0 : i32, i32
  }
  func.func @transform_4(%arg0: i32) -> (i32, i32) {
    %c0_i32 = arith.constant 0 : i32
    %c0_i32_0 = arith.constant 0 : i32
    %c0_i32_1 = arith.constant 0 : i32
    return %c0_i32, %c0_i32_0 : i32, i32
  }
  func.func @transform_5(%arg0: i32) -> (i32, i32, i32) {
    %c0_i32 = arith.constant 0 : i32
    %c0_i32_0 = arith.constant 0 : i32
    %c0_i32_1 = arith.constant 0 : i32
    %c0_i32_2 = arith.constant 0 : i32
    return %c0_i32, %c0_i32_0, %c0_i32_1 : i32, i32, i32
  }
  func.func @transform_6(%arg0: i32) -> (i32, i32) {
    %c0_i32 = arith.constant 0 : i32
    %c0_i32_0 = arith.constant 0 : i32
    %c0_i32_1 = arith.constant 0 : i32
    return %c0_i32, %c0_i32_0 : i32, i32
  }
  func.func @transform_7(%arg0: i32) -> (i32, i32) {
    %c0_i32 = arith.constant 0 : i32
    %c0_i32_0 = arith.constant 0 : i32
    %c0_i32_1 = arith.constant 0 : i32
    return %c0_i32, %c0_i32_0 : i32, i32
  }
  func.func @transform_8(%arg0: i32) -> (i32, i32) {
    %c0_i32 = arith.constant 0 : i32
    %c0_i32_0 = arith.constant 0 : i32
    %c0_i32_1 = arith.constant 0 : i32
    return %c0_i32, %c0_i32_0 : i32, i32
  }
  func.func @transform_9(%arg0: i32) -> (i32, i32) {
    %c0_i32 = arith.constant 0 : i32
    %c0_i32_0 = arith.constant 0 : i32
    return %arg0, %c0_i32 : i32, i32
  }
}

module attributes {stable_mosaic.version = 11 : i64} {
  func.func @kernel(%arg0: i32, %arg1: memref<16x128xbf16, #tpu.memory_space<vmem>>, %arg2: memref<128x1536xbf16, #tpu.memory_space<vmem>>, %arg3: memref<1x1536xf32, #tpu.memory_space<vmem>>, %arg4: memref<512x64xf32, #tpu.memory_space<vmem>>, %arg5: memref<64x64xf32, #tpu.memory_space<vmem>>, %arg6: memref<2x64x64xf32, #tpu.memory_space<vmem>>, %arg7: memref<64x512xf32, #tpu.memory_space<vmem>>, %arg8: memref<512x128xbf16, #tpu.memory_space<vmem>>, %arg9: memref<1x128xf32, #tpu.memory_space<vmem>>, %arg10: memref<16x128xf32, #tpu.memory_space<vmem>>, %arg11: memref<16x1536xf32, #tpu.memory_space<vmem>>) attributes {dimension_semantics = [#tpu.dimension_semantics<parallel>], iteration_bounds = array<i64: 1>, scalar_prefetch = 0 : i64, scratch_operands = 1 : i64, tpu.core_type = #tpu.core_type<tc>, window_params = [{transform_indices = @transform_0, window_bounds = array<i64: 16, 128>}, {pipeline_mode = #tpu.pipeline_mode<synchronous>, transform_indices = @transform_1, window_bounds = array<i64: 128, 1536>}, {pipeline_mode = #tpu.pipeline_mode<synchronous>, transform_indices = @transform_2, window_bounds = array<i64: 1, 1536>}, {pipeline_mode = #tpu.pipeline_mode<synchronous>, transform_indices = @transform_3, window_bounds = array<i64: 512, 64>}, {pipeline_mode = #tpu.pipeline_mode<synchronous>, transform_indices = @transform_4, window_bounds = array<i64: 64, 64>}, {pipeline_mode = #tpu.pipeline_mode<synchronous>, transform_indices = @transform_5, window_bounds = array<i64: 2, 64, 64>}, {pipeline_mode = #tpu.pipeline_mode<synchronous>, transform_indices = @transform_6, window_bounds = array<i64: 64, 512>}, {pipeline_mode = #tpu.pipeline_mode<synchronous>, transform_indices = @transform_7, window_bounds = array<i64: 512, 128>}, {pipeline_mode = #tpu.pipeline_mode<synchronous>, transform_indices = @transform_8, window_bounds = array<i64: 1, 128>}, {transform_indices = @transform_9, window_bounds = array<i64: 16, 128>}]} {
    %c0 = arith.constant 0 : index
    %c0_0 = arith.constant 0 : index
    %0 = vector.load %arg1[%c0, %c0_0] : memref<16x128xbf16, #tpu.memory_space<vmem>>, vector<16x128xbf16>
    %c0_1 = arith.constant 0 : index
    %c0_2 = arith.constant 0 : index
    %1 = vector.load %arg2[%c0_1, %c0_2] : memref<128x1536xbf16, #tpu.memory_space<vmem>>, vector<128x1536xbf16>
    %cst = arith.constant dense<0.000000e+00> : vector<16x1536xf32>
    %2 = tpu.matmul %0, %1, %cst {dimension_numbers = #tpu.dot_dimension_numbers<[1], [0], [0], [1], [0, 0, 1, 1], [], []>} : vector<16x128xbf16>, vector<128x1536xbf16>, vector<16x1536xf32> -> vector<16x1536xf32>
    %c0_3 = arith.constant 0 : index
    %c0_4 = arith.constant 0 : index
    %3 = vector.load %arg3[%c0_3, %c0_4] : memref<1x1536xf32, #tpu.memory_space<vmem>>, vector<1x1536xf32>
    %4 = vector.broadcast %3 : vector<1x1536xf32> to vector<16x1536xf32>
    %5 = arith.addf %2, %4 : vector<16x1536xf32>
    %c0_5 = arith.constant 0 : index
    %c0_6 = arith.constant 0 : index
    %6 = vector.load %arg11[%c0_5, %c0_6] : memref<16x1536xf32, #tpu.memory_space<vmem>>, vector<16x1536xf32>
    tpu.vector_store %arg11[%c0_5, %c0_6], %5 {strides = array<i32>} : memref<16x1536xf32, #tpu.memory_space<vmem>>, vector<16x1536xf32>,
    %c0_7 = arith.constant 0 : index
    %c0_8 = arith.constant 0 : index
    %7 = vector.load %arg11[%c0_7, %c0_8] : memref<16x1536xf32, #tpu.memory_space<vmem>>, vector<16x512xf32>
    %c0_9 = arith.constant 0 : index
    %c512 = arith.constant 512 : index
    %8 = vector.load %arg11[%c0_9, %c512] : memref<16x1536xf32, #tpu.memory_space<vmem>>, vector<16x512xf32>
    %9 = arith.mulf %7, %8 : vector<16x512xf32>
    %c0_10 = arith.constant 0 : index
    %c0_11 = arith.constant 0 : index
    %10 = vector.load %arg4[%c0_10, %c0_11] : memref<512x64xf32, #tpu.memory_space<vmem>>, vector<512x64xf32>
    %cst_12 = arith.constant dense<0.000000e+00> : vector<16x64xf32>
    %11 = tpu.matmul %9, %10, %cst_12 {dimension_numbers = #tpu.dot_dimension_numbers<[1], [0], [0], [1], [0, 0, 1, 1], [], []>} : vector<16x512xf32>, vector<512x64xf32>, vector<16x64xf32> -> vector<16x64xf32>
    %c0_13 = arith.constant 0 : index
    %c0_14 = arith.constant 0 : index
    %c0_15 = arith.constant 0 : index
    %12 = vector.load %arg6[%c0_13, %c0_14, %c0_15] : memref<2x64x64xf32, #tpu.memory_space<vmem>>, vector<1x64x64xf32>
    %13 = vector.shape_cast %12 : vector<1x64x64xf32> to vector<64x64xf32>
    %cst_16 = arith.constant dense<0.000000e+00> : vector<16x64xf32>
    %14 = tpu.matmul %11, %13, %cst_16 {dimension_numbers = #tpu.dot_dimension_numbers<[1], [0], [0], [1], [0, 0, 1, 1], [], []>} : vector<16x64xf32>, vector<64x64xf32>, vector<16x64xf32> -> vector<16x64xf32>
    %15 = arith.maximumf %11, %14 : vector<16x64xf32>
    %c1 = arith.constant 1 : index
    %c0_17 = arith.constant 0 : index
    %c0_18 = arith.constant 0 : index
    %16 = vector.load %arg6[%c1, %c0_17, %c0_18] : memref<2x64x64xf32, #tpu.memory_space<vmem>>, vector<1x64x64xf32>
    %17 = vector.shape_cast %16 : vector<1x64x64xf32> to vector<64x64xf32>
    %cst_19 = arith.constant dense<0.000000e+00> : vector<16x64xf32>
    %18 = tpu.matmul %15, %17, %cst_19 {dimension_numbers = #tpu.dot_dimension_numbers<[1], [0], [0], [1], [0, 0, 1, 1], [], []>} : vector<16x64xf32>, vector<64x64xf32>, vector<16x64xf32> -> vector<16x64xf32>
    %19 = arith.maximumf %15, %18 : vector<16x64xf32>
    %20 = arith.subf %11, %19 : vector<16x64xf32>
    %21 = math.exp %20 : vector<16x64xf32>
    %c0_20 = arith.constant 0 : index
    %c0_21 = arith.constant 0 : index
    %22 = vector.load %arg5[%c0_20, %c0_21] : memref<64x64xf32, #tpu.memory_space<vmem>>, vector<64x64xf32>
    %cst_22 = arith.constant dense<0.000000e+00> : vector<16x64xf32>
    %23 = tpu.matmul %21, %22, %cst_22 {dimension_numbers = #tpu.dot_dimension_numbers<[1], [0], [0], [1], [0, 0, 1, 1], [], []>} : vector<16x64xf32>, vector<64x64xf32>, vector<16x64xf32> -> vector<16x64xf32>
    %24 = tpu.reciprocal %23 {approx = true} : vector<16x64xf32> -> vector<16x64xf32>
    %25 = arith.mulf %21, %24 : vector<16x64xf32>
    %c0_23 = arith.constant 0 : index
    %c0_24 = arith.constant 0 : index
    %26 = vector.load %arg7[%c0_23, %c0_24] : memref<64x512xf32, #tpu.memory_space<vmem>>, vector<64x512xf32>
    %cst_25 = arith.constant dense<0.000000e+00> : vector<16x512xf32>
    %27 = tpu.matmul %25, %26, %cst_25 {dimension_numbers = #tpu.dot_dimension_numbers<[1], [0], [0], [1], [0, 0, 1, 1], [], []>} : vector<16x64xf32>, vector<64x512xf32>, vector<16x512xf32> -> vector<16x512xf32>
    %c0_26 = arith.constant 0 : index
    %c1024 = arith.constant 1024 : index
    %28 = vector.load %arg11[%c0_26, %c1024] : memref<16x1536xf32, #tpu.memory_space<vmem>>, vector<16x512xf32>
    %29 = arith.mulf %27, %28 : vector<16x512xf32>
    %30 = arith.truncf %29 : vector<16x512xf32> to vector<16x512xbf16>
    %c0_27 = arith.constant 0 : index
    %c0_28 = arith.constant 0 : index
    %31 = vector.load %arg8[%c0_27, %c0_28] : memref<512x128xbf16, #tpu.memory_space<vmem>>, vector<512x128xbf16>
    %cst_29 = arith.constant dense<0.000000e+00> : vector<16x128xf32>
    %32 = tpu.matmul %30, %31, %cst_29 {dimension_numbers = #tpu.dot_dimension_numbers<[1], [0], [0], [1], [0, 0, 1, 1], [], []>} : vector<16x512xbf16>, vector<512x128xbf16>, vector<16x128xf32> -> vector<16x128xf32>
    %c0_30 = arith.constant 0 : index
    %c0_31 = arith.constant 0 : index
    %33 = vector.load %arg9[%c0_30, %c0_31] : memref<1x128xf32, #tpu.memory_space<vmem>>, vector<1x128xf32>
    %34 = vector.broadcast %33 : vector<1x128xf32> to vector<16x128xf32>
    %35 = arith.addf %32, %34 : vector<16x128xf32>
    %c0_32 = arith.constant 0 : index
    %c0_33 = arith.constant 0 : index
    %36 = vector.load %arg10[%c0_32, %c0_33] : memref<16x128xf32, #tpu.memory_space<vmem>>, vector<16x128xf32>
    tpu.vector_store %arg10[%c0_32, %c0_33], %35 {strides = array<i32>} : memref<16x128xf32, #tpu.memory_space<vmem>>, vector<16x128xf32>,
    return
  }
  func.func @transform_0(%arg0: i32) -> (i32, i32) {
    %c0_i32 = arith.constant 0 : i32
    %c0_i32_0 = arith.constant 0 : i32
    return %arg0, %c0_i32 : i32, i32
  }
  func.func @transform_1(%arg0: i32) -> (i32, i32) {
    %c0_i32 = arith.constant 0 : i32
    %c0_i32_0 = arith.constant 0 : i32
    %c0_i32_1 = arith.constant 0 : i32
    return %c0_i32, %c0_i32_0 : i32, i32
  }
  func.func @transform_2(%arg0: i32) -> (i32, i32) {
    %c0_i32 = arith.constant 0 : i32
    %c0_i32_0 = arith.constant 0 : i32
    %c0_i32_1 = arith.constant 0 : i32
    return %c0_i32, %c0_i32_0 : i32, i32
  }
  func.func @transform_3(%arg0: i32) -> (i32, i32) {
    %c0_i32 = arith.constant 0 : i32
    %c0_i32_0 = arith.constant 0 : i32
    %c0_i32_1 = arith.constant 0 : i32
    return %c0_i32, %c0_i32_0 : i32, i32
  }
  func.func @transform_4(%arg0: i32) -> (i32, i32) {
    %c0_i32 = arith.constant 0 : i32
    %c0_i32_0 = arith.constant 0 : i32
    %c0_i32_1 = arith.constant 0 : i32
    return %c0_i32, %c0_i32_0 : i32, i32
  }
  func.func @transform_5(%arg0: i32) -> (i32, i32, i32) {
    %c0_i32 = arith.constant 0 : i32
    %c0_i32_0 = arith.constant 0 : i32
    %c0_i32_1 = arith.constant 0 : i32
    %c0_i32_2 = arith.constant 0 : i32
    return %c0_i32, %c0_i32_0, %c0_i32_1 : i32, i32, i32
  }
  func.func @transform_6(%arg0: i32) -> (i32, i32) {
    %c0_i32 = arith.constant 0 : i32
    %c0_i32_0 = arith.constant 0 : i32
    %c0_i32_1 = arith.constant 0 : i32
    return %c0_i32, %c0_i32_0 : i32, i32
  }
  func.func @transform_7(%arg0: i32) -> (i32, i32) {
    %c0_i32 = arith.constant 0 : i32
    %c0_i32_0 = arith.constant 0 : i32
    %c0_i32_1 = arith.constant 0 : i32
    return %c0_i32, %c0_i32_0 : i32, i32
  }
  func.func @transform_8(%arg0: i32) -> (i32, i32) {
    %c0_i32 = arith.constant 0 : i32
    %c0_i32_0 = arith.constant 0 : i32
    %c0_i32_1 = arith.constant 0 : i32
    return %c0_i32, %c0_i32_0 : i32, i32
  }
  func.func @transform_9(%arg0: i32) -> (i32, i32) {
    %c0_i32 = arith.constant 0 : i32
    %c0_i32_0 = arith.constant 0 : i32
    return %arg0, %c0_i32 : i32, i32
  }
}

</mosaic_0001>

<llo_original>
// kernel: tpu_custom_call.1
$region0: #{tpu_custom_call.1}
  #allocation0 [shape = 'u32[]', space=smem, size = 0x4, offset = 0x4, fixed_abs, tag = 'smem constant byte address 0x4 - core index']
  #allocation1 [shape = 'u32[144,128]{1,0:T(1,128)}', space=vmem, size = 0x12000, scoped, tag = 'internal scratch']
  #allocation2 [shape = 'f32[16,1536]{1,0:T(8,128)}', space=vmem, size = 0x18000, scoped, tag = 'scratch operand']
  %s0 = inlined_call_operand.hbm [shape: bf16[16,128], index: 0, kind: input, shape index: {}]
  %s1 = inlined_call_operand.vmem [shape: bf16[128,1536], index: 1, kind: input, shape index: {}]
  %s2 = inlined_call_operand.hbm [shape: f32[1,1536], index: 2, kind: input, shape index: {}]
  %s3 = inlined_call_operand.vmem [shape: f32[512,64], index: 3, kind: input, shape index: {}]
  %s4 = inlined_call_operand.hbm [shape: f32[64,64], index: 4, kind: input, shape index: {}]
  %s5 = inlined_call_operand.hbm [shape: f32[2,64,64], index: 5, kind: input, shape index: {}]
  %s6 = inlined_call_operand.hbm [shape: f32[64,512], index: 6, kind: input, shape index: {}]
  %s7 = inlined_call_operand.hbm [shape: bf16[512,128], index: 7, kind: input, shape index: {}]
  %s8 = inlined_call_operand.vmem [shape: f32[1,128], index: 8, kind: input, shape index: {}]
  %s9 = inlined_call_operand.hbm [shape: f32[16,128], index: 9, kind: output, shape index: {}]
  %s10 = sld [smem:[#allocation0]]
  $region70: #{tpu_custom_call.1} parent=0
    _
  %s12 = ssub.s32 1, %s10
  %s13 = scalar_select 0, %s12, %s10
  $region1: #{tpu_custom_call.1} parent=0
    #allocation3 [shape = 'u8[4096]{0}', space=vmem, size = 0x1000, scoped, tag = 'input window, operand 0, single buffered']
    #allocation4 [shape = 's32[1]{0}', space=sflag, size = 0x4, scoped, tag = 'scoped memory for tpu_custom_call.1']
    #allocation5 [shape = 's32[1]{0}', space=sflag, size = 0x4, scoped, tag = 'scoped memory for tpu_custom_call.1']
    #allocation6 [shape = 'u8[6144]{0}', space=vmem, size = 0x1800, scoped, tag = 'input window, operand 2, single buffered']
    #allocation7 [shape = 's32[1]{0}', space=sflag, size = 0x4, scoped, tag = 'scoped memory for tpu_custom_call.1']
    #allocation8 [shape = 'u8[32768]{0}', space=vmem, size = 0x8000, scoped, tag = 'input window, operand 4, single buffered']
    #allocation9 [shape = 'u8[65536]{0}', space=vmem, size = 0x10000, scoped, tag = 'input window, operand 5, single buffered']
    #allocation10 [shape = 's32[1]{0}', space=sflag, size = 0x4, scoped, tag = 'scoped memory for tpu_custom_call.1']
    #allocation11 [shape = 'u8[131072]{0}', space=vmem, size = 0x20000, scoped, tag = 'input window, operand 6, single buffered']
    #allocation12 [shape = 'u8[131072]{0}', space=vmem, size = 0x20000, scoped, tag = 'input window, operand 7, single buffered']
    #allocation13 [shape = 's32[1]{0}', space=sflag, size = 0x4, scoped, tag = 'scoped memory for tpu_custom_call.1']
    #allocation14 [shape = 'u8[8192]{0}', space=vmem, size = 0x2000, scoped, tag = 'output window, operand 0, single buffered']
    %14 = vsyncpa [#allocation4], 0
    %15 = vsyncpa [#allocation7], 0
    %16 = vsyncpa [#allocation10], 0
    %17 = vsyncpa [#allocation13], 0
    %18 = vsyncpa [#allocation5], 0
    // Predicated region
    $region2: #{tpu_custom_call.1} parent=1 // pred_check
      _
    $region3: #{tpu_custom_call.1} parent=1 // pred_check_branch
      %20 = sbr.rel (0) target = $region5
    $region4: #{tpu_custom_call.1} parent=1 // pred_region
      %s22 = ssub.s32 128, 128
      %23 = vsyncadd [#allocation4], %s22
      %s24 = sshll.u32 [#allocation3], 4
      %s25 = int_to_ptr.vmem [resolvable:$true] %s24
      %30 = dma.hbm_to_vmem [thread:$0]  %s0, 128, %s25, [#allocation4], 64, 64, 4
    $region5: #{tpu_custom_call.1} parent=1 // pred_fallthru
      _
    // Predicated region
    $region6: #{tpu_custom_call.1} parent=1 // pred_check
      _
    $region7: #{tpu_custom_call.1} parent=1 // pred_check_branch
      %32 = sbr.rel (0) target = $region9
    $region8: #{tpu_custom_call.1} parent=1 // pred_region
      _
    $region9: #{tpu_custom_call.1} parent=1 // pred_fallthru
      _
    // Predicated region
    $region10: #{tpu_custom_call.1} parent=1 // pred_check
      _
    $region11: #{tpu_custom_call.1} parent=1 // pred_check_branch
      %34 = sbr.rel (0) target = $region13
    $region12: #{tpu_custom_call.1} parent=1 // pred_region
      %s36 = ssub.s32 192, 192
      %37 = vsyncadd [#allocation7], %s36
      %s39 = sshll.u32 [#allocation6], 4
      %s40 = int_to_ptr.vmem [resolvable:$true] %s39
      %42 = dma.hbm_to_vmem [thread:$0]  %s2, 192, %s40, [#allocation7]
    $region13: #{tpu_custom_call.1} parent=1 // pred_fallthru
      _
    // Predicated region
    $region14: #{tpu_custom_call.1} parent=1 // pred_check
      _
    $region15: #{tpu_custom_call.1} parent=1 // pred_check_branch
      %44 = sbr.rel (0) target = $region17
    $region16: #{tpu_custom_call.1} parent=1 // pred_region
      _
    $region17: #{tpu_custom_call.1} parent=1 // pred_fallthru
      _
    // Predicated region
    $region18: #{tpu_custom_call.1} parent=1 // pred_check
      _
    $region19: #{tpu_custom_call.1} parent=1 // pred_check_branch
      %46 = sbr.rel (0) target = $region21
    $region20: #{tpu_custom_call.1} parent=1 // pred_region
      %s48 = ssub.s32 1024, 1024
      %49 = vsyncadd [#allocation7], %s48
      %s50 = sshll.u32 [#allocation8], 4
      %s51 = int_to_ptr.vmem [resolvable:$true] %s50
      %56 = dma.hbm_to_vmem [thread:$0]  %s4, 1024, %s51, [#allocation7], 128, 128, 8
    $region21: #{tpu_custom_call.1} parent=1 // pred_fallthru
      _
    // Predicated region
    $region22: #{tpu_custom_call.1} parent=1 // pred_check
      _
    $region23: #{tpu_custom_call.1} parent=1 // pred_check_branch
      %58 = sbr.rel (0) target = $region25
    $region24: #{tpu_custom_call.1} parent=1 // pred_region
      %s60 = ssub.s32 2048, 2048
      %61 = vsyncadd [#allocation10], %s60
      %s62 = sshll.u32 [#allocation9], 4
      %s63 = int_to_ptr.vmem [resolvable:$true] %s62
      %68 = dma.hbm_to_vmem [thread:$0]  %s5, 2048, %s63, [#allocation10], 128, 128, 8
    $region25: #{tpu_custom_call.1} parent=1 // pred_fallthru
      _
    // Predicated region
    $region26: #{tpu_custom_call.1} parent=1 // pred_check
      _
    $region27: #{tpu_custom_call.1} parent=1 // pred_check_branch
      %70 = sbr.rel (0) target = $region29
    $region28: #{tpu_custom_call.1} parent=1 // pred_region
      %s72 = ssub.s32 4096, 4096
      %73 = vsyncadd [#allocation10], %s72
      %s74 = sshll.u32 [#allocation11], 4
      %s75 = int_to_ptr.vmem [resolvable:$true] %s74
      %80 = dma.hbm_to_vmem [thread:$0]  %s6, 4096, %s75, [#allocation10], 512, 512, 32
    $region29: #{tpu_custom_call.1} parent=1 // pred_fallthru
      _
    // Predicated region
    $region30: #{tpu_custom_call.1} parent=1 // pred_check
      _
    $region31: #{tpu_custom_call.1} parent=1 // pred_check_branch
      %82 = sbr.rel (0) target = $region33
    $region32: #{tpu_custom_call.1} parent=1 // pred_region
      %s84 = ssub.s32 4096, 4096
      %85 = vsyncadd [#allocation13], %s84
      %s86 = sshll.u32 [#allocation12], 4
      %s87 = int_to_ptr.vmem [resolvable:$true] %s86
      %92 = dma.hbm_to_vmem [thread:$0]  %s7, 4096, %s87, [#allocation13], 64, 64, 4
    $region33: #{tpu_custom_call.1} parent=1 // pred_fallthru
      _
    // Predicated region
    $region34: #{tpu_custom_call.1} parent=1 // pred_check
      _
    $region35: #{tpu_custom_call.1} parent=1 // pred_check_branch
      %94 = sbr.rel (0) target = $region37
    $region36: #{tpu_custom_call.1} parent=1 // pred_region
      _
    $region37: #{tpu_custom_call.1} parent=1 // pred_fallthru
      _
    // Predicated region
    $region38: #{tpu_custom_call.1} parent=1 // pred_check
      _
    $region39: #{tpu_custom_call.1} parent=1 // pred_check_branch
      %96 = sbr.rel (0) target = $region41
    $region40: #{tpu_custom_call.1} parent=1 // pred_region
      %97 = dma.done [#allocation4], 128
    $region41: #{tpu_custom_call.1} parent=1 // pred_fallthru
      _
    // Predicated region
    $region42: #{tpu_custom_call.1} parent=1 // pred_check
      _
    $region43: #{tpu_custom_call.1} parent=1 // pred_check_branch
      %99 = sbr.rel (0) target = $region45
    $region44: #{tpu_custom_call.1} parent=1 // pred_region
      %100 = dma.done [#allocation7], 192
    $region45: #{tpu_custom_call.1} parent=1 // pred_fallthru
      _
    // Predicated region
    $region46: #{tpu_custom_call.1} parent=1 // pred_check
      _
    $region47: #{tpu_custom_call.1} parent=1 // pred_check_branch
      %102 = sbr.rel (0) target = $region49
    $region48: #{tpu_custom_call.1} parent=1 // pred_region
      %103 = dma.done [#allocation7], 1024
    $region49: #{tpu_custom_call.1} parent=1 // pred_fallthru
      _
    // Predicated region
    $region50: #{tpu_custom_call.1} parent=1 // pred_check
      _
    $region51: #{tpu_custom_call.1} parent=1 // pred_check_branch
      %105 = sbr.rel (0) target = $region53
    $region52: #{tpu_custom_call.1} parent=1 // pred_region
      %106 = dma.done [#allocation10], 2048
    $region53: #{tpu_custom_call.1} parent=1 // pred_fallthru
      _
    // Predicated region
    $region54: #{tpu_custom_call.1} parent=1 // pred_check
      _
    $region55: #{tpu_custom_call.1} parent=1 // pred_check_branch
      %108 = sbr.rel (0) target = $region57
    $region56: #{tpu_custom_call.1} parent=1 // pred_region
      %109 = dma.done [#allocation10], 4096
    $region57: #{tpu_custom_call.1} parent=1 // pred_fallthru
      _
    // Predicated region
    $region58: #{tpu_custom_call.1} parent=1 // pred_check
      _
    $region59: #{tpu_custom_call.1} parent=1 // pred_check_branch
      %111 = sbr.rel (0) target = $region61
    $region60: #{tpu_custom_call.1} parent=1 // pred_region
      %112 = dma.done [#allocation13], 4096
    $region61: #{tpu_custom_call.1} parent=1 // pred_fallthru
      _
    %v114 = vld [vmem:[#allocation3] sm:$0xf]
    %v115 = vld [vmem:[#allocation3 + $0x4] sm:$0xf]
    %v116 = vld [vmem:[%s1] sm:$0xff]
    %v117 = vld [vmem:[%s1 + $0x8] sm:$0xff]
    %v118 = vld [vmem:[%s1 + $0x10] sm:$0xff]
    %v119 = vld [vmem:[%s1 + $0x18] sm:$0xff]
    %v120 = vld [vmem:[%s1 + $0x20] sm:$0xff]
    %v121 = vld [vmem:[%s1 + $0x28] sm:$0xff]
    %v122 = vld [vmem:[%s1 + $0x30] sm:$0xff]
    %v123 = vld [vmem:[%s1 + $0x38] sm:$0xff]
    %v124 = vld [vmem:[%s1 + $0x40] sm:$0xff]
    %v125 = vld [vmem:[%s1 + $0x48] sm:$0xff]
    %v126 = vld [vmem:[%s1 + $0x50] sm:$0xff]
    %v127 = vld [vmem:[%s1 + $0x58] sm:$0xff]
    %v128 = vld [vmem:[%s1 + $0x60] sm:$0xff]
    %v129 = vld [vmem:[%s1 + $0x68] sm:$0xff]
    %v130 = vld [vmem:[%s1 + $0x70] sm:$0xff]
    %v131 = vld [vmem:[%s1 + $0x78] sm:$0xff]
    %v132 = vld [vmem:[%s1 + $0x80] sm:$0xff]
    %v133 = vld [vmem:[%s1 + $0x88] sm:$0xff]
    %v134 = vld [vmem:[%s1 + $0x90] sm:$0xff]
    %v135 = vld [vmem:[%s1 + $0x98] sm:$0xff]
    %v136 = vld [vmem:[%s1 + $0xa0] sm:$0xff]
    %v137 = vld [vmem:[%s1 + $0xa8] sm:$0xff]
    %v138 = vld [vmem:[%s1 + $0xb0] sm:$0xff]
    %v139 = vld [vmem:[%s1 + $0xb8] sm:$0xff]
    %v140 = vld [vmem:[%s1 + $0xc0] sm:$0xff]
    %v141 = vld [vmem:[%s1 + $0xc8] sm:$0xff]
    %v142 = vld [vmem:[%s1 + $0xd0] sm:$0xff]
    %v143 = vld [vmem:[%s1 + $0xd8] sm:$0xff]
    %v144 = vld [vmem:[%s1 + $0xe0] sm:$0xff]
    %v145 = vld [vmem:[%s1 + $0xe8] sm:$0xff]
    %v146 = vld [vmem:[%s1 + $0xf0] sm:$0xff]
    %v147 = vld [vmem:[%s1 + $0xf8] sm:$0xff]
    %v148 = vld [vmem:[%s1 + $0x100] sm:$0xff]
    %v149 = vld [vmem:[%s1 + $0x108] sm:$0xff]
    %v150 = vld [vmem:[%s1 + $0x110] sm:$0xff]
    %v151 = vld [vmem:[%s1 + $0x118] sm:$0xff]
    %v152 = vld [vmem:[%s1 + $0x120] sm:$0xff]
    %v153 = vld [vmem:[%s1 + $0x128] sm:$0xff]
    %v154 = vld [vmem:[%s1 + $0x130] sm:$0xff]
    %v155 = vld [vmem:[%s1 + $0x138] sm:$0xff]
    %v156 = vld [vmem:[%s1 + $0x140] sm:$0xff]
    %v157 = vld [vmem:[%s1 + $0x148] sm:$0xff]
    %v158 = vld [vmem:[%s1 + $0x150] sm:$0xff]
    %v159 = vld [vmem:[%s1 + $0x158] sm:$0xff]
    %v160 = vld [vmem:[%s1 + $0x160] sm:$0xff]
    %v161 = vld [vmem:[%s1 + $0x168] sm:$0xff]
    %v162 = vld [vmem:[%s1 + $0x170] sm:$0xff]
    %v163 = vld [vmem:[%s1 + $0x178] sm:$0xff]
    %v164 = vld [vmem:[%s1 + $0x180] sm:$0xff]
    %v165 = vld [vmem:[%s1 + $0x188] sm:$0xff]
    %v166 = vld [vmem:[%s1 + $0x190] sm:$0xff]
    %v167 = vld [vmem:[%s1 + $0x198] sm:$0xff]
    %v168 = vld [vmem:[%s1 + $0x1a0] sm:$0xff]
    %v169 = vld [vmem:[%s1 + $0x1a8] sm:$0xff]
    %v170 = vld [vmem:[%s1 + $0x1b0] sm:$0xff]
    %v171 = vld [vmem:[%s1 + $0x1b8] sm:$0xff]
    %v172 = vld [vmem:[%s1 + $0x1c0] sm:$0xff]
    %v173 = vld [vmem:[%s1 + $0x1c8] sm:$0xff]
    %v174 = vld [vmem:[%s1 + $0x1d0] sm:$0xff]
    %v175 = vld [vmem:[%s1 + $0x1d8] sm:$0xff]
    %v176 = vld [vmem:[%s1 + $0x1e0] sm:$0xff]
    %v177 = vld [vmem:[%s1 + $0x1e8] sm:$0xff]
    %v178 = vld [vmem:[%s1 + $0x1f0] sm:$0xff]
    %v179 = vld [vmem:[%s1 + $0x1f8] sm:$0xff]
    %v180 = vld [vmem:[%s1 + $0x200] sm:$0xff]
    %v181 = vld [vmem:[%s1 + $0x208] sm:$0xff]
    %v182 = vld [vmem:[%s1 + $0x210] sm:$0xff]
    %v183 = vld [vmem:[%s1 + $0x218] sm:$0xff]
    %v184 = vld [vmem:[%s1 + $0x220] sm:$0xff]
    %v185 = vld [vmem:[%s1 + $0x228] sm:$0xff]
    %v186 = vld [vmem:[%s1 + $0x230] sm:$0xff]
    %v187 = vld [vmem:[%s1 + $0x238] sm:$0xff]
    %v188 = vld [vmem:[%s1 + $0x240] sm:$0xff]
    %v189 = vld [vmem:[%s1 + $0x248] sm:$0xff]
    %v190 = vld [vmem:[%s1 + $0x250] sm:$0xff]
    %v191 = vld [vmem:[%s1 + $0x258] sm:$0xff]
    %v192 = vld [vmem:[%s1 + $0x260] sm:$0xff]
    %v193 = vld [vmem:[%s1 + $0x268] sm:$0xff]
    %v194 = vld [vmem:[%s1 + $0x270] sm:$0xff]
    %v195 = vld [vmem:[%s1 + $0x278] sm:$0xff]
    %v196 = vld [vmem:[%s1 + $0x280] sm:$0xff]
    %v197 = vld [vmem:[%s1 + $0x288] sm:$0xff]
    %v198 = vld [vmem:[%s1 + $0x290] sm:$0xff]
    %v199 = vld [vmem:[%s1 + $0x298] sm:$0xff]
    %v200 = vld [vmem:[%s1 + $0x2a0] sm:$0xff]
    %v201 = vld [vmem:[%s1 + $0x2a8] sm:$0xff]
    %v202 = vld [vmem:[%s1 + $0x2b0] sm:$0xff]
    %v203 = vld [vmem:[%s1 + $0x2b8] sm:$0xff]
    %v204 = vld [vmem:[%s1 + $0x2c0] sm:$0xff]
    %v205 = vld [vmem:[%s1 + $0x2c8] sm:$0xff]
    %v206 = vld [vmem:[%s1 + $0x2d0] sm:$0xff]
    %v207 = vld [vmem:[%s1 + $0x2d8] sm:$0xff]
    %v208 = vld [vmem:[%s1 + $0x2e0] sm:$0xff]
    %v209 = vld [vmem:[%s1 + $0x2e8] sm:$0xff]
    %v210 = vld [vmem:[%s1 + $0x2f0] sm:$0xff]
    %v211 = vld [vmem:[%s1 + $0x2f8] sm:$0xff]
    %v212 = vld [vmem:[#allocation6] sm:$0xff]
    %v213 = vld [vmem:[#allocation6 + $0x8] sm:$0xf]
    %v216 = vlaneseq
    %v217 = vshrl.u32 %v216, 7
    %v218 = vsub.s32 0, %v217
    %v219 = vrot.slane %v212, %v218
    %v220 = vlaneseq
    %v221 = vshrl.u32 %v220, 7
    %v222 = vsub.s32 1, %v221
    %v223 = vrot.slane %v212, %v222
    %v224 = vlaneseq
    %v225 = vshrl.u32 %v224, 7
    %v226 = vsub.s32 2, %v225
    %v227 = vrot.slane %v212, %v226
    %v228 = vlaneseq
    %v229 = vshrl.u32 %v228, 7
    %v230 = vsub.s32 3, %v229
    %v231 = vrot.slane %v212, %v230
    %v232 = vlaneseq
    %v233 = vshrl.u32 %v232, 7
    %v234 = vsub.s32 4, %v233
    %v235 = vrot.slane %v212, %v234
    %v236 = vlaneseq
    %v237 = vshrl.u32 %v236, 7
    %v238 = vsub.s32 5, %v237
    %v239 = vrot.slane %v212, %v238
    %v240 = vlaneseq
    %v241 = vshrl.u32 %v240, 7
    %v242 = vsub.s32 6, %v241
    %v243 = vrot.slane %v212, %v242
    %v244 = vlaneseq
    %v245 = vshrl.u32 %v244, 7
    %v246 = vsub.s32 7, %v245
    %v247 = vrot.slane %v212, %v246
    %v248 = vlaneseq
    %v249 = vshrl.u32 %v248, 7
    %v250 = vsub.s32 0, %v249
    %v251 = vrot.slane %v213, %v250
    %v252 = vlaneseq
    %v253 = vshrl.u32 %v252, 7
    %v254 = vsub.s32 1, %v253
    %v255 = vrot.slane %v213, %v254
    %v256 = vlaneseq
    %v257 = vshrl.u32 %v256, 7
    %v258 = vsub.s32 2, %v257
    %v259 = vrot.slane %v213, %v258
    %v260 = vlaneseq
    %v261 = vshrl.u32 %v260, 7
    %v262 = vsub.s32 3, %v261
    %v263 = vrot.slane %v213, %v262
    %v278 = vunpack.c.l.b16 %v114
    %v279 = vunpack.c.l.b16 %v115
    %v280 = vpack.c.b16 %v279, %v278
    %v378 = vunpack.c.l.b16 %v116
    %v379 = vunpack.c.h.b16 %v116
    %v380 = vunpack.c.l.b16 %v117
    %v381 = vunpack.c.h.b16 %v117
    %v382 = vunpack.c.l.b16 %v118
    %v383 = vunpack.c.h.b16 %v118
    %v384 = vunpack.c.l.b16 %v119
    %v385 = vunpack.c.h.b16 %v119
    %v386 = vunpack.c.l.b16 %v120
    %v387 = vunpack.c.h.b16 %v120
    %v388 = vunpack.c.l.b16 %v121
    %v389 = vunpack.c.h.b16 %v121
    %v390 = vunpack.c.l.b16 %v122
    %v391 = vunpack.c.h.b16 %v122
    %v392 = vunpack.c.l.b16 %v123
    %v393 = vunpack.c.h.b16 %v123
    %v394 = vunpack.c.l.b16 %v124
    %v395 = vunpack.c.h.b16 %v124
    %v396 = vunpack.c.l.b16 %v125
    %v397 = vunpack.c.h.b16 %v125
    %v398 = vunpack.c.l.b16 %v126
    %v399 = vunpack.c.h.b16 %v126
    %v400 = vunpack.c.l.b16 %v127
    %v401 = vunpack.c.h.b16 %v127
    %v402 = vunpack.c.l.b16 %v128
    %v403 = vunpack.c.h.b16 %v128
    %v404 = vunpack.c.l.b16 %v129
    %v405 = vunpack.c.h.b16 %v129
    %v406 = vunpack.c.l.b16 %v130
    %v407 = vunpack.c.h.b16 %v130
    %v408 = vunpack.c.l.b16 %v131
    %v409 = vunpack.c.h.b16 %v131
    %v410 = vunpack.c.l.b16 %v132
    %v411 = vunpack.c.h.b16 %v132
    %v412 = vunpack.c.l.b16 %v133
    %v413 = vunpack.c.h.b16 %v133
    %v414 = vunpack.c.l.b16 %v134
    %v415 = vunpack.c.h.b16 %v134
    %v416 = vunpack.c.l.b16 %v135
    %v417 = vunpack.c.h.b16 %v135
    %v418 = vunpack.c.l.b16 %v136
    %v419 = vunpack.c.h.b16 %v136
    %v420 = vunpack.c.l.b16 %v137
    %v421 = vunpack.c.h.b16 %v137
    %v422 = vunpack.c.l.b16 %v138
    %v423 = vunpack.c.h.b16 %v138
    %v424 = vunpack.c.l.b16 %v139
    %v425 = vunpack.c.h.b16 %v139
    %v426 = vunpack.c.l.b16 %v140
    %v427 = vunpack.c.h.b16 %v140
    %v428 = vunpack.c.l.b16 %v141
    %v429 = vunpack.c.h.b16 %v141
    %v430 = vunpack.c.l.b16 %v142
    %v431 = vunpack.c.h.b16 %v142
    %v432 = vunpack.c.l.b16 %v143
    %v433 = vunpack.c.h.b16 %v143
    %v434 = vunpack.c.l.b16 %v144
    %v435 = vunpack.c.h.b16 %v144
    %v436 = vunpack.c.l.b16 %v145
    %v437 = vunpack.c.h.b16 %v145
    %v438 = vunpack.c.l.b16 %v146
    %v439 = vunpack.c.h.b16 %v146
    %v440 = vunpack.c.l.b16 %v147
    %v441 = vunpack.c.h.b16 %v147
    %v442 = vunpack.c.l.b16 %v148
    %v443 = vunpack.c.h.b16 %v148
    %v444 = vunpack.c.l.b16 %v149
    %v445 = vunpack.c.h.b16 %v149
    %v446 = vunpack.c.l.b16 %v150
    %v447 = vunpack.c.h.b16 %v150
    %v448 = vunpack.c.l.b16 %v151
    %v449 = vunpack.c.h.b16 %v151
    %v450 = vunpack.c.l.b16 %v152
    %v451 = vunpack.c.h.b16 %v152
    %v452 = vunpack.c.l.b16 %v153
    %v453 = vunpack.c.h.b16 %v153
    %v454 = vunpack.c.l.b16 %v154
    %v455 = vunpack.c.h.b16 %v154
    %v456 = vunpack.c.l.b16 %v155
    %v457 = vunpack.c.h.b16 %v155
    %v458 = vunpack.c.l.b16 %v156
    %v459 = vunpack.c.h.b16 %v156
    %v460 = vunpack.c.l.b16 %v157
    %v461 = vunpack.c.h.b16 %v157
    %v462 = vunpack.c.l.b16 %v158
    %v463 = vunpack.c.h.b16 %v158
    %v464 = vunpack.c.l.b16 %v159
    %v465 = vunpack.c.h.b16 %v159
    %v466 = vunpack.c.l.b16 %v160
    %v467 = vunpack.c.h.b16 %v160
    %v468 = vunpack.c.l.b16 %v161
    %v469 = vunpack.c.h.b16 %v161
    %v470 = vunpack.c.l.b16 %v162
    %v471 = vunpack.c.h.b16 %v162
    %v472 = vunpack.c.l.b16 %v163
    %v473 = vunpack.c.h.b16 %v163
    %v474 = vunpack.c.l.b16 %v164
    %v475 = vunpack.c.h.b16 %v164
    %v476 = vunpack.c.l.b16 %v165
    %v477 = vunpack.c.h.b16 %v165
    %v478 = vunpack.c.l.b16 %v166
    %v479 = vunpack.c.h.b16 %v166
    %v480 = vunpack.c.l.b16 %v167
    %v481 = vunpack.c.h.b16 %v167
    %v482 = vunpack.c.l.b16 %v168
    %v483 = vunpack.c.h.b16 %v168
    %v484 = vunpack.c.l.b16 %v169
    %v485 = vunpack.c.h.b16 %v169
    %v486 = vunpack.c.l.b16 %v170
    %v487 = vunpack.c.h.b16 %v170
    %v488 = vunpack.c.l.b16 %v171
    %v489 = vunpack.c.h.b16 %v171
    %v490 = vunpack.c.l.b16 %v172
    %v491 = vunpack.c.h.b16 %v172
    %v492 = vunpack.c.l.b16 %v173
    %v493 = vunpack.c.h.b16 %v173
    %v494 = vunpack.c.l.b16 %v174
    %v495 = vunpack.c.h.b16 %v174
    %v496 = vunpack.c.l.b16 %v175
    %v497 = vunpack.c.h.b16 %v175
    %v498 = vunpack.c.l.b16 %v176
    %v499 = vunpack.c.h.b16 %v176
    %v500 = vunpack.c.l.b16 %v177
    %v501 = vunpack.c.h.b16 %v177
    %v502 = vunpack.c.l.b16 %v178
    %v503 = vunpack.c.h.b16 %v178
    %v504 = vunpack.c.l.b16 %v179
    %v505 = vunpack.c.h.b16 %v179
    %v506 = vunpack.c.l.b16 %v180
    %v507 = vunpack.c.h.b16 %v180
    %v508 = vunpack.c.l.b16 %v181
    %v509 = vunpack.c.h.b16 %v181
    %v510 = vunpack.c.l.b16 %v182
    %v511 = vunpack.c.h.b16 %v182
    %v512 = vunpack.c.l.b16 %v183
    %v513 = vunpack.c.h.b16 %v183
    %v514 = vunpack.c.l.b16 %v184
    %v515 = vunpack.c.h.b16 %v184
    %v516 = vunpack.c.l.b16 %v185
    %v517 = vunpack.c.h.b16 %v185
    %v518 = vunpack.c.l.b16 %v186
    %v519 = vunpack.c.h.b16 %v186
    %v520 = vunpack.c.l.b16 %v187
    %v521 = vunpack.c.h.b16 %v187
    %v522 = vunpack.c.l.b16 %v188
    %v523 = vunpack.c.h.b16 %v188
    %v524 = vunpack.c.l.b16 %v189
    %v525 = vunpack.c.h.b16 %v189
    %v526 = vunpack.c.l.b16 %v190
    %v527 = vunpack.c.h.b16 %v190
    %v528 = vunpack.c.l.b16 %v191
    %v529 = vunpack.c.h.b16 %v191
    %v530 = vunpack.c.l.b16 %v192
    %v531 = vunpack.c.h.b16 %v192
    %v532 = vunpack.c.l.b16 %v193
    %v533 = vunpack.c.h.b16 %v193
    %v534 = vunpack.c.l.b16 %v194
    %v535 = vunpack.c.h.b16 %v194
    %v536 = vunpack.c.l.b16 %v195
    %v537 = vunpack.c.h.b16 %v195
    %v538 = vunpack.c.l.b16 %v196
    %v539 = vunpack.c.h.b16 %v196
    %v540 = vunpack.c.l.b16 %v197
    %v541 = vunpack.c.h.b16 %v197
    %v542 = vunpack.c.l.b16 %v198
    %v543 = vunpack.c.h.b16 %v198
    %v544 = vunpack.c.l.b16 %v199
    %v545 = vunpack.c.h.b16 %v199
    %v546 = vunpack.c.l.b16 %v200
    %v547 = vunpack.c.h.b16 %v200
    %v548 = vunpack.c.l.b16 %v201
    %v549 = vunpack.c.h.b16 %v201
    %v550 = vunpack.c.l.b16 %v202
    %v551 = vunpack.c.h.b16 %v202
    %v552 = vunpack.c.l.b16 %v203
    %v553 = vunpack.c.h.b16 %v203
    %v554 = vunpack.c.l.b16 %v204
    %v555 = vunpack.c.h.b16 %v204
    %v556 = vunpack.c.l.b16 %v205
    %v557 = vunpack.c.h.b16 %v205
    %v558 = vunpack.c.l.b16 %v206
    %v559 = vunpack.c.h.b16 %v206
    %v560 = vunpack.c.l.b16 %v207
    %v561 = vunpack.c.h.b16 %v207
    %v562 = vunpack.c.l.b16 %v208
    %v563 = vunpack.c.h.b16 %v208
    %v564 = vunpack.c.l.b16 %v209
    %v565 = vunpack.c.h.b16 %v209
    %v566 = vunpack.c.l.b16 %v210
    %v567 = vunpack.c.h.b16 %v210
    %v568 = vunpack.c.l.b16 %v211
    %v569 = vunpack.c.h.b16 %v211
    %v570 = vpack.c.b16 %v390, %v378
    %v571 = vpack.c.b16 %v391, %v379
    %v572 = vpack.c.b16 %v392, %v380
    %v573 = vpack.c.b16 %v393, %v381
    %v574 = vpack.c.b16 %v394, %v382
    %v575 = vpack.c.b16 %v395, %v383
    %v576 = vpack.c.b16 %v396, %v384
    %v577 = vpack.c.b16 %v397, %v385
    %v578 = vpack.c.b16 %v398, %v386
    %v579 = vpack.c.b16 %v399, %v387
    %v580 = vpack.c.b16 %v400, %v388
    %v581 = vpack.c.b16 %v401, %v389
    %v582 = vpack.c.b16 %v414, %v402
    %v583 = vpack.c.b16 %v415, %v403
    %v584 = vpack.c.b16 %v416, %v404
    %v585 = vpack.c.b16 %v417, %v405
    %v586 = vpack.c.b16 %v418, %v406
    %v587 = vpack.c.b16 %v419, %v407
    %v588 = vpack.c.b16 %v420, %v408
    %v589 = vpack.c.b16 %v421, %v409
    %v590 = vpack.c.b16 %v422, %v410
    %v591 = vpack.c.b16 %v423, %v411
    %v592 = vpack.c.b16 %v424, %v412
    %v593 = vpack.c.b16 %v425, %v413
    %v594 = vpack.c.b16 %v438, %v426
    %v595 = vpack.c.b16 %v439, %v427
    %v596 = vpack.c.b16 %v440, %v428
    %v597 = vpack.c.b16 %v441, %v429
    %v598 = vpack.c.b16 %v442, %v430
    %v599 = vpack.c.b16 %v443, %v431
    %v600 = vpack.c.b16 %v444, %v432
    %v601 = vpack.c.b16 %v445, %v433
    %v602 = vpack.c.b16 %v446, %v434
    %v603 = vpack.c.b16 %v447, %v435
    %v604 = vpack.c.b16 %v448, %v436
    %v605 = vpack.c.b16 %v449, %v437
    %v606 = vpack.c.b16 %v462, %v450
    %v607 = vpack.c.b16 %v463, %v451
    %v608 = vpack.c.b16 %v464, %v452
    %v609 = vpack.c.b16 %v465, %v453
    %v610 = vpack.c.b16 %v466, %v454
    %v611 = vpack.c.b16 %v467, %v455
    %v612 = vpack.c.b16 %v468, %v456
    %v613 = vpack.c.b16 %v469, %v457
    %v614 = vpack.c.b16 %v470, %v458
    %v615 = vpack.c.b16 %v471, %v459
    %v616 = vpack.c.b16 %v472, %v460
    %v617 = vpack.c.b16 %v473, %v461
    %v618 = vpack.c.b16 %v486, %v474
    %v619 = vpack.c.b16 %v487, %v475
    %v620 = vpack.c.b16 %v488, %v476
    %v621 = vpack.c.b16 %v489, %v477
    %v622 = vpack.c.b16 %v490, %v478
    %v623 = vpack.c.b16 %v491, %v479
    %v624 = vpack.c.b16 %v492, %v480
    %v625 = vpack.c.b16 %v493, %v481
    %v626 = vpack.c.b16 %v494, %v482
    %v627 = vpack.c.b16 %v495, %v483
    %v628 = vpack.c.b16 %v496, %v484
    %v629 = vpack.c.b16 %v497, %v485
    %v630 = vpack.c.b16 %v510, %v498
    %v631 = vpack.c.b16 %v511, %v499
    %v632 = vpack.c.b16 %v512, %v500
    %v633 = vpack.c.b16 %v513, %v501
    %v634 = vpack.c.b16 %v514, %v502
    %v635 = vpack.c.b16 %v515, %v503
    %v636 = vpack.c.b16 %v516, %v504
    %v637 = vpack.c.b16 %v517, %v505
    %v638 = vpack.c.b16 %v518, %v506
    %v639 = vpack.c.b16 %v519, %v507
    %v640 = vpack.c.b16 %v520, %v508
    %v641 = vpack.c.b16 %v521, %v509
    %v642 = vpack.c.b16 %v534, %v522
    %v643 = vpack.c.b16 %v535, %v523
    %v644 = vpack.c.b16 %v536, %v524
    %v645 = vpack.c.b16 %v537, %v525
    %v646 = vpack.c.b16 %v538, %v526
    %v647 = vpack.c.b16 %v539, %v527
    %v648 = vpack.c.b16 %v540, %v528
    %v649 = vpack.c.b16 %v541, %v529
    %v650 = vpack.c.b16 %v542, %v530
    %v651 = vpack.c.b16 %v543, %v531
    %v652 = vpack.c.b16 %v544, %v532
    %v653 = vpack.c.b16 %v545, %v533
    %v654 = vpack.c.b16 %v558, %v546
    %v655 = vpack.c.b16 %v559, %v547
    %v656 = vpack.c.b16 %v560, %v548
    %v657 = vpack.c.b16 %v561, %v549
    %v658 = vpack.c.b16 %v562, %v550
    %v659 = vpack.c.b16 %v563, %v551
    %v660 = vpack.c.b16 %v564, %v552
    %v661 = vpack.c.b16 %v565, %v553
    %v662 = vpack.c.b16 %v566, %v554
    %v663 = vpack.c.b16 %v567, %v555
    %v664 = vpack.c.b16 %v568, %v556
    %v665 = vpack.c.b16 %v569, %v557
    %762 = vmatprep.subr.bf16.mxu0 %v655
    %763 = vmatpush1.bf16.msra.mxu0 %v654
    %764 = vmatprep.subr.bf16.mxu0 %v643
    %765 = vmatpush1.bf16.msra.mxu0 %v642
    %766 = vmatprep.subr.bf16.mxu0 %v631
    %767 = vmatpush1.bf16.msra.mxu0 %v630
    %768 = vmatprep.subr.bf16.mxu0 %v619
    %769 = vmatpush1.bf16.msra.mxu0 %v618
    %770 = vmatprep.subr.bf16.mxu0 %v607
    %771 = vmatpush1.bf16.msra.mxu0 %v606
    %772 = vmatprep.subr.bf16.mxu0 %v595
    %773 = vmatpush1.bf16.msra.mxu0 %v594
    %774 = vmatprep.subr.bf16.mxu0 %v583
    %775 = vmatpush1.bf16.msra.mxu0 %v582
    %776 = vmatprep.subr.bf16.mxu0 %v571
    %777 = vmatpush1.bf16.msra.mxu0 %v570
    %778 = vmatprep.subr.bf16.mxu0 0
    %779 = vmatpush2.bf16.msra.mxu0 0
    %780 = vmatprep.subr.bf16.mxu0 0
    %781 = vmatpush2.bf16.msra.mxu0 0
    %782 = vmatprep.subr.bf16.mxu0 0
    %783 = vmatpush2.bf16.msra.mxu0 0
    %784 = vmatprep.subr.bf16.mxu0 0
    %785 = vmatpush2.bf16.msra.mxu0 0
    %786 = vmatprep.subr.bf16.mxu0 0
    %787 = vmatpush2.bf16.msra.mxu0 0
    %788 = vmatprep.subr.bf16.mxu0 0
    %789 = vmatpush2.bf16.msra.mxu0 0
    %790 = vmatprep.subr.bf16.mxu0 0
    %791 = vmatpush2.bf16.msra.mxu0 0
    %792 = vmatprep.subr.bf16.mxu0 0
    %793 = vmatpush2.bf16.msra.mxu0 0
    %794 = vmatprep.mubr.bf16.mxu0 0
    %795 = vmatmul.mubr.bf16.gmra.mxu0 %v280
    %v796 = vpop.f32.mrf.mxu0
    %v797 = vadd.f32 %v219, %v796
    %v798 = vpop.f32.mrf.mxu0
    %v799 = vadd.f32 %v223, %v798
    %v800 = vpop.f32.mrf.mxu0
    %v801 = vadd.f32 %v219, %v800
    %v802 = vpop.f32.mrf.mxu0
    %v803 = vadd.f32 %v223, %v802
    %804 = vdwg.mxu0
    %805 = vmatprep.subr.bf16.mxu0 %v657
    %806 = vmatpush1.bf16.msra.mxu0 %v656
    %807 = vmatprep.subr.bf16.mxu0 %v645
    %808 = vmatpush1.bf16.msra.mxu0 %v644
    %809 = vmatprep.subr.bf16.mxu0 %v633
    %810 = vmatpush1.bf16.msra.mxu0 %v632
    %811 = vmatprep.subr.bf16.mxu0 %v621
    %812 = vmatpush1.bf16.msra.mxu0 %v620
    %813 = vmatprep.subr.bf16.mxu0 %v609
    %814 = vmatpush1.bf16.msra.mxu0 %v608
    %815 = vmatprep.subr.bf16.mxu0 %v597
    %816 = vmatpush1.bf16.msra.mxu0 %v596
    %817 = vmatprep.subr.bf16.mxu0 %v585
    %818 = vmatpush1.bf16.msra.mxu0 %v584
    %819 = vmatprep.subr.bf16.mxu0 %v573
    %820 = vmatpush1.bf16.msra.mxu0 %v572
    %821 = vmatprep.subr.bf16.mxu0 0
    %822 = vmatpush2.bf16.msra.mxu0 0
    %823 = vmatprep.subr.bf16.mxu0 0
    %824 = vmatpush2.bf16.msra.mxu0 0
    %825 = vmatprep.subr.bf16.mxu0 0
    %826 = vmatpush2.bf16.msra.mxu0 0
    %827 = vmatprep.subr.bf16.mxu0 0
    %828 = vmatpush2.bf16.msra.mxu0 0
    %829 = vmatprep.subr.bf16.mxu0 0
    %830 = vmatpush2.bf16.msra.mxu0 0
    %831 = vmatprep.subr.bf16.mxu0 0
    %832 = vmatpush2.bf16.msra.mxu0 0
    %833 = vmatprep.subr.bf16.mxu0 0
    %834 = vmatpush2.bf16.msra.mxu0 0
    %835 = vmatprep.subr.bf16.mxu0 0
    %836 = vmatpush2.bf16.msra.mxu0 0
    %837 = vmatprep.mubr.bf16.mxu0 0
    %838 = vmatmul.mubr.bf16.gmra.mxu0 %v280
    %v839 = vpop.f32.mrf.mxu0
    %v840 = vadd.f32 %v227, %v839
    %v841 = vpop.f32.mrf.mxu0
    %v842 = vadd.f32 %v231, %v841
    %v843 = vpop.f32.mrf.mxu0
    %v844 = vadd.f32 %v227, %v843
    %v845 = vpop.f32.mrf.mxu0
    %v846 = vadd.f32 %v231, %v845
    %847 = vdwg.mxu0
    %848 = vmatprep.subr.bf16.mxu0 %v659
    %849 = vmatpush1.bf16.msra.mxu0 %v658
    %850 = vmatprep.subr.bf16.mxu0 %v647
    %851 = vmatpush1.bf16.msra.mxu0 %v646
    %852 = vmatprep.subr.bf16.mxu0 %v635
    %853 = vmatpush1.bf16.msra.mxu0 %v634
    %854 = vmatprep.subr.bf16.mxu0 %v623
    %855 = vmatpush1.bf16.msra.mxu0 %v622
    %856 = vmatprep.subr.bf16.mxu0 %v611
    %857 = vmatpush1.bf16.msra.mxu0 %v610
    %858 = vmatprep.subr.bf16.mxu0 %v599
    %859 = vmatpush1.bf16.msra.mxu0 %v598
    %860 = vmatprep.subr.bf16.mxu0 %v587
    %861 = vmatpush1.bf16.msra.mxu0 %v586
    %862 = vmatprep.subr.bf16.mxu0 %v575
    %863 = vmatpush1.bf16.msra.mxu0 %v574
    %864 = vmatprep.subr.bf16.mxu0 0
    %865 = vmatpush2.bf16.msra.mxu0 0
    %866 = vmatprep.subr.bf16.mxu0 0
    %867 = vmatpush2.bf16.msra.mxu0 0
    %868 = vmatprep.subr.bf16.mxu0 0
    %869 = vmatpush2.bf16.msra.mxu0 0
    %870 = vmatprep.subr.bf16.mxu0 0
    %871 = vmatpush2.bf16.msra.mxu0 0
    %872 = vmatprep.subr.bf16.mxu0 0
    %873 = vmatpush2.bf16.msra.mxu0 0
    %874 = vmatprep.subr.bf16.mxu0 0
    %875 = vmatpush2.bf16.msra.mxu0 0
    %876 = vmatprep.subr.bf16.mxu0 0
    %877 = vmatpush2.bf16.msra.mxu0 0
    %878 = vmatprep.subr.bf16.mxu0 0
    %879 = vmatpush2.bf16.msra.mxu0 0
    %880 = vmatprep.mubr.bf16.mxu0 0
    %881 = vmatmul.mubr.bf16.gmra.mxu0 %v280
    %v882 = vpop.f32.mrf.mxu0
    %v883 = vadd.f32 %v235, %v882
    %v884 = vpop.f32.mrf.mxu0
    %v885 = vadd.f32 %v239, %v884
    %v886 = vpop.f32.mrf.mxu0
    %v887 = vadd.f32 %v235, %v886
    %v888 = vpop.f32.mrf.mxu0
    %v889 = vadd.f32 %v239, %v888
    %890 = vdwg.mxu0
    %891 = vmatprep.subr.bf16.mxu0 %v661
    %892 = vmatpush1.bf16.msra.mxu0 %v660
    %893 = vmatprep.subr.bf16.mxu0 %v649
    %894 = vmatpush1.bf16.msra.mxu0 %v648
    %895 = vmatprep.subr.bf16.mxu0 %v637
    %896 = vmatpush1.bf16.msra.mxu0 %v636
    %897 = vmatprep.subr.bf16.mxu0 %v625
    %898 = vmatpush1.bf16.msra.mxu0 %v624
    %899 = vmatprep.subr.bf16.mxu0 %v613
    %900 = vmatpush1.bf16.msra.mxu0 %v612
    %901 = vmatprep.subr.bf16.mxu0 %v601
    %902 = vmatpush1.bf16.msra.mxu0 %v600
    %903 = vmatprep.subr.bf16.mxu0 %v589
    %904 = vmatpush1.bf16.msra.mxu0 %v588
    %905 = vmatprep.subr.bf16.mxu0 %v577
    %906 = vmatpush1.bf16.msra.mxu0 %v576
    %907 = vmatprep.subr.bf16.mxu0 0
    %908 = vmatpush2.bf16.msra.mxu0 0
    %909 = vmatprep.subr.bf16.mxu0 0
    %910 = vmatpush2.bf16.msra.mxu0 0
    %911 = vmatprep.subr.bf16.mxu0 0
    %912 = vmatpush2.bf16.msra.mxu0 0
    %913 = vmatprep.subr.bf16.mxu0 0
    %914 = vmatpush2.bf16.msra.mxu0 0
    %915 = vmatprep.subr.bf16.mxu0 0
    %916 = vmatpush2.bf16.msra.mxu0 0
    %917 = vmatprep.subr.bf16.mxu0 0
    %918 = vmatpush2.bf16.msra.mxu0 0
    %919 = vmatprep.subr.bf16.mxu0 0
    %920 = vmatpush2.bf16.msra.mxu0 0
    %921 = vmatprep.subr.bf16.mxu0 0
    %922 = vmatpush2.bf16.msra.mxu0 0
    %923 = vmatprep.mubr.bf16.mxu0 0
    %924 = vmatmul.mubr.bf16.gmra.mxu0 %v280
    %v925 = vpop.f32.mrf.mxu0
    %v926 = vadd.f32 %v243, %v925
    %v927 = vpop.f32.mrf.mxu0
    %v928 = vadd.f32 %v247, %v927
    %v929 = vpop.f32.mrf.mxu0
    %v930 = vadd.f32 %v243, %v929
    %v931 = vpop.f32.mrf.mxu0
    %v932 = vadd.f32 %v247, %v931
    %933 = vdwg.mxu0
    %934 = vmatprep.subr.bf16.mxu0 %v663
    %935 = vmatpush1.bf16.msra.mxu0 %v662
    %936 = vmatprep.subr.bf16.mxu0 %v651
    %937 = vmatpush1.bf16.msra.mxu0 %v650
    %938 = vmatprep.subr.bf16.mxu0 %v639
    %939 = vmatpush1.bf16.msra.mxu0 %v638
    %940 = vmatprep.subr.bf16.mxu0 %v627
    %941 = vmatpush1.bf16.msra.mxu0 %v626
    %942 = vmatprep.subr.bf16.mxu0 %v615
    %943 = vmatpush1.bf16.msra.mxu0 %v614
    %944 = vmatprep.subr.bf16.mxu0 %v603
    %945 = vmatpush1.bf16.msra.mxu0 %v602
    %946 = vmatprep.subr.bf16.mxu0 %v591
    %947 = vmatpush1.bf16.msra.mxu0 %v590
    %948 = vmatprep.subr.bf16.mxu0 %v579
    %949 = vmatpush1.bf16.msra.mxu0 %v578
    %950 = vmatprep.subr.bf16.mxu0 0
    %951 = vmatpush2.bf16.msra.mxu0 0
    %952 = vmatprep.subr.bf16.mxu0 0
    %953 = vmatpush2.bf16.msra.mxu0 0
    %954 = vmatprep.subr.bf16.mxu0 0
    %955 = vmatpush2.bf16.msra.mxu0 0
    %956 = vmatprep.subr.bf16.mxu0 0
    %957 = vmatpush2.bf16.msra.mxu0 0
    %958 = vmatprep.subr.bf16.mxu0 0
    %959 = vmatpush2.bf16.msra.mxu0 0
    %960 = vmatprep.subr.bf16.mxu0 0
    %961 = vmatpush2.bf16.msra.mxu0 0
    %962 = vmatprep.subr.bf16.mxu0 0
    %963 = vmatpush2.bf16.msra.mxu0 0
    %964 = vmatprep.subr.bf16.mxu0 0
    %965 = vmatpush2.bf16.msra.mxu0 0
    %966 = vmatprep.mubr.bf16.mxu0 0
    %967 = vmatmul.mubr.bf16.gmra.mxu0 %v280
    %v968 = vpop.f32.mrf.mxu0
    %v969 = vadd.f32 %v251, %v968
    %v970 = vpop.f32.mrf.mxu0
    %v971 = vadd.f32 %v255, %v970
    %v972 = vpop.f32.mrf.mxu0
    %v973 = vadd.f32 %v251, %v972
    %v974 = vpop.f32.mrf.mxu0
    %v975 = vadd.f32 %v255, %v974
    %976 = vdwg.mxu0
    %977 = vmatprep.subr.bf16.mxu0 %v665
    %978 = vmatpush1.bf16.msra.mxu0 %v664
    %979 = vmatprep.subr.bf16.mxu0 %v653
    %980 = vmatpush1.bf16.msra.mxu0 %v652
    %981 = vmatprep.subr.bf16.mxu0 %v641
    %982 = vmatpush1.bf16.msra.mxu0 %v640
    %983 = vmatprep.subr.bf16.mxu0 %v629
    %984 = vmatpush1.bf16.msra.mxu0 %v628
    %985 = vmatprep.subr.bf16.mxu0 %v617
    %986 = vmatpush1.bf16.msra.mxu0 %v616
    %987 = vmatprep.subr.bf16.mxu0 %v605
    %988 = vmatpush1.bf16.msra.mxu0 %v604
    %989 = vmatprep.subr.bf16.mxu0 %v593
    %990 = vmatpush1.bf16.msra.mxu0 %v592
    %991 = vmatprep.subr.bf16.mxu0 %v581
    %992 = vmatpush1.bf16.msra.mxu0 %v580
    %993 = vmatprep.subr.bf16.mxu0 0
    %994 = vmatpush2.bf16.msra.mxu0 0
    %995 = vmatprep.subr.bf16.mxu0 0
    %996 = vmatpush2.bf16.msra.mxu0 0
    %997 = vmatprep.subr.bf16.mxu0 0
    %998 = vmatpush2.bf16.msra.mxu0 0
    %999 = vmatprep.subr.bf16.mxu0 0
    %1000 = vmatpush2.bf16.msra.mxu0 0
    %1001 = vmatprep.subr.bf16.mxu0 0
    %1002 = vmatpush2.bf16.msra.mxu0 0
    %1003 = vmatprep.subr.bf16.mxu0 0
    %1004 = vmatpush2.bf16.msra.mxu0 0
    %1005 = vmatprep.subr.bf16.mxu0 0
    %1006 = vmatpush2.bf16.msra.mxu0 0
    %1007 = vmatprep.subr.bf16.mxu0 0
    %1008 = vmatpush2.bf16.msra.mxu0 0
    %1009 = vmatprep.mubr.bf16.mxu0 0
    %1010 = vmatmul.mubr.bf16.gmra.mxu0 %v280
    %v1011 = vpop.f32.mrf.mxu0
    %v1012 = vadd.f32 %v259, %v1011
    %v1013 = vpop.f32.mrf.mxu0
    %v1014 = vadd.f32 %v263, %v1013
    %v1015 = vpop.f32.mrf.mxu0
    %v1016 = vadd.f32 %v259, %v1015
    %v1017 = vpop.f32.mrf.mxu0
    %v1018 = vadd.f32 %v263, %v1017
    %1019 = vdwg.mxu0
    %1020 = vst [vmem:[#allocation2] sm:$0xff] %v797
    %1021 = vst [vmem:[#allocation2 + $0x8] sm:$0xff] %v799
    %1022 = vst [vmem:[#allocation2 + $0x10] sm:$0xff] %v840
    %1023 = vst [vmem:[#allocation2 + $0x18] sm:$0xff] %v842
    %1024 = vst [vmem:[#allocation2 + $0x20] sm:$0xff] %v883
    %1025 = vst [vmem:[#allocation2 + $0x28] sm:$0xff] %v885
    %1026 = vst [vmem:[#allocation2 + $0x30] sm:$0xff] %v926
    %1027 = vst [vmem:[#allocation2 + $0x38] sm:$0xff] %v928
    %1028 = vst [vmem:[#allocation2 + $0x40] sm:$0xff] %v969
    %1029 = vst [vmem:[#allocation2 + $0x48] sm:$0xff] %v971
    %1030 = vst [vmem:[#allocation2 + $0x50] sm:$0xff] %v1012
    %1031 = vst [vmem:[#allocation2 + $0x58] sm:$0xff] %v1014
    %1032 = vst [vmem:[#allocation2 + $0x60] sm:$0xff] %v801
    %1033 = vst [vmem:[#allocation2 + $0x68] sm:$0xff] %v803
    %1034 = vst [vmem:[#allocation2 + $0x70] sm:$0xff] %v844
    %1035 = vst [vmem:[#allocation2 + $0x78] sm:$0xff] %v846
    %1036 = vst [vmem:[#allocation2 + $0x80] sm:$0xff] %v887
    %1037 = vst [vmem:[#allocation2 + $0x88] sm:$0xff] %v889
    %1038 = vst [vmem:[#allocation2 + $0x90] sm:$0xff] %v930
    %1039 = vst [vmem:[#allocation2 + $0x98] sm:$0xff] %v932
    %1040 = vst [vmem:[#allocation2 + $0xa0] sm:$0xff] %v973
    %1041 = vst [vmem:[#allocation2 + $0xa8] sm:$0xff] %v975
    %1042 = vst [vmem:[#allocation2 + $0xb0] sm:$0xff] %v1016
    %1043 = vst [vmem:[#allocation2 + $0xb8] sm:$0xff] %v1018
    %v1044 = vld [vmem:[#allocation2] sm:$0xff]
    %v1045 = vld [vmem:[#allocation2 + $0x8] sm:$0xff]
    %v1046 = vld [vmem:[#allocation2 + $0x10] sm:$0xff]
    %v1047 = vld [vmem:[#allocation2 + $0x18] sm:$0xff]
    %v1048 = vld [vmem:[#allocation2 + $0x60] sm:$0xff]
    %v1049 = vld [vmem:[#allocation2 + $0x68] sm:$0xff]
    %v1050 = vld [vmem:[#allocation2 + $0x70] sm:$0xff]
    %v1051 = vld [vmem:[#allocation2 + $0x78] sm:$0xff]
    %v1052 = vld [vmem:[#allocation2 + $0x20] sm:$0xff]
    %v1053 = vld [vmem:[#allocation2 + $0x28] sm:$0xff]
    %v1054 = vld [vmem:[#allocation2 + $0x30] sm:$0xff]
    %v1055 = vld [vmem:[#allocation2 + $0x38] sm:$0xff]
    %v1056 = vld [vmem:[#allocation2 + $0x80] sm:$0xff]
    %v1057 = vld [vmem:[#allocation2 + $0x88] sm:$0xff]
    %v1058 = vld [vmem:[#allocation2 + $0x90] sm:$0xff]
    %v1059 = vld [vmem:[#allocation2 + $0x98] sm:$0xff]
    %v1060 = vmul.f32 %v1044, %v1052
    %v1061 = vmul.f32 %v1045, %v1053
    %v1062 = vmul.f32 %v1046, %v1054
    %v1063 = vmul.f32 %v1047, %v1055
    %v1064 = vmul.f32 %v1048, %v1056
    %v1065 = vmul.f32 %v1049, %v1057
    %v1066 = vmul.f32 %v1050, %v1058
    %v1067 = vmul.f32 %v1051, %v1059
    %v1068 = vld [vmem:[%s3] sm:$0xff]
    %v1069 = vld [vmem:[%s3 + $0x8] sm:$0xff]
    %v1070 = vld [vmem:[%s3 + $0x10] sm:$0xff]
    %v1071 = vld [vmem:[%s3 + $0x18] sm:$0xff]
    %v1072 = vld [vmem:[%s3 + $0x20] sm:$0xff]
    %v1073 = vld [vmem:[%s3 + $0x28] sm:$0xff]
    %v1074 = vld [vmem:[%s3 + $0x30] sm:$0xff]
    %v1075 = vld [vmem:[%s3 + $0x38] sm:$0xff]
    %v1076 = vld [vmem:[%s3 + $0x40] sm:$0xff]
    %v1077 = vld [vmem:[%s3 + $0x48] sm:$0xff]
    %v1078 = vld [vmem:[%s3 + $0x50] sm:$0xff]
    %v1079 = vld [vmem:[%s3 + $0x58] sm:$0xff]
    %v1080 = vld [vmem:[%s3 + $0x60] sm:$0xff]
    %v1081 = vld [vmem:[%s3 + $0x68] sm:$0xff]
    %v1082 = vld [vmem:[%s3 + $0x70] sm:$0xff]
    %v1083 = vld [vmem:[%s3 + $0x78] sm:$0xff]
    %v1084 = vld [vmem:[%s3 + $0x80] sm:$0xff]
    %v1085 = vld [vmem:[%s3 + $0x88] sm:$0xff]
    %v1086 = vld [vmem:[%s3 + $0x90] sm:$0xff]
    %v1087 = vld [vmem:[%s3 + $0x98] sm:$0xff]
    %v1088 = vld [vmem:[%s3 + $0xa0] sm:$0xff]
    %v1089 = vld [vmem:[%s3 + $0xa8] sm:$0xff]
    %v1090 = vld [vmem:[%s3 + $0xb0] sm:$0xff]
    %v1091 = vld [vmem:[%s3 + $0xb8] sm:$0xff]
    %v1092 = vld [vmem:[%s3 + $0xc0] sm:$0xff]
    %v1093 = vld [vmem:[%s3 + $0xc8] sm:$0xff]
    %v1094 = vld [vmem:[%s3 + $0xd0] sm:$0xff]
    %v1095 = vld [vmem:[%s3 + $0xd8] sm:$0xff]
    %v1096 = vld [vmem:[%s3 + $0xe0] sm:$0xff]
    %v1097 = vld [vmem:[%s3 + $0xe8] sm:$0xff]
    %v1098 = vld [vmem:[%s3 + $0xf0] sm:$0xff]
    %v1099 = vld [vmem:[%s3 + $0xf8] sm:$0xff]
    %v1100 = vld [vmem:[%s3 + $0x100] sm:$0xff]
    %v1101 = vld [vmem:[%s3 + $0x108] sm:$0xff]
    %v1102 = vld [vmem:[%s3 + $0x110] sm:$0xff]
    %v1103 = vld [vmem:[%s3 + $0x118] sm:$0xff]
    %v1104 = vld [vmem:[%s3 + $0x120] sm:$0xff]
    %v1105 = vld [vmem:[%s3 + $0x128] sm:$0xff]
    %v1106 = vld [vmem:[%s3 + $0x130] sm:$0xff]
    %v1107 = vld [vmem:[%s3 + $0x138] sm:$0xff]
    %v1108 = vld [vmem:[%s3 + $0x140] sm:$0xff]
    %v1109 = vld [vmem:[%s3 + $0x148] sm:$0xff]
    %v1110 = vld [vmem:[%s3 + $0x150] sm:$0xff]
    %v1111 = vld [vmem:[%s3 + $0x158] sm:$0xff]
    %v1112 = vld [vmem:[%s3 + $0x160] sm:$0xff]
    %v1113 = vld [vmem:[%s3 + $0x168] sm:$0xff]
    %v1114 = vld [vmem:[%s3 + $0x170] sm:$0xff]
    %v1115 = vld [vmem:[%s3 + $0x178] sm:$0xff]
    %v1116 = vld [vmem:[%s3 + $0x180] sm:$0xff]
    %v1117 = vld [vmem:[%s3 + $0x188] sm:$0xff]
    %v1118 = vld [vmem:[%s3 + $0x190] sm:$0xff]
    %v1119 = vld [vmem:[%s3 + $0x198] sm:$0xff]
    %v1120 = vld [vmem:[%s3 + $0x1a0] sm:$0xff]
    %v1121 = vld [vmem:[%s3 + $0x1a8] sm:$0xff]
    %v1122 = vld [vmem:[%s3 + $0x1b0] sm:$0xff]
    %v1123 = vld [vmem:[%s3 + $0x1b8] sm:$0xff]
    %v1124 = vld [vmem:[%s3 + $0x1c0] sm:$0xff]
    %v1125 = vld [vmem:[%s3 + $0x1c8] sm:$0xff]
    %v1126 = vld [vmem:[%s3 + $0x1d0] sm:$0xff]
    %v1127 = vld [vmem:[%s3 + $0x1d8] sm:$0xff]
    %v1128 = vld [vmem:[%s3 + $0x1e0] sm:$0xff]
    %v1129 = vld [vmem:[%s3 + $0x1e8] sm:$0xff]
    %v1130 = vld [vmem:[%s3 + $0x1f0] sm:$0xff]
    %v1131 = vld [vmem:[%s3 + $0x1f8] sm:$0xff]
    %1132 = vmatprep.subr.mxu0 0.0
    %1133 = vmatpush1.msra.mxu0 %v1083
    %1134 = vmatprep.subr.mxu0 0.0
    %1135 = vmatpush1.msra.mxu0 %v1082
    %1136 = vmatprep.subr.mxu0 0.0
    %1137 = vmatpush1.msra.mxu0 %v1081
    %1138 = vmatprep.subr.mxu0 0.0
    %1139 = vmatpush1.msra.mxu0 %v1080
    %1140 = vmatprep.subr.mxu0 0.0
    %1141 = vmatpush1.msra.mxu0 %v1079
    %1142 = vmatprep.subr.mxu0 0.0
    %1143 = vmatpush1.msra.mxu0 %v1078
    %1144 = vmatprep.subr.mxu0 0.0
    %1145 = vmatpush1.msra.mxu0 %v1077
    %1146 = vmatprep.subr.mxu0 0.0
    %1147 = vmatpush1.msra.mxu0 %v1076
    %1148 = vmatprep.subr.mxu0 0.0
    %1149 = vmatpush1.msra.mxu0 %v1075
    %1150 = vmatprep.subr.mxu0 0.0
    %1151 = vmatpush1.msra.mxu0 %v1074
    %1152 = vmatprep.subr.mxu0 0.0
    %1153 = vmatpush1.msra.mxu0 %v1073
    %1154 = vmatprep.subr.mxu0 0.0
    %1155 = vmatpush1.msra.mxu0 %v1072
    %1156 = vmatprep.subr.mxu0 0.0
    %1157 = vmatpush1.msra.mxu0 %v1071
    %1158 = vmatprep.subr.mxu0 0.0
    %1159 = vmatpush1.msra.mxu0 %v1070
    %1160 = vmatprep.subr.mxu0 0.0
    %1161 = vmatpush1.msra.mxu0 %v1069
    %1162 = vmatprep.subr.mxu0 0.0
    %1163 = vmatpush1.msra.mxu0 %v1068
    %1164 = vmatprep.subr.mxu0 0.0
    %1165 = vmatpush2.msra.mxu0 %v1099
    %1166 = vmatprep.subr.mxu0 0.0
    %1167 = vmatpush2.msra.mxu0 %v1098
    %1168 = vmatprep.subr.mxu0 0.0
    %1169 = vmatpush2.msra.mxu0 %v1097
    %1170 = vmatprep.subr.mxu0 0.0
    %1171 = vmatpush2.msra.mxu0 %v1096
    %1172 = vmatprep.subr.mxu0 0.0
    %1173 = vmatpush2.msra.mxu0 %v1095
    %1174 = vmatprep.subr.mxu0 0.0
    %1175 = vmatpush2.msra.mxu0 %v1094
    %1176 = vmatprep.subr.mxu0 0.0
    %1177 = vmatpush2.msra.mxu0 %v1093
    %1178 = vmatprep.subr.mxu0 0.0
    %1179 = vmatpush2.msra.mxu0 %v1092
    %1180 = vmatprep.subr.mxu0 0.0
    %1181 = vmatpush2.msra.mxu0 %v1091
    %1182 = vmatprep.subr.mxu0 0.0
    %1183 = vmatpush2.msra.mxu0 %v1090
    %1184 = vmatprep.subr.mxu0 0.0
    %1185 = vmatpush2.msra.mxu0 %v1089
    %1186 = vmatprep.subr.mxu0 0.0
    %1187 = vmatpush2.msra.mxu0 %v1088
    %1188 = vmatprep.subr.mxu0 0.0
    %1189 = vmatpush2.msra.mxu0 %v1087
    %1190 = vmatprep.subr.mxu0 0.0
    %1191 = vmatpush2.msra.mxu0 %v1086
    %1192 = vmatprep.subr.mxu0 0.0
    %1193 = vmatpush2.msra.mxu0 %v1085
    %1194 = vmatprep.subr.mxu0 0.0
    %1195 = vmatpush2.msra.mxu0 %v1084
    %1196 = vmatprep.mubr.f32.mxu0 %v1061
    %1197 = vmatmul.mubr.f32.gmra.mxu0 %v1060
    %v1198 = vpop.f32.mrf.mxu0
    %v1199 = vadd.f32 0.0, %v1198
    %v1200 = vpop.f32.mrf.mxu0
    %1201 = vmatprep.mubr.f32.mxu0 %v1065
    %1202 = vmatmul.mubr.f32.gmra.mxu0 %v1064
    %v1203 = vpop.f32.mrf.mxu0
    %v1204 = vadd.f32 0.0, %v1203
    %v1205 = vpop.f32.mrf.mxu0
    %1206 = vdwg.mxu0
    %1207 = vmatprep.subr.mxu0 0.0
    %1208 = vmatpush1.msra.mxu0 %v1115
    %1209 = vmatprep.subr.mxu0 0.0
    %1210 = vmatpush1.msra.mxu0 %v1114
    %1211 = vmatprep.subr.mxu0 0.0
    %1212 = vmatpush1.msra.mxu0 %v1113
    %1213 = vmatprep.subr.mxu0 0.0
    %1214 = vmatpush1.msra.mxu0 %v1112
    %1215 = vmatprep.subr.mxu0 0.0
    %1216 = vmatpush1.msra.mxu0 %v1111
    %1217 = vmatprep.subr.mxu0 0.0
    %1218 = vmatpush1.msra.mxu0 %v1110
    %1219 = vmatprep.subr.mxu0 0.0
    %1220 = vmatpush1.msra.mxu0 %v1109
    %1221 = vmatprep.subr.mxu0 0.0
    %1222 = vmatpush1.msra.mxu0 %v1108
    %1223 = vmatprep.subr.mxu0 0.0
    %1224 = vmatpush1.msra.mxu0 %v1107
    %1225 = vmatprep.subr.mxu0 0.0
    %1226 = vmatpush1.msra.mxu0 %v1106
    %1227 = vmatprep.subr.mxu0 0.0
    %1228 = vmatpush1.msra.mxu0 %v1105
    %1229 = vmatprep.subr.mxu0 0.0
    %1230 = vmatpush1.msra.mxu0 %v1104
    %1231 = vmatprep.subr.mxu0 0.0
    %1232 = vmatpush1.msra.mxu0 %v1103
    %1233 = vmatprep.subr.mxu0 0.0
    %1234 = vmatpush1.msra.mxu0 %v1102
    %1235 = vmatprep.subr.mxu0 0.0
    %1236 = vmatpush1.msra.mxu0 %v1101
    %1237 = vmatprep.subr.mxu0 0.0
    %1238 = vmatpush1.msra.mxu0 %v1100
    %1239 = vmatprep.subr.mxu0 0.0
    %1240 = vmatpush2.msra.mxu0 %v1131
    %1241 = vmatprep.subr.mxu0 0.0
    %1242 = vmatpush2.msra.mxu0 %v1130
    %1243 = vmatprep.subr.mxu0 0.0
    %1244 = vmatpush2.msra.mxu0 %v1129
    %1245 = vmatprep.subr.mxu0 0.0
    %1246 = vmatpush2.msra.mxu0 %v1128
    %1247 = vmatprep.subr.mxu0 0.0
    %1248 = vmatpush2.msra.mxu0 %v1127
    %1249 = vmatprep.subr.mxu0 0.0
    %1250 = vmatpush2.msra.mxu0 %v1126
    %1251 = vmatprep.subr.mxu0 0.0
    %1252 = vmatpush2.msra.mxu0 %v1125
    %1253 = vmatprep.subr.mxu0 0.0
    %1254 = vmatpush2.msra.mxu0 %v1124
    %1255 = vmatprep.subr.mxu0 0.0
    %1256 = vmatpush2.msra.mxu0 %v1123
    %1257 = vmatprep.subr.mxu0 0.0
    %1258 = vmatpush2.msra.mxu0 %v1122
    %1259 = vmatprep.subr.mxu0 0.0
    %1260 = vmatpush2.msra.mxu0 %v1121
    %1261 = vmatprep.subr.mxu0 0.0
    %1262 = vmatpush2.msra.mxu0 %v1120
    %1263 = vmatprep.subr.mxu0 0.0
    %1264 = vmatpush2.msra.mxu0 %v1119
    %1265 = vmatprep.subr.mxu0 0.0
    %1266 = vmatpush2.msra.mxu0 %v1118
    %1267 = vmatprep.subr.mxu0 0.0
    %1268 = vmatpush2.msra.mxu0 %v1117
    %1269 = vmatprep.subr.mxu0 0.0
    %1270 = vmatpush2.msra.mxu0 %v1116
    %1271 = vmatprep.mubr.f32.mxu0 %v1063
    %1272 = vmatmul.mubr.f32.gmra.mxu0 %v1062
    %v1273 = vpop.f32.mrf.mxu0
    %v1274 = vadd.f32 %v1199, %v1273
    %v1275 = vpop.f32.mrf.mxu0
    %1276 = vmatprep.mubr.f32.mxu0 %v1067
    %1277 = vmatmul.mubr.f32.gmra.mxu0 %v1066
    %v1278 = vpop.f32.mrf.mxu0
    %v1279 = vadd.f32 %v1204, %v1278
    %v1280 = vpop.f32.mrf.mxu0
    %1281 = vdwg.mxu0
    %v1282 = vld [vmem:[#allocation9] sm:$0xff]
    %v1283 = vld [vmem:[#allocation9 + $0x8] sm:$0xff]
    %v1284 = vld [vmem:[#allocation9 + $0x10] sm:$0xff]
    %v1285 = vld [vmem:[#allocation9 + $0x18] sm:$0xff]
    %v1286 = vld [vmem:[#allocation9 + $0x20] sm:$0xff]
    %v1287 = vld [vmem:[#allocation9 + $0x28] sm:$0xff]
    %v1288 = vld [vmem:[#allocation9 + $0x30] sm:$0xff]
    %v1289 = vld [vmem:[#allocation9 + $0x38] sm:$0xff]
    %vm1290 = vcmask 523264
    %v1292 = vsel %vm1290, %v1274, 0
    %v1295 = vsel %vm1290, %v1279, 0
    %1297 = vmatprep.subr.mxu0 0.0
    %1298 = vmatpush1.msra.mxu0 0.0
    %1299 = vmatprep.subr.mxu0 0.0
    %1300 = vmatpush1.msra.mxu0 0.0
    %1301 = vmatprep.subr.mxu0 0.0
    %1302 = vmatpush1.msra.mxu0 0.0
    %1303 = vmatprep.subr.mxu0 0.0
    %1304 = vmatpush1.msra.mxu0 0.0
    %1305 = vmatprep.subr.mxu0 0.0
    %1306 = vmatpush1.msra.mxu0 0.0
    %1307 = vmatprep.subr.mxu0 0.0
    %1308 = vmatpush1.msra.mxu0 0.0
    %1309 = vmatprep.subr.mxu0 0.0
    %1310 = vmatpush1.msra.mxu0 0.0
    %1311 = vmatprep.subr.mxu0 0.0
    %1312 = vmatpush1.msra.mxu0 0.0
    %1313 = vmatprep.subr.mxu0 0.0
    %1314 = vmatpush1.msra.mxu0 %v1289
    %1315 = vmatprep.subr.mxu0 0.0
    %1316 = vmatpush1.msra.mxu0 %v1288
    %1317 = vmatprep.subr.mxu0 0.0
    %1318 = vmatpush1.msra.mxu0 %v1287
    %1319 = vmatprep.subr.mxu0 0.0
    %1320 = vmatpush1.msra.mxu0 %v1286
    %1321 = vmatprep.subr.mxu0 0.0
    %1322 = vmatpush1.msra.mxu0 %v1285
    %1323 = vmatprep.subr.mxu0 0.0
    %1324 = vmatpush1.msra.mxu0 %v1284
    %1325 = vmatprep.subr.mxu0 0.0
    %1326 = vmatpush1.msra.mxu0 %v1283
    %1327 = vmatprep.subr.mxu0 0.0
    %1328 = vmatpush1.msra.mxu0 %v1282
    %1329 = vmatprep.subr.mxu0 0.0
    %1330 = vmatpush2.msra.mxu0 0.0
    %1331 = vmatprep.subr.mxu0 0.0
    %1332 = vmatpush2.msra.mxu0 0.0
    %1333 = vmatprep.subr.mxu0 0.0
    %1334 = vmatpush2.msra.mxu0 0.0
    %1335 = vmatprep.subr.mxu0 0.0
    %1336 = vmatpush2.msra.mxu0 0.0
    %1337 = vmatprep.subr.mxu0 0.0
    %1338 = vmatpush2.msra.mxu0 0.0
    %1339 = vmatprep.subr.mxu0 0.0
    %1340 = vmatpush2.msra.mxu0 0.0
    %1341 = vmatprep.subr.mxu0 0.0
    %1342 = vmatpush2.msra.mxu0 0.0
    %1343 = vmatprep.subr.mxu0 0.0
    %1344 = vmatpush2.msra.mxu0 0.0
    %1345 = vmatprep.subr.mxu0 0.0
    %1346 = vmatpush2.msra.mxu0 0.0
    %1347 = vmatprep.subr.mxu0 0.0
    %1348 = vmatpush2.msra.mxu0 0.0
    %1349 = vmatprep.subr.mxu0 0.0
    %1350 = vmatpush2.msra.mxu0 0.0
    %1351 = vmatprep.subr.mxu0 0.0
    %1352 = vmatpush2.msra.mxu0 0.0
    %1353 = vmatprep.subr.mxu0 0.0
    %1354 = vmatpush2.msra.mxu0 0.0
    %1355 = vmatprep.subr.mxu0 0.0
    %1356 = vmatpush2.msra.mxu0 0.0
    %1357 = vmatprep.subr.mxu0 0.0
    %1358 = vmatpush2.msra.mxu0 0.0
    %1359 = vmatprep.subr.mxu0 0.0
    %1360 = vmatpush2.msra.mxu0 0.0
    %1361 = vmatprep.mubr.f32.mxu0 0.0
    %1362 = vmatmul.mubr.f32.gmra.mxu0 %v1292
    %v1363 = vpop.f32.mrf.mxu0
    %v1364 = vadd.f32 0.0, %v1363
    %v1365 = vpop.f32.mrf.mxu0
    %1366 = vmatprep.mubr.f32.mxu0 0.0
    %1367 = vmatmul.mubr.f32.gmra.mxu0 %v1295
    %v1368 = vpop.f32.mrf.mxu0
    %v1369 = vadd.f32 0.0, %v1368
    %v1370 = vpop.f32.mrf.mxu0
    %1371 = vdwg.mxu0
    %v1372 = vmax.f32 %v1274, %v1364
    %v1373 = vmax.f32 %v1279, %v1369
    %s1374 = scalar_lea.vmem [#allocation9], 64
    %v1375 = vld [vmem:[%s1374] sm:$0xff]
    %v1376 = vld [vmem:[%s1374 + $0x8] sm:$0xff]
    %v1377 = vld [vmem:[%s1374 + $0x10] sm:$0xff]
    %v1378 = vld [vmem:[%s1374 + $0x18] sm:$0xff]
    %v1379 = vld [vmem:[%s1374 + $0x20] sm:$0xff]
    %v1380 = vld [vmem:[%s1374 + $0x28] sm:$0xff]
    %v1381 = vld [vmem:[%s1374 + $0x30] sm:$0xff]
    %v1382 = vld [vmem:[%s1374 + $0x38] sm:$0xff]
    %v1384 = vsel %vm1290, %v1372, 0
    %v1387 = vsel %vm1290, %v1373, 0
    %1389 = vmatprep.subr.mxu0 0.0
    %1390 = vmatpush1.msra.mxu0 0.0
    %1391 = vmatprep.subr.mxu0 0.0
    %1392 = vmatpush1.msra.mxu0 0.0
    %1393 = vmatprep.subr.mxu0 0.0
    %1394 = vmatpush1.msra.mxu0 0.0
    %1395 = vmatprep.subr.mxu0 0.0
    %1396 = vmatpush1.msra.mxu0 0.0
    %1397 = vmatprep.subr.mxu0 0.0
    %1398 = vmatpush1.msra.mxu0 0.0
    %1399 = vmatprep.subr.mxu0 0.0
    %1400 = vmatpush1.msra.mxu0 0.0
    %1401 = vmatprep.subr.mxu0 0.0
    %1402 = vmatpush1.msra.mxu0 0.0
    %1403 = vmatprep.subr.mxu0 0.0
    %1404 = vmatpush1.msra.mxu0 0.0
    %1405 = vmatprep.subr.mxu0 0.0
    %1406 = vmatpush1.msra.mxu0 %v1382
    %1407 = vmatprep.subr.mxu0 0.0
    %1408 = vmatpush1.msra.mxu0 %v1381
    %1409 = vmatprep.subr.mxu0 0.0
    %1410 = vmatpush1.msra.mxu0 %v1380
    %1411 = vmatprep.subr.mxu0 0.0
    %1412 = vmatpush1.msra.mxu0 %v1379
    %1413 = vmatprep.subr.mxu0 0.0
    %1414 = vmatpush1.msra.mxu0 %v1378
    %1415 = vmatprep.subr.mxu0 0.0
    %1416 = vmatpush1.msra.mxu0 %v1377
    %1417 = vmatprep.subr.mxu0 0.0
    %1418 = vmatpush1.msra.mxu0 %v1376
    %1419 = vmatprep.subr.mxu0 0.0
    %1420 = vmatpush1.msra.mxu0 %v1375
    %1421 = vmatprep.subr.mxu0 0.0
    %1422 = vmatpush2.msra.mxu0 0.0
    %1423 = vmatprep.subr.mxu0 0.0
    %1424 = vmatpush2.msra.mxu0 0.0
    %1425 = vmatprep.subr.mxu0 0.0
    %1426 = vmatpush2.msra.mxu0 0.0
    %1427 = vmatprep.subr.mxu0 0.0
    %1428 = vmatpush2.msra.mxu0 0.0
    %1429 = vmatprep.subr.mxu0 0.0
    %1430 = vmatpush2.msra.mxu0 0.0
    %1431 = vmatprep.subr.mxu0 0.0
    %1432 = vmatpush2.msra.mxu0 0.0
    %1433 = vmatprep.subr.mxu0 0.0
    %1434 = vmatpush2.msra.mxu0 0.0
    %1435 = vmatprep.subr.mxu0 0.0
    %1436 = vmatpush2.msra.mxu0 0.0
    %1437 = vmatprep.subr.mxu0 0.0
    %1438 = vmatpush2.msra.mxu0 0.0
    %1439 = vmatprep.subr.mxu0 0.0
    %1440 = vmatpush2.msra.mxu0 0.0
    %1441 = vmatprep.subr.mxu0 0.0
    %1442 = vmatpush2.msra.mxu0 0.0
    %1443 = vmatprep.subr.mxu0 0.0
    %1444 = vmatpush2.msra.mxu0 0.0
    %1445 = vmatprep.subr.mxu0 0.0
    %1446 = vmatpush2.msra.mxu0 0.0
    %1447 = vmatprep.subr.mxu0 0.0
    %1448 = vmatpush2.msra.mxu0 0.0
    %1449 = vmatprep.subr.mxu0 0.0
    %1450 = vmatpush2.msra.mxu0 0.0
    %1451 = vmatprep.subr.mxu0 0.0
    %1452 = vmatpush2.msra.mxu0 0.0
    %1453 = vmatprep.mubr.f32.mxu0 0.0
    %1454 = vmatmul.mubr.f32.gmra.mxu0 %v1384
    %v1455 = vpop.f32.mrf.mxu0
    %v1456 = vadd.f32 0.0, %v1455
    %v1457 = vpop.f32.mrf.mxu0
    %1458 = vmatprep.mubr.f32.mxu0 0.0
    %1459 = vmatmul.mubr.f32.gmra.mxu0 %v1387
    %v1460 = vpop.f32.mrf.mxu0
    %v1461 = vadd.f32 0.0, %v1460
    %v1462 = vpop.f32.mrf.mxu0
    %1463 = vdwg.mxu0
    %v1464 = vmax.f32 %v1372, %v1456
    %v1465 = vmax.f32 %v1373, %v1461
    %v1466 = vsub.f32 %v1274, %v1464
    %v1467 = vsub.f32 %v1279, %v1465
    %v1468 = vmul.f32 %v1466, 1.442695
    %v1469 = vpow.pop %v1468
    %v1470 = vmul.f32 %v1467, 1.442695
    %v1471 = vpow.pop %v1470
    %v1472 = vld [vmem:[#allocation8] sm:$0xff]
    %v1473 = vld [vmem:[#allocation8 + $0x8] sm:$0xff]
    %v1474 = vld [vmem:[#allocation8 + $0x10] sm:$0xff]
    %v1475 = vld [vmem:[#allocation8 + $0x18] sm:$0xff]
    %v1476 = vld [vmem:[#allocation8 + $0x20] sm:$0xff]
    %v1477 = vld [vmem:[#allocation8 + $0x28] sm:$0xff]
    %v1478 = vld [vmem:[#allocation8 + $0x30] sm:$0xff]
    %v1479 = vld [vmem:[#allocation8 + $0x38] sm:$0xff]
    %v1481 = vsel %vm1290, %v1469, 0
    %v1484 = vsel %vm1290, %v1471, 0
    %1486 = vmatprep.subr.mxu0 0.0
    %1487 = vmatpush1.msra.mxu0 0.0
    %1488 = vmatprep.subr.mxu0 0.0
    %1489 = vmatpush1.msra.mxu0 0.0
    %1490 = vmatprep.subr.mxu0 0.0
    %1491 = vmatpush1.msra.mxu0 0.0
    %1492 = vmatprep.subr.mxu0 0.0
    %1493 = vmatpush1.msra.mxu0 0.0
    %1494 = vmatprep.subr.mxu0 0.0
    %1495 = vmatpush1.msra.mxu0 0.0
    %1496 = vmatprep.subr.mxu0 0.0
    %1497 = vmatpush1.msra.mxu0 0.0
    %1498 = vmatprep.subr.mxu0 0.0
    %1499 = vmatpush1.msra.mxu0 0.0
    %1500 = vmatprep.subr.mxu0 0.0
    %1501 = vmatpush1.msra.mxu0 0.0
    %1502 = vmatprep.subr.mxu0 0.0
    %1503 = vmatpush1.msra.mxu0 %v1479
    %1504 = vmatprep.subr.mxu0 0.0
    %1505 = vmatpush1.msra.mxu0 %v1478
    %1506 = vmatprep.subr.mxu0 0.0
    %1507 = vmatpush1.msra.mxu0 %v1477
    %1508 = vmatprep.subr.mxu0 0.0
    %1509 = vmatpush1.msra.mxu0 %v1476
    %1510 = vmatprep.subr.mxu0 0.0
    %1511 = vmatpush1.msra.mxu0 %v1475
    %1512 = vmatprep.subr.mxu0 0.0
    %1513 = vmatpush1.msra.mxu0 %v1474
    %1514 = vmatprep.subr.mxu0 0.0
    %1515 = vmatpush1.msra.mxu0 %v1473
    %1516 = vmatprep.subr.mxu0 0.0
    %1517 = vmatpush1.msra.mxu0 %v1472
    %1518 = vmatprep.subr.mxu0 0.0
    %1519 = vmatpush2.msra.mxu0 0.0
    %1520 = vmatprep.subr.mxu0 0.0
    %1521 = vmatpush2.msra.mxu0 0.0
    %1522 = vmatprep.subr.mxu0 0.0
    %1523 = vmatpush2.msra.mxu0 0.0
    %1524 = vmatprep.subr.mxu0 0.0
    %1525 = vmatpush2.msra.mxu0 0.0
    %1526 = vmatprep.subr.mxu0 0.0
    %1527 = vmatpush2.msra.mxu0 0.0
    %1528 = vmatprep.subr.mxu0 0.0
    %1529 = vmatpush2.msra.mxu0 0.0
    %1530 = vmatprep.subr.mxu0 0.0
    %1531 = vmatpush2.msra.mxu0 0.0
    %1532 = vmatprep.subr.mxu0 0.0
    %1533 = vmatpush2.msra.mxu0 0.0
    %1534 = vmatprep.subr.mxu0 0.0
    %1535 = vmatpush2.msra.mxu0 0.0
    %1536 = vmatprep.subr.mxu0 0.0
    %1537 = vmatpush2.msra.mxu0 0.0
    %1538 = vmatprep.subr.mxu0 0.0
    %1539 = vmatpush2.msra.mxu0 0.0
    %1540 = vmatprep.subr.mxu0 0.0
    %1541 = vmatpush2.msra.mxu0 0.0
    %1542 = vmatprep.subr.mxu0 0.0
    %1543 = vmatpush2.msra.mxu0 0.0
    %1544 = vmatprep.subr.mxu0 0.0
    %1545 = vmatpush2.msra.mxu0 0.0
    %1546 = vmatprep.subr.mxu0 0.0
    %1547 = vmatpush2.msra.mxu0 0.0
    %1548 = vmatprep.subr.mxu0 0.0
    %1549 = vmatpush2.msra.mxu0 0.0
    %1550 = vmatprep.mubr.f32.mxu0 0.0
    %1551 = vmatmul.mubr.f32.gmra.mxu0 %v1481
    %v1552 = vpop.f32.mrf.mxu0
    %v1553 = vadd.f32 0.0, %v1552
    %v1554 = vpop.f32.mrf.mxu0
    %1555 = vmatprep.mubr.f32.mxu0 0.0
    %1556 = vmatmul.mubr.f32.gmra.mxu0 %v1484
    %v1557 = vpop.f32.mrf.mxu0
    %v1558 = vadd.f32 0.0, %v1557
    %v1559 = vpop.f32.mrf.mxu0
    %1560 = vdwg.mxu0
    %v1561 = vrcp.pop %v1553
    %v1562 = vrcp.pop %v1558
    %v1563 = vmul.f32 %v1469, %v1561
    %v1564 = vmul.f32 %v1471, %v1562
    %v1565 = vld [vmem:[#allocation11] sm:$0xff]
    %v1566 = vld [vmem:[#allocation11 + $0x8] sm:$0xff]
    %v1567 = vld [vmem:[#allocation11 + $0x10] sm:$0xff]
    %v1568 = vld [vmem:[#allocation11 + $0x18] sm:$0xff]
    %v1569 = vld [vmem:[#allocation11 + $0x20] sm:$0xff]
    %v1570 = vld [vmem:[#allocation11 + $0x28] sm:$0xff]
    %v1571 = vld [vmem:[#allocation11 + $0x30] sm:$0xff]
    %v1572 = vld [vmem:[#allocation11 + $0x38] sm:$0xff]
    %v1573 = vld [vmem:[#allocation11 + $0x40] sm:$0xff]
    %v1574 = vld [vmem:[#allocation11 + $0x48] sm:$0xff]
    %v1575 = vld [vmem:[#allocation11 + $0x50] sm:$0xff]
    %v1576 = vld [vmem:[#allocation11 + $0x58] sm:$0xff]
    %v1577 = vld [vmem:[#allocation11 + $0x60] sm:$0xff]
    %v1578 = vld [vmem:[#allocation11 + $0x68] sm:$0xff]
    %v1579 = vld [vmem:[#allocation11 + $0x70] sm:$0xff]
    %v1580 = vld [vmem:[#allocation11 + $0x78] sm:$0xff]
    %v1581 = vld [vmem:[#allocation11 + $0x80] sm:$0xff]
    %v1582 = vld [vmem:[#allocation11 + $0x88] sm:$0xff]
    %v1583 = vld [vmem:[#allocation11 + $0x90] sm:$0xff]
    %v1584 = vld [vmem:[#allocation11 + $0x98] sm:$0xff]
    %v1585 = vld [vmem:[#allocation11 + $0xa0] sm:$0xff]
    %v1586 = vld [vmem:[#allocation11 + $0xa8] sm:$0xff]
    %v1587 = vld [vmem:[#allocation11 + $0xb0] sm:$0xff]
    %v1588 = vld [vmem:[#allocation11 + $0xb8] sm:$0xff]
    %v1589 = vld [vmem:[#allocation11 + $0xc0] sm:$0xff]
    %v1590 = vld [vmem:[#allocation11 + $0xc8] sm:$0xff]
    %v1591 = vld [vmem:[#allocation11 + $0xd0] sm:$0xff]
    %v1592 = vld [vmem:[#allocation11 + $0xd8] sm:$0xff]
    %v1593 = vld [vmem:[#allocation11 + $0xe0] sm:$0xff]
    %v1594 = vld [vmem:[#allocation11 + $0xe8] sm:$0xff]
    %v1595 = vld [vmem:[#allocation11 + $0xf0] sm:$0xff]
    %v1596 = vld [vmem:[#allocation11 + $0xf8] sm:$0xff]
    %v1598 = vsel %vm1290, %v1563, 0
    %v1601 = vsel %vm1290, %v1564, 0
    %1603 = vmatprep.subr.mxu0 0.0
    %1604 = vmatpush1.msra.mxu0 0.0
    %1605 = vmatprep.subr.mxu0 0.0
    %1606 = vmatpush1.msra.mxu0 0.0
    %1607 = vmatprep.subr.mxu0 0.0
    %1608 = vmatpush1.msra.mxu0 0.0
    %1609 = vmatprep.subr.mxu0 0.0
    %1610 = vmatpush1.msra.mxu0 0.0
    %1611 = vmatprep.subr.mxu0 0.0
    %1612 = vmatpush1.msra.mxu0 0.0
    %1613 = vmatprep.subr.mxu0 0.0
    %1614 = vmatpush1.msra.mxu0 0.0
    %1615 = vmatprep.subr.mxu0 0.0
    %1616 = vmatpush1.msra.mxu0 0.0
    %1617 = vmatprep.subr.mxu0 0.0
    %1618 = vmatpush1.msra.mxu0 0.0
    %1619 = vmatprep.subr.mxu0 %v1594
    %1620 = vmatpush1.msra.mxu0 %v1593
    %1621 = vmatprep.subr.mxu0 %v1590
    %1622 = vmatpush1.msra.mxu0 %v1589
    %1623 = vmatprep.subr.mxu0 %v1586
    %1624 = vmatpush1.msra.mxu0 %v1585
    %1625 = vmatprep.subr.mxu0 %v1582
    %1626 = vmatpush1.msra.mxu0 %v1581
    %1627 = vmatprep.subr.mxu0 %v1578
    %1628 = vmatpush1.msra.mxu0 %v1577
    %1629 = vmatprep.subr.mxu0 %v1574
    %1630 = vmatpush1.msra.mxu0 %v1573
    %1631 = vmatprep.subr.mxu0 %v1570
    %1632 = vmatpush1.msra.mxu0 %v1569
    %1633 = vmatprep.subr.mxu0 %v1566
    %1634 = vmatpush1.msra.mxu0 %v1565
    %1635 = vmatprep.subr.mxu0 0.0
    %1636 = vmatpush2.msra.mxu0 0.0
    %1637 = vmatprep.subr.mxu0 0.0
    %1638 = vmatpush2.msra.mxu0 0.0
    %1639 = vmatprep.subr.mxu0 0.0
    %1640 = vmatpush2.msra.mxu0 0.0
    %1641 = vmatprep.subr.mxu0 0.0
    %1642 = vmatpush2.msra.mxu0 0.0
    %1643 = vmatprep.subr.mxu0 0.0
    %1644 = vmatpush2.msra.mxu0 0.0
    %1645 = vmatprep.subr.mxu0 0.0
    %1646 = vmatpush2.msra.mxu0 0.0
    %1647 = vmatprep.subr.mxu0 0.0
    %1648 = vmatpush2.msra.mxu0 0.0
    %1649 = vmatprep.subr.mxu0 0.0
    %1650 = vmatpush2.msra.mxu0 0.0
    %1651 = vmatprep.subr.mxu0 0.0
    %1652 = vmatpush2.msra.mxu0 0.0
    %1653 = vmatprep.subr.mxu0 0.0
    %1654 = vmatpush2.msra.mxu0 0.0
    %1655 = vmatprep.subr.mxu0 0.0
    %1656 = vmatpush2.msra.mxu0 0.0
    %1657 = vmatprep.subr.mxu0 0.0
    %1658 = vmatpush2.msra.mxu0 0.0
    %1659 = vmatprep.subr.mxu0 0.0
    %1660 = vmatpush2.msra.mxu0 0.0
    %1661 = vmatprep.subr.mxu0 0.0
    %1662 = vmatpush2.msra.mxu0 0.0
    %1663 = vmatprep.subr.mxu0 0.0
    %1664 = vmatpush2.msra.mxu0 0.0
    %1665 = vmatprep.subr.mxu0 0.0
    %1666 = vmatpush2.msra.mxu0 0.0
    %1667 = vmatprep.mubr.f32.mxu0 0.0
    %1668 = vmatmul.mubr.f32.gmra.mxu0 %v1598
    %v1669 = vpop.f32.mrf.mxu0
    %v1670 = vadd.f32 0.0, %v1669
    %v1671 = vpop.f32.mrf.mxu0
    %v1672 = vadd.f32 0.0, %v1671
    %1673 = vmatprep.mubr.f32.mxu0 0.0
    %1674 = vmatmul.mubr.f32.gmra.mxu0 %v1601
    %v1675 = vpop.f32.mrf.mxu0
    %v1676 = vadd.f32 0.0, %v1675
    %v1677 = vpop.f32.mrf.mxu0
    %v1678 = vadd.f32 0.0, %v1677
    %1679 = vdwg.mxu0
    %1680 = vmatprep.subr.mxu0 0.0
    %1681 = vmatpush1.msra.mxu0 0.0
    %1682 = vmatprep.subr.mxu0 0.0
    %1683 = vmatpush1.msra.mxu0 0.0
    %1684 = vmatprep.subr.mxu0 0.0
    %1685 = vmatpush1.msra.mxu0 0.0
    %1686 = vmatprep.subr.mxu0 0.0
    %1687 = vmatpush1.msra.mxu0 0.0
    %1688 = vmatprep.subr.mxu0 0.0
    %1689 = vmatpush1.msra.mxu0 0.0
    %1690 = vmatprep.subr.mxu0 0.0
    %1691 = vmatpush1.msra.mxu0 0.0
    %1692 = vmatprep.subr.mxu0 0.0
    %1693 = vmatpush1.msra.mxu0 0.0
    %1694 = vmatprep.subr.mxu0 0.0
    %1695 = vmatpush1.msra.mxu0 0.0
    %1696 = vmatprep.subr.mxu0 %v1596
    %1697 = vmatpush1.msra.mxu0 %v1595
    %1698 = vmatprep.subr.mxu0 %v1592
    %1699 = vmatpush1.msra.mxu0 %v1591
    %1700 = vmatprep.subr.mxu0 %v1588
    %1701 = vmatpush1.msra.mxu0 %v1587
    %1702 = vmatprep.subr.mxu0 %v1584
    %1703 = vmatpush1.msra.mxu0 %v1583
    %1704 = vmatprep.subr.mxu0 %v1580
    %1705 = vmatpush1.msra.mxu0 %v1579
    %1706 = vmatprep.subr.mxu0 %v1576
    %1707 = vmatpush1.msra.mxu0 %v1575
    %1708 = vmatprep.subr.mxu0 %v1572
    %1709 = vmatpush1.msra.mxu0 %v1571
    %1710 = vmatprep.subr.mxu0 %v1568
    %1711 = vmatpush1.msra.mxu0 %v1567
    %1712 = vmatprep.subr.mxu0 0.0
    %1713 = vmatpush2.msra.mxu0 0.0
    %1714 = vmatprep.subr.mxu0 0.0
    %1715 = vmatpush2.msra.mxu0 0.0
    %1716 = vmatprep.subr.mxu0 0.0
    %1717 = vmatpush2.msra.mxu0 0.0
    %1718 = vmatprep.subr.mxu0 0.0
    %1719 = vmatpush2.msra.mxu0 0.0
    %1720 = vmatprep.subr.mxu0 0.0
    %1721 = vmatpush2.msra.mxu0 0.0
    %1722 = vmatprep.subr.mxu0 0.0
    %1723 = vmatpush2.msra.mxu0 0.0
    %1724 = vmatprep.subr.mxu0 0.0
    %1725 = vmatpush2.msra.mxu0 0.0
    %1726 = vmatprep.subr.mxu0 0.0
    %1727 = vmatpush2.msra.mxu0 0.0
    %1728 = vmatprep.subr.mxu0 0.0
    %1729 = vmatpush2.msra.mxu0 0.0
    %1730 = vmatprep.subr.mxu0 0.0
    %1731 = vmatpush2.msra.mxu0 0.0
    %1732 = vmatprep.subr.mxu0 0.0
    %1733 = vmatpush2.msra.mxu0 0.0
    %1734 = vmatprep.subr.mxu0 0.0
    %1735 = vmatpush2.msra.mxu0 0.0
    %1736 = vmatprep.subr.mxu0 0.0
    %1737 = vmatpush2.msra.mxu0 0.0
    %1738 = vmatprep.subr.mxu0 0.0
    %1739 = vmatpush2.msra.mxu0 0.0
    %1740 = vmatprep.subr.mxu0 0.0
    %1741 = vmatpush2.msra.mxu0 0.0
    %1742 = vmatprep.subr.mxu0 0.0
    %1743 = vmatpush2.msra.mxu0 0.0
    %1744 = vmatprep.mubr.f32.mxu0 0.0
    %1745 = vmatmul.mubr.f32.gmra.mxu0 %v1598
    %v1746 = vpop.f32.mrf.mxu0
    %v1747 = vadd.f32 0.0, %v1746
    %v1748 = vpop.f32.mrf.mxu0
    %v1749 = vadd.f32 0.0, %v1748
    %1750 = vmatprep.mubr.f32.mxu0 0.0
    %1751 = vmatmul.mubr.f32.gmra.mxu0 %v1601
    %v1752 = vpop.f32.mrf.mxu0
    %v1753 = vadd.f32 0.0, %v1752
    %v1754 = vpop.f32.mrf.mxu0
    %v1755 = vadd.f32 0.0, %v1754
    %1756 = vdwg.mxu0
    %v1757 = vld [vmem:[#allocation2 + $0x40] sm:$0xff]
    %v1758 = vld [vmem:[#allocation2 + $0x48] sm:$0xff]
    %v1759 = vld [vmem:[#allocation2 + $0x50] sm:$0xff]
    %v1760 = vld [vmem:[#allocation2 + $0x58] sm:$0xff]
    %v1761 = vld [vmem:[#allocation2 + $0xa0] sm:$0xff]
    %v1762 = vld [vmem:[#allocation2 + $0xa8] sm:$0xff]
    %v1763 = vld [vmem:[#allocation2 + $0xb0] sm:$0xff]
    %v1764 = vld [vmem:[#allocation2 + $0xb8] sm:$0xff]
    %v1765 = vmul.f32 %v1670, %v1757
    %v1766 = vmul.f32 %v1672, %v1758
    %v1767 = vmul.f32 %v1747, %v1759
    %v1768 = vmul.f32 %v1749, %v1760
    %v1769 = vmul.f32 %v1676, %v1761
    %v1770 = vmul.f32 %v1678, %v1762
    %v1771 = vmul.f32 %v1753, %v1763
    %v1772 = vmul.f32 %v1755, %v1764
    %v1773 = vpack.c.bf16 %v1769, %v1765
    %v1774 = vpack.c.bf16 %v1770, %v1766
    %v1775 = vpack.c.bf16 %v1771, %v1767
    %v1776 = vpack.c.bf16 %v1772, %v1768
    %v1777 = vld [vmem:[#allocation12] sm:$0xf]
    %v1778 = vld [vmem:[#allocation12 + $0x4] sm:$0xf]
    %v1779 = vld [vmem:[#allocation12 + $0x8] sm:$0xf]
    %v1780 = vld [vmem:[#allocation12 + $0xc] sm:$0xf]
    %v1781 = vld [vmem:[#allocation12 + $0x10] sm:$0xf]
    %v1782 = vld [vmem:[#allocation12 + $0x14] sm:$0xf]
    %v1783 = vld [vmem:[#allocation12 + $0x18] sm:$0xf]
    %v1784 = vld [vmem:[#allocation12 + $0x1c] sm:$0xf]
    %v1785 = vld [vmem:[#allocation12 + $0x20] sm:$0xf]
    %v1786 = vld [vmem:[#allocation12 + $0x24] sm:$0xf]
    %v1787 = vld [vmem:[#allocation12 + $0x28] sm:$0xf]
    %v1788 = vld [vmem:[#allocation12 + $0x2c] sm:$0xf]
    %v1789 = vld [vmem:[#allocation12 + $0x30] sm:$0xf]
    %v1790 = vld [vmem:[#allocation12 + $0x34] sm:$0xf]
    %v1791 = vld [vmem:[#allocation12 + $0x38] sm:$0xf]
    %v1792 = vld [vmem:[#allocation12 + $0x3c] sm:$0xf]
    %v1793 = vld [vmem:[#allocation12 + $0x40] sm:$0xf]
    %v1794 = vld [vmem:[#allocation12 + $0x44] sm:$0xf]
    %v1795 = vld [vmem:[#allocation12 + $0x48] sm:$0xf]
    %v1796 = vld [vmem:[#allocation12 + $0x4c] sm:$0xf]
    %v1797 = vld [vmem:[#allocation12 + $0x50] sm:$0xf]
    %v1798 = vld [vmem:[#allocation12 + $0x54] sm:$0xf]
    %v1799 = vld [vmem:[#allocation12 + $0x58] sm:$0xf]
    %v1800 = vld [vmem:[#allocation12 + $0x5c] sm:$0xf]
    %v1801 = vld [vmem:[#allocation12 + $0x60] sm:$0xf]
    %v1802 = vld [vmem:[#allocation12 + $0x64] sm:$0xf]
    %v1803 = vld [vmem:[#allocation12 + $0x68] sm:$0xf]
    %v1804 = vld [vmem:[#allocation12 + $0x6c] sm:$0xf]
    %v1805 = vld [vmem:[#allocation12 + $0x70] sm:$0xf]
    %v1806 = vld [vmem:[#allocation12 + $0x74] sm:$0xf]
    %v1807 = vld [vmem:[#allocation12 + $0x78] sm:$0xf]
    %v1808 = vld [vmem:[#allocation12 + $0x7c] sm:$0xf]
    %v1809 = vld [vmem:[#allocation12 + $0x80] sm:$0xf]
    %v1810 = vld [vmem:[#allocation12 + $0x84] sm:$0xf]
    %v1811 = vld [vmem:[#allocation12 + $0x88] sm:$0xf]
    %v1812 = vld [vmem:[#allocation12 + $0x8c] sm:$0xf]
    %v1813 = vld [vmem:[#allocation12 + $0x90] sm:$0xf]
    %v1814 = vld [vmem:[#allocation12 + $0x94] sm:$0xf]
    %v1815 = vld [vmem:[#allocation12 + $0x98] sm:$0xf]
    %v1816 = vld [vmem:[#allocation12 + $0x9c] sm:$0xf]
    %v1817 = vld [vmem:[#allocation12 + $0xa0] sm:$0xf]
    %v1818 = vld [vmem:[#allocation12 + $0xa4] sm:$0xf]
    %v1819 = vld [vmem:[#allocation12 + $0xa8] sm:$0xf]
    %v1820 = vld [vmem:[#allocation12 + $0xac] sm:$0xf]
    %v1821 = vld [vmem:[#allocation12 + $0xb0] sm:$0xf]
    %v1822 = vld [vmem:[#allocation12 + $0xb4] sm:$0xf]
    %v1823 = vld [vmem:[#allocation12 + $0xb8] sm:$0xf]
    %v1824 = vld [vmem:[#allocation12 + $0xbc] sm:$0xf]
    %v1825 = vld [vmem:[#allocation12 + $0xc0] sm:$0xf]
    %v1826 = vld [vmem:[#allocation12 + $0xc4] sm:$0xf]
    %v1827 = vld [vmem:[#allocation12 + $0xc8] sm:$0xf]
    %v1828 = vld [vmem:[#allocation12 + $0xcc] sm:$0xf]
    %v1829 = vld [vmem:[#allocation12 + $0xd0] sm:$0xf]
    %v1830 = vld [vmem:[#allocation12 + $0xd4] sm:$0xf]
    %v1831 = vld [vmem:[#allocation12 + $0xd8] sm:$0xf]
    %v1832 = vld [vmem:[#allocation12 + $0xdc] sm:$0xf]
    %v1833 = vld [vmem:[#allocation12 + $0xe0] sm:$0xf]
    %v1834 = vld [vmem:[#allocation12 + $0xe4] sm:$0xf]
    %v1835 = vld [vmem:[#allocation12 + $0xe8] sm:$0xf]
    %v1836 = vld [vmem:[#allocation12 + $0xec] sm:$0xf]
    %v1837 = vld [vmem:[#allocation12 + $0xf0] sm:$0xf]
    %v1838 = vld [vmem:[#allocation12 + $0xf4] sm:$0xf]
    %v1839 = vld [vmem:[#allocation12 + $0xf8] sm:$0xf]
    %v1840 = vld [vmem:[#allocation12 + $0xfc] sm:$0xf]
    %v1841 = vld [vmem:[%s8] sm:$0x1]
    %v1843 = vlaneseq
    %v1844 = vshrl.u32 %v1843, 7
    %v1845 = vsub.s32 0, %v1844
    %v1846 = vrot.slane %v1841, %v1845
    %v1912 = vunpack.c.l.b16 %v1777
    %v1913 = vunpack.c.l.b16 %v1778
    %v1914 = vunpack.c.l.b16 %v1779
    %v1915 = vunpack.c.l.b16 %v1780
    %v1916 = vunpack.c.l.b16 %v1781
    %v1917 = vunpack.c.l.b16 %v1782
    %v1918 = vunpack.c.l.b16 %v1783
    %v1919 = vunpack.c.l.b16 %v1784
    %v1920 = vunpack.c.l.b16 %v1785
    %v1921 = vunpack.c.l.b16 %v1786
    %v1922 = vunpack.c.l.b16 %v1787
    %v1923 = vunpack.c.l.b16 %v1788
    %v1924 = vunpack.c.l.b16 %v1789
    %v1925 = vunpack.c.l.b16 %v1790
    %v1926 = vunpack.c.l.b16 %v1791
    %v1927 = vunpack.c.l.b16 %v1792
    %v1928 = vunpack.c.l.b16 %v1793
    %v1929 = vunpack.c.l.b16 %v1794
    %v1930 = vunpack.c.l.b16 %v1795
    %v1931 = vunpack.c.l.b16 %v1796
    %v1932 = vunpack.c.l.b16 %v1797
    %v1933 = vunpack.c.l.b16 %v1798
    %v1934 = vunpack.c.l.b16 %v1799
    %v1935 = vunpack.c.l.b16 %v1800
    %v1936 = vunpack.c.l.b16 %v1801
    %v1937 = vunpack.c.l.b16 %v1802
    %v1938 = vunpack.c.l.b16 %v1803
    %v1939 = vunpack.c.l.b16 %v1804
    %v1940 = vunpack.c.l.b16 %v1805
    %v1941 = vunpack.c.l.b16 %v1806
    %v1942 = vunpack.c.l.b16 %v1807
    %v1943 = vunpack.c.l.b16 %v1808
    %v1944 = vunpack.c.l.b16 %v1809
    %v1945 = vunpack.c.l.b16 %v1810
    %v1946 = vunpack.c.l.b16 %v1811
    %v1947 = vunpack.c.l.b16 %v1812
    %v1948 = vunpack.c.l.b16 %v1813
    %v1949 = vunpack.c.l.b16 %v1814
    %v1950 = vunpack.c.l.b16 %v1815
    %v1951 = vunpack.c.l.b16 %v1816
    %v1952 = vunpack.c.l.b16 %v1817
    %v1953 = vunpack.c.l.b16 %v1818
    %v1954 = vunpack.c.l.b16 %v1819
    %v1955 = vunpack.c.l.b16 %v1820
    %v1956 = vunpack.c.l.b16 %v1821
    %v1957 = vunpack.c.l.b16 %v1822
    %v1958 = vunpack.c.l.b16 %v1823
    %v1959 = vunpack.c.l.b16 %v1824
    %v1960 = vunpack.c.l.b16 %v1825
    %v1961 = vunpack.c.l.b16 %v1826
    %v1962 = vunpack.c.l.b16 %v1827
    %v1963 = vunpack.c.l.b16 %v1828
    %v1964 = vunpack.c.l.b16 %v1829
    %v1965 = vunpack.c.l.b16 %v1830
    %v1966 = vunpack.c.l.b16 %v1831
    %v1967 = vunpack.c.l.b16 %v1832
    %v1968 = vunpack.c.l.b16 %v1833
    %v1969 = vunpack.c.l.b16 %v1834
    %v1970 = vunpack.c.l.b16 %v1835
    %v1971 = vunpack.c.l.b16 %v1836
    %v1972 = vunpack.c.l.b16 %v1837
    %v1973 = vunpack.c.l.b16 %v1838
    %v1974 = vunpack.c.l.b16 %v1839
    %v1975 = vunpack.c.l.b16 %v1840
    %v1976 = vpack.c.b16 %v1913, %v1912
    %v1977 = vpack.c.b16 %v1915, %v1914
    %v1978 = vpack.c.b16 %v1917, %v1916
    %v1979 = vpack.c.b16 %v1919, %v1918
    %v1980 = vpack.c.b16 %v1921, %v1920
    %v1981 = vpack.c.b16 %v1923, %v1922
    %v1982 = vpack.c.b16 %v1925, %v1924
    %v1983 = vpack.c.b16 %v1927, %v1926
    %v1984 = vpack.c.b16 %v1929, %v1928
    %v1985 = vpack.c.b16 %v1931, %v1930
    %v1986 = vpack.c.b16 %v1933, %v1932
    %v1987 = vpack.c.b16 %v1935, %v1934
    %v1988 = vpack.c.b16 %v1937, %v1936
    %v1989 = vpack.c.b16 %v1939, %v1938
    %v1990 = vpack.c.b16 %v1941, %v1940
    %v1991 = vpack.c.b16 %v1943, %v1942
    %v1992 = vpack.c.b16 %v1945, %v1944
    %v1993 = vpack.c.b16 %v1947, %v1946
    %v1994 = vpack.c.b16 %v1949, %v1948
    %v1995 = vpack.c.b16 %v1951, %v1950
    %v1996 = vpack.c.b16 %v1953, %v1952
    %v1997 = vpack.c.b16 %v1955, %v1954
    %v1998 = vpack.c.b16 %v1957, %v1956
    %v1999 = vpack.c.b16 %v1959, %v1958
    %v2000 = vpack.c.b16 %v1961, %v1960
    %v2001 = vpack.c.b16 %v1963, %v1962
    %v2002 = vpack.c.b16 %v1965, %v1964
    %v2003 = vpack.c.b16 %v1967, %v1966
    %v2004 = vpack.c.b16 %v1969, %v1968
    %v2005 = vpack.c.b16 %v1971, %v1970
    %v2006 = vpack.c.b16 %v1973, %v1972
    %v2007 = vpack.c.b16 %v1975, %v1974
    %2040 = vmatprep.subr.bf16.mxu0 0
    %2041 = vmatpush1.bf16.msra.mxu0 %v1983
    %2042 = vmatprep.subr.bf16.mxu0 0
    %2043 = vmatpush1.bf16.msra.mxu0 %v1982
    %2044 = vmatprep.subr.bf16.mxu0 0
    %2045 = vmatpush1.bf16.msra.mxu0 %v1981
    %2046 = vmatprep.subr.bf16.mxu0 0
    %2047 = vmatpush1.bf16.msra.mxu0 %v1980
    %2048 = vmatprep.subr.bf16.mxu0 0
    %2049 = vmatpush1.bf16.msra.mxu0 %v1979
    %2050 = vmatprep.subr.bf16.mxu0 0
    %2051 = vmatpush1.bf16.msra.mxu0 %v1978
    %2052 = vmatprep.subr.bf16.mxu0 0
    %2053 = vmatpush1.bf16.msra.mxu0 %v1977
    %2054 = vmatprep.subr.bf16.mxu0 0
    %2055 = vmatpush1.bf16.msra.mxu0 %v1976
    %2056 = vmatprep.subr.bf16.mxu0 0
    %2057 = vmatpush2.bf16.msra.mxu0 %v1991
    %2058 = vmatprep.subr.bf16.mxu0 0
    %2059 = vmatpush2.bf16.msra.mxu0 %v1990
    %2060 = vmatprep.subr.bf16.mxu0 0
    %2061 = vmatpush2.bf16.msra.mxu0 %v1989
    %2062 = vmatprep.subr.bf16.mxu0 0
    %2063 = vmatpush2.bf16.msra.mxu0 %v1988
    %2064 = vmatprep.subr.bf16.mxu0 0
    %2065 = vmatpush2.bf16.msra.mxu0 %v1987
    %2066 = vmatprep.subr.bf16.mxu0 0
    %2067 = vmatpush2.bf16.msra.mxu0 %v1986
    %2068 = vmatprep.subr.bf16.mxu0 0
    %2069 = vmatpush2.bf16.msra.mxu0 %v1985
    %2070 = vmatprep.subr.bf16.mxu0 0
    %2071 = vmatpush2.bf16.msra.mxu0 %v1984
    %2072 = vmatprep.mubr.bf16.mxu0 %v1774
    %2073 = vmatmul.mubr.bf16.gmra.mxu0 %v1773
    %v2074 = vpop.f32.mrf.mxu0
    %v2075 = vadd.f32 %v1846, %v2074
    %v2076 = vpop.f32.mrf.mxu0
    %v2077 = vpop.f32.mrf.mxu0
    %v2078 = vadd.f32 %v1846, %v2077
    %v2079 = vpop.f32.mrf.mxu0
    %2080 = vdwg.mxu0
    %2081 = vmatprep.subr.bf16.mxu0 0
    %2082 = vmatpush1.bf16.msra.mxu0 %v1999
    %2083 = vmatprep.subr.bf16.mxu0 0
    %2084 = vmatpush1.bf16.msra.mxu0 %v1998
    %2085 = vmatprep.subr.bf16.mxu0 0
    %2086 = vmatpush1.bf16.msra.mxu0 %v1997
    %2087 = vmatprep.subr.bf16.mxu0 0
    %2088 = vmatpush1.bf16.msra.mxu0 %v1996
    %2089 = vmatprep.subr.bf16.mxu0 0
    %2090 = vmatpush1.bf16.msra.mxu0 %v1995
    %2091 = vmatprep.subr.bf16.mxu0 0
    %2092 = vmatpush1.bf16.msra.mxu0 %v1994
    %2093 = vmatprep.subr.bf16.mxu0 0
    %2094 = vmatpush1.bf16.msra.mxu0 %v1993
    %2095 = vmatprep.subr.bf16.mxu0 0
    %2096 = vmatpush1.bf16.msra.mxu0 %v1992
    %2097 = vmatprep.subr.bf16.mxu0 0
    %2098 = vmatpush2.bf16.msra.mxu0 %v2007
    %2099 = vmatprep.subr.bf16.mxu0 0
    %2100 = vmatpush2.bf16.msra.mxu0 %v2006
    %2101 = vmatprep.subr.bf16.mxu0 0
    %2102 = vmatpush2.bf16.msra.mxu0 %v2005
    %2103 = vmatprep.subr.bf16.mxu0 0
    %2104 = vmatpush2.bf16.msra.mxu0 %v2004
    %2105 = vmatprep.subr.bf16.mxu0 0
    %2106 = vmatpush2.bf16.msra.mxu0 %v2003
    %2107 = vmatprep.subr.bf16.mxu0 0
    %2108 = vmatpush2.bf16.msra.mxu0 %v2002
    %2109 = vmatprep.subr.bf16.mxu0 0
    %2110 = vmatpush2.bf16.msra.mxu0 %v2001
    %2111 = vmatprep.subr.bf16.mxu0 0
    %2112 = vmatpush2.bf16.msra.mxu0 %v2000
    %2113 = vmatprep.mubr.bf16.mxu0 %v1776
    %2114 = vmatmul.mubr.bf16.gmra.mxu0 %v1775
    %v2115 = vpop.f32.mrf.mxu0
    %v2116 = vadd.f32 %v2075, %v2115
    %v2117 = vpop.f32.mrf.mxu0
    %v2118 = vpop.f32.mrf.mxu0
    %v2119 = vadd.f32 %v2078, %v2118
    %v2120 = vpop.f32.mrf.mxu0
    %2121 = vdwg.mxu0
    %2122 = vst [vmem:[#allocation14] sm:$0xff] %v2116
    %2123 = vst [vmem:[#allocation14 + $0x8] sm:$0xff] %v2119
    // Predicated region
    $region62: #{tpu_custom_call.1} parent=1 // pred_check
      _
    $region63: #{tpu_custom_call.1} parent=1 // pred_check_branch
      %2125 = sbr.rel (0) target = $region65
    $region64: #{tpu_custom_call.1} parent=1 // pred_region
      %s2127 = ssub.s32 256, 256
      %2128 = vsyncadd [#allocation5], %s2127
      %s2129 = sshll.u32 [#allocation14], 4
      %s2130 = int_to_ptr.vmem [resolvable:$true] %s2129
      %2135 = dma.vmem_to_hbm [thread:$0]  %s2130, 256, %s9, [#allocation5], 128, 128, 8
    $region65: #{tpu_custom_call.1} parent=1 // pred_fallthru
      _
    // Predicated region
    $region66: #{tpu_custom_call.1} parent=1 // pred_check
      _
    $region67: #{tpu_custom_call.1} parent=1 // pred_check_branch
      %2137 = sbr.rel (0) target = $region69
    $region68: #{tpu_custom_call.1} parent=1 // pred_region
      %2138 = dma.done [#allocation5], 256
    $region69: #{tpu_custom_call.1} parent=1 // pred_fallthru
      _
    %2139 = vsyncpa [#allocation4], 1
    %2140 = vsyncpa [#allocation7], 1
    %2141 = vsyncpa [#allocation10], 1
    %2142 = vsyncpa [#allocation13], 1
    %2143 = vsyncpa [#allocation5], 1

// kernel: tpu_custom_call.1
$region0: #{tpu_custom_call.1}
  #allocation0 [shape = 'u32[]', space=smem, size = 0x4, offset = 0x4, fixed_abs, tag = 'smem constant byte address 0x4 - core index']
  #allocation1 [shape = 'u32[144,128]{1,0:T(1,128)}', space=vmem, size = 0x12000, scoped, tag = 'internal scratch']
  #allocation2 [shape = 'f32[16,1536]{1,0:T(8,128)}', space=vmem, size = 0x18000, scoped, tag = 'scratch operand']
  %s0 = inlined_call_operand.hbm [shape: bf16[16,128], index: 0, kind: input, shape index: {}]
  %s1 = inlined_call_operand.vmem [shape: bf16[128,1536], index: 1, kind: input, shape index: {}]
  %s2 = inlined_call_operand.hbm [shape: f32[1,1536], index: 2, kind: input, shape index: {}]
  %s3 = inlined_call_operand.vmem [shape: f32[512,64], index: 3, kind: input, shape index: {}]
  %s4 = inlined_call_operand.hbm [shape: f32[64,64], index: 4, kind: input, shape index: {}]
  %s5 = inlined_call_operand.hbm [shape: f32[2,64,64], index: 5, kind: input, shape index: {}]
  %s6 = inlined_call_operand.hbm [shape: f32[64,512], index: 6, kind: input, shape index: {}]
  %s7 = inlined_call_operand.hbm [shape: bf16[512,128], index: 7, kind: input, shape index: {}]
  %s8 = inlined_call_operand.vmem [shape: f32[1,128], index: 8, kind: input, shape index: {}]
  %s9 = inlined_call_operand.hbm [shape: f32[16,128], index: 9, kind: output, shape index: {}]
  %s10 = sld [smem:[#allocation0]]
  $region70: #{tpu_custom_call.1} parent=0
    _
  %s12 = ssub.s32 1, %s10
  %s13 = scalar_select 0, %s12, %s10
  $region1: #{tpu_custom_call.1} parent=0
    #allocation3 [shape = 'u8[4096]{0}', space=vmem, size = 0x1000, scoped, tag = 'input window, operand 0, single buffered']
    #allocation4 [shape = 's32[1]{0}', space=sflag, size = 0x4, scoped, tag = 'scoped memory for tpu_custom_call.1']
    #allocation5 [shape = 's32[1]{0}', space=sflag, size = 0x4, scoped, tag = 'scoped memory for tpu_custom_call.1']
    #allocation6 [shape = 'u8[6144]{0}', space=vmem, size = 0x1800, scoped, tag = 'input window, operand 2, single buffered']
    #allocation7 [shape = 's32[1]{0}', space=sflag, size = 0x4, scoped, tag = 'scoped memory for tpu_custom_call.1']
    #allocation8 [shape = 'u8[32768]{0}', space=vmem, size = 0x8000, scoped, tag = 'input window, operand 4, single buffered']
    #allocation9 [shape = 'u8[65536]{0}', space=vmem, size = 0x10000, scoped, tag = 'input window, operand 5, single buffered']
    #allocation10 [shape = 's32[1]{0}', space=sflag, size = 0x4, scoped, tag = 'scoped memory for tpu_custom_call.1']
    #allocation11 [shape = 'u8[131072]{0}', space=vmem, size = 0x20000, scoped, tag = 'input window, operand 6, single buffered']
    #allocation12 [shape = 'u8[131072]{0}', space=vmem, size = 0x20000, scoped, tag = 'input window, operand 7, single buffered']
    #allocation13 [shape = 's32[1]{0}', space=sflag, size = 0x4, scoped, tag = 'scoped memory for tpu_custom_call.1']
    #allocation14 [shape = 'u8[8192]{0}', space=vmem, size = 0x2000, scoped, tag = 'output window, operand 0, single buffered']
    %14 = vsyncpa [#allocation4], 0
    %15 = vsyncpa [#allocation7], 0
    %16 = vsyncpa [#allocation10], 0
    %17 = vsyncpa [#allocation13], 0
    %18 = vsyncpa [#allocation5], 0
    // Predicated region
    $region2: #{tpu_custom_call.1} parent=1 // pred_check
      _
    $region3: #{tpu_custom_call.1} parent=1 // pred_check_branch
      %20 = sbr.rel (0) target = $region5
    $region4: #{tpu_custom_call.1} parent=1 // pred_region
      %s22 = ssub.s32 128, 128
      %23 = vsyncadd [#allocation4], %s22
      %s24 = sshll.u32 [#allocation3], 4
      %s25 = int_to_ptr.vmem [resolvable:$true] %s24
      %30 = dma.hbm_to_vmem [thread:$0]  %s0, 128, %s25, [#allocation4], 64, 64, 4
    $region5: #{tpu_custom_call.1} parent=1 // pred_fallthru
      _
    // Predicated region
    $region6: #{tpu_custom_call.1} parent=1 // pred_check
      _
    $region7: #{tpu_custom_call.1} parent=1 // pred_check_branch
      %32 = sbr.rel (0) target = $region9
    $region8: #{tpu_custom_call.1} parent=1 // pred_region
      _
    $region9: #{tpu_custom_call.1} parent=1 // pred_fallthru
      _
    // Predicated region
    $region10: #{tpu_custom_call.1} parent=1 // pred_check
      _
    $region11: #{tpu_custom_call.1} parent=1 // pred_check_branch
      %34 = sbr.rel (0) target = $region13
    $region12: #{tpu_custom_call.1} parent=1 // pred_region
      %s36 = ssub.s32 192, 192
      %37 = vsyncadd [#allocation7], %s36
      %s39 = sshll.u32 [#allocation6], 4
      %s40 = int_to_ptr.vmem [resolvable:$true] %s39
      %42 = dma.hbm_to_vmem [thread:$0]  %s2, 192, %s40, [#allocation7]
    $region13: #{tpu_custom_call.1} parent=1 // pred_fallthru
      _
    // Predicated region
    $region14: #{tpu_custom_call.1} parent=1 // pred_check
      _
    $region15: #{tpu_custom_call.1} parent=1 // pred_check_branch
      %44 = sbr.rel (0) target = $region17
    $region16: #{tpu_custom_call.1} parent=1 // pred_region
      _
    $region17: #{tpu_custom_call.1} parent=1 // pred_fallthru
      _
    // Predicated region
    $region18: #{tpu_custom_call.1} parent=1 // pred_check
      _
    $region19: #{tpu_custom_call.1} parent=1 // pred_check_branch
      %46 = sbr.rel (0) target = $region21
    $region20: #{tpu_custom_call.1} parent=1 // pred_region
      %s48 = ssub.s32 1024, 1024
      %49 = vsyncadd [#allocation7], %s48
      %s50 = sshll.u32 [#allocation8], 4
      %s51 = int_to_ptr.vmem [resolvable:$true] %s50
      %56 = dma.hbm_to_vmem [thread:$0]  %s4, 1024, %s51, [#allocation7], 128, 128, 8
    $region21: #{tpu_custom_call.1} parent=1 // pred_fallthru
      _
    // Predicated region
    $region22: #{tpu_custom_call.1} parent=1 // pred_check
      _
    $region23: #{tpu_custom_call.1} parent=1 // pred_check_branch
      %58 = sbr.rel (0) target = $region25
    $region24: #{tpu_custom_call.1} parent=1 // pred_region
      %s60 = ssub.s32 2048, 2048
      %61 = vsyncadd [#allocation10], %s60
      %s62 = sshll.u32 [#allocation9], 4
      %s63 = int_to_ptr.vmem [resolvable:$true] %s62
      %68 = dma.hbm_to_vmem [thread:$0]  %s5, 2048, %s63, [#allocation10], 128, 128, 8
    $region25: #{tpu_custom_call.1} parent=1 // pred_fallthru
      _
    // Predicated region
    $region26: #{tpu_custom_call.1} parent=1 // pred_check
      _
    $region27: #{tpu_custom_call.1} parent=1 // pred_check_branch
      %70 = sbr.rel (0) target = $region29
    $region28: #{tpu_custom_call.1} parent=1 // pred_region
      %s72 = ssub.s32 4096, 4096
      %73 = vsyncadd [#allocation10], %s72
      %s74 = sshll.u32 [#allocation11], 4
      %s75 = int_to_ptr.vmem [resolvable:$true] %s74
      %80 = dma.hbm_to_vmem [thread:$0]  %s6, 4096, %s75, [#allocation10], 512, 512, 32
    $region29: #{tpu_custom_call.1} parent=1 // pred_fallthru
      _
    // Predicated region
    $region30: #{tpu_custom_call.1} parent=1 // pred_check
      _
    $region31: #{tpu_custom_call.1} parent=1 // pred_check_branch
      %82 = sbr.rel (0) target = $region33
    $region32: #{tpu_custom_call.1} parent=1 // pred_region
      %s84 = ssub.s32 4096, 4096
      %85 = vsyncadd [#allocation13], %s84
      %s86 = sshll.u32 [#allocation12], 4
      %s87 = int_to_ptr.vmem [resolvable:$true] %s86
      %92 = dma.hbm_to_vmem [thread:$0]  %s7, 4096, %s87, [#allocation13], 64, 64, 4
    $region33: #{tpu_custom_call.1} parent=1 // pred_fallthru
      _
    // Predicated region
    $region34: #{tpu_custom_call.1} parent=1 // pred_check
      _
    $region35: #{tpu_custom_call.1} parent=1 // pred_check_branch
      %94 = sbr.rel (0) target = $region37
    $region36: #{tpu_custom_call.1} parent=1 // pred_region
      _
    $region37: #{tpu_custom_call.1} parent=1 // pred_fallthru
      _
    // Predicated region
    $region38: #{tpu_custom_call.1} parent=1 // pred_check
      _
    $region39: #{tpu_custom_call.1} parent=1 // pred_check_branch
      %96 = sbr.rel (0) target = $region41
    $region40: #{tpu_custom_call.1} parent=1 // pred_region
      %97 = dma.done [#allocation4], 128
    $region41: #{tpu_custom_call.1} parent=1 // pred_fallthru
      _
    // Predicated region
    $region42: #{tpu_custom_call.1} parent=1 // pred_check
      _
    $region43: #{tpu_custom_call.1} parent=1 // pred_check_branch
      %99 = sbr.rel (0) target = $region45
    $region44: #{tpu_custom_call.1} parent=1 // pred_region
      %100 = dma.done [#allocation7], 192
    $region45: #{tpu_custom_call.1} parent=1 // pred_fallthru
      _
    // Predicated region
    $region46: #{tpu_custom_call.1} parent=1 // pred_check
      _
    $region47: #{tpu_custom_call.1} parent=1 // pred_check_branch
      %102 = sbr.rel (0) target = $region49
    $region48: #{tpu_custom_call.1} parent=1 // pred_region
      %103 = dma.done [#allocation7], 1024
    $region49: #{tpu_custom_call.1} parent=1 // pred_fallthru
      _
    // Predicated region
    $region50: #{tpu_custom_call.1} parent=1 // pred_check
      _
    $region51: #{tpu_custom_call.1} parent=1 // pred_check_branch
      %105 = sbr.rel (0) target = $region53
    $region52: #{tpu_custom_call.1} parent=1 // pred_region
      %106 = dma.done [#allocation10], 2048
    $region53: #{tpu_custom_call.1} parent=1 // pred_fallthru
      _
    // Predicated region
    $region54: #{tpu_custom_call.1} parent=1 // pred_check
      _
    $region55: #{tpu_custom_call.1} parent=1 // pred_check_branch
      %108 = sbr.rel (0) target = $region57
    $region56: #{tpu_custom_call.1} parent=1 // pred_region
      %109 = dma.done [#allocation10], 4096
    $region57: #{tpu_custom_call.1} parent=1 // pred_fallthru
      _
    // Predicated region
    $region58: #{tpu_custom_call.1} parent=1 // pred_check
      _
    $region59: #{tpu_custom_call.1} parent=1 // pred_check_branch
      %111 = sbr.rel (0) target = $region61
    $region60: #{tpu_custom_call.1} parent=1 // pred_region
      %112 = dma.done [#allocation13], 4096
    $region61: #{tpu_custom_call.1} parent=1 // pred_fallthru
      _
    %v114 = vld [vmem:[#allocation3] sm:$0xf]
    %v115 = vld [vmem:[#allocation3 + $0x4] sm:$0xf]
    %v116 = vld [vmem:[%s1] sm:$0xff]
    %v117 = vld [vmem:[%s1 + $0x8] sm:$0xff]
    %v118 = vld [vmem:[%s1 + $0x10] sm:$0xff]
    %v119 = vld [vmem:[%s1 + $0x18] sm:$0xff]
    %v120 = vld [vmem:[%s1 + $0x20] sm:$0xff]
    %v121 = vld [vmem:[%s1 + $0x28] sm:$0xff]
    %v122 = vld [vmem:[%s1 + $0x30] sm:$0xff]
    %v123 = vld [vmem:[%s1 + $0x38] sm:$0xff]
    %v124 = vld [vmem:[%s1 + $0x40] sm:$0xff]
    %v125 = vld [vmem:[%s1 + $0x48] sm:$0xff]
    %v126 = vld [vmem:[%s1 + $0x50] sm:$0xff]
    %v127 = vld [vmem:[%s1 + $0x58] sm:$0xff]
    %v128 = vld [vmem:[%s1 + $0x60] sm:$0xff]
    %v129 = vld [vmem:[%s1 + $0x68] sm:$0xff]
    %v130 = vld [vmem:[%s1 + $0x70] sm:$0xff]
    %v131 = vld [vmem:[%s1 + $0x78] sm:$0xff]
    %v132 = vld [vmem:[%s1 + $0x80] sm:$0xff]
    %v133 = vld [vmem:[%s1 + $0x88] sm:$0xff]
    %v134 = vld [vmem:[%s1 + $0x90] sm:$0xff]
    %v135 = vld [vmem:[%s1 + $0x98] sm:$0xff]
    %v136 = vld [vmem:[%s1 + $0xa0] sm:$0xff]
    %v137 = vld [vmem:[%s1 + $0xa8] sm:$0xff]
    %v138 = vld [vmem:[%s1 + $0xb0] sm:$0xff]
    %v139 = vld [vmem:[%s1 + $0xb8] sm:$0xff]
    %v140 = vld [vmem:[%s1 + $0xc0] sm:$0xff]
    %v141 = vld [vmem:[%s1 + $0xc8] sm:$0xff]
    %v142 = vld [vmem:[%s1 + $0xd0] sm:$0xff]
    %v143 = vld [vmem:[%s1 + $0xd8] sm:$0xff]
    %v144 = vld [vmem:[%s1 + $0xe0] sm:$0xff]
    %v145 = vld [vmem:[%s1 + $0xe8] sm:$0xff]
    %v146 = vld [vmem:[%s1 + $0xf0] sm:$0xff]
    %v147 = vld [vmem:[%s1 + $0xf8] sm:$0xff]
    %v148 = vld [vmem:[%s1 + $0x100] sm:$0xff]
    %v149 = vld [vmem:[%s1 + $0x108] sm:$0xff]
    %v150 = vld [vmem:[%s1 + $0x110] sm:$0xff]
    %v151 = vld [vmem:[%s1 + $0x118] sm:$0xff]
    %v152 = vld [vmem:[%s1 + $0x120] sm:$0xff]
    %v153 = vld [vmem:[%s1 + $0x128] sm:$0xff]
    %v154 = vld [vmem:[%s1 + $0x130] sm:$0xff]
    %v155 = vld [vmem:[%s1 + $0x138] sm:$0xff]
    %v156 = vld [vmem:[%s1 + $0x140] sm:$0xff]
    %v157 = vld [vmem:[%s1 + $0x148] sm:$0xff]
    %v158 = vld [vmem:[%s1 + $0x150] sm:$0xff]
    %v159 = vld [vmem:[%s1 + $0x158] sm:$0xff]
    %v160 = vld [vmem:[%s1 + $0x160] sm:$0xff]
    %v161 = vld [vmem:[%s1 + $0x168] sm:$0xff]
    %v162 = vld [vmem:[%s1 + $0x170] sm:$0xff]
    %v163 = vld [vmem:[%s1 + $0x178] sm:$0xff]
    %v164 = vld [vmem:[%s1 + $0x180] sm:$0xff]
    %v165 = vld [vmem:[%s1 + $0x188] sm:$0xff]
    %v166 = vld [vmem:[%s1 + $0x190] sm:$0xff]
    %v167 = vld [vmem:[%s1 + $0x198] sm:$0xff]
    %v168 = vld [vmem:[%s1 + $0x1a0] sm:$0xff]
    %v169 = vld [vmem:[%s1 + $0x1a8] sm:$0xff]
    %v170 = vld [vmem:[%s1 + $0x1b0] sm:$0xff]
    %v171 = vld [vmem:[%s1 + $0x1b8] sm:$0xff]
    %v172 = vld [vmem:[%s1 + $0x1c0] sm:$0xff]
    %v173 = vld [vmem:[%s1 + $0x1c8] sm:$0xff]
    %v174 = vld [vmem:[%s1 + $0x1d0] sm:$0xff]
    %v175 = vld [vmem:[%s1 + $0x1d8] sm:$0xff]
    %v176 = vld [vmem:[%s1 + $0x1e0] sm:$0xff]
    %v177 = vld [vmem:[%s1 + $0x1e8] sm:$0xff]
    %v178 = vld [vmem:[%s1 + $0x1f0] sm:$0xff]
    %v179 = vld [vmem:[%s1 + $0x1f8] sm:$0xff]
    %v180 = vld [vmem:[%s1 + $0x200] sm:$0xff]
    %v181 = vld [vmem:[%s1 + $0x208] sm:$0xff]
    %v182 = vld [vmem:[%s1 + $0x210] sm:$0xff]
    %v183 = vld [vmem:[%s1 + $0x218] sm:$0xff]
    %v184 = vld [vmem:[%s1 + $0x220] sm:$0xff]
    %v185 = vld [vmem:[%s1 + $0x228] sm:$0xff]
    %v186 = vld [vmem:[%s1 + $0x230] sm:$0xff]
    %v187 = vld [vmem:[%s1 + $0x238] sm:$0xff]
    %v188 = vld [vmem:[%s1 + $0x240] sm:$0xff]
    %v189 = vld [vmem:[%s1 + $0x248] sm:$0xff]
    %v190 = vld [vmem:[%s1 + $0x250] sm:$0xff]
    %v191 = vld [vmem:[%s1 + $0x258] sm:$0xff]
    %v192 = vld [vmem:[%s1 + $0x260] sm:$0xff]
    %v193 = vld [vmem:[%s1 + $0x268] sm:$0xff]
    %v194 = vld [vmem:[%s1 + $0x270] sm:$0xff]
    %v195 = vld [vmem:[%s1 + $0x278] sm:$0xff]
    %v196 = vld [vmem:[%s1 + $0x280] sm:$0xff]
    %v197 = vld [vmem:[%s1 + $0x288] sm:$0xff]
    %v198 = vld [vmem:[%s1 + $0x290] sm:$0xff]
    %v199 = vld [vmem:[%s1 + $0x298] sm:$0xff]
    %v200 = vld [vmem:[%s1 + $0x2a0] sm:$0xff]
    %v201 = vld [vmem:[%s1 + $0x2a8] sm:$0xff]
    %v202 = vld [vmem:[%s1 + $0x2b0] sm:$0xff]
    %v203 = vld [vmem:[%s1 + $0x2b8] sm:$0xff]
    %v204 = vld [vmem:[%s1 + $0x2c0] sm:$0xff]
    %v205 = vld [vmem:[%s1 + $0x2c8] sm:$0xff]
    %v206 = vld [vmem:[%s1 + $0x2d0] sm:$0xff]
    %v207 = vld [vmem:[%s1 + $0x2d8] sm:$0xff]
    %v208 = vld [vmem:[%s1 + $0x2e0] sm:$0xff]
    %v209 = vld [vmem:[%s1 + $0x2e8] sm:$0xff]
    %v210 = vld [vmem:[%s1 + $0x2f0] sm:$0xff]
    %v211 = vld [vmem:[%s1 + $0x2f8] sm:$0xff]
    %v212 = vld [vmem:[#allocation6] sm:$0xff]
    %v213 = vld [vmem:[#allocation6 + $0x8] sm:$0xf]
    %v216 = vlaneseq
    %v217 = vshrl.u32 %v216, 7
    %v218 = vsub.s32 0, %v217
    %v219 = vrot.slane %v212, %v218
    %v220 = vlaneseq
    %v221 = vshrl.u32 %v220, 7
    %v222 = vsub.s32 1, %v221
    %v223 = vrot.slane %v212, %v222
    %v224 = vlaneseq
    %v225 = vshrl.u32 %v224, 7
    %v226 = vsub.s32 2, %v225
    %v227 = vrot.slane %v212, %v226
    %v228 = vlaneseq
    %v229 = vshrl.u32 %v228, 7
    %v230 = vsub.s32 3, %v229
    %v231 = vrot.slane %v212, %v230
    %v232 = vlaneseq
    %v233 = vshrl.u32 %v232, 7
    %v234 = vsub.s32 4, %v233
    %v235 = vrot.slane %v212, %v234
    %v236 = vlaneseq
    %v237 = vshrl.u32 %v236, 7
    %v238 = vsub.s32 5, %v237
    %v239 = vrot.slane %v212, %v238
    %v240 = vlaneseq
    %v241 = vshrl.u32 %v240, 7
    %v242 = vsub.s32 6, %v241
    %v243 = vrot.slane %v212, %v242
    %v244 = vlaneseq
    %v245 = vshrl.u32 %v244, 7
    %v246 = vsub.s32 7, %v245
    %v247 = vrot.slane %v212, %v246
    %v248 = vlaneseq
    %v249 = vshrl.u32 %v248, 7
    %v250 = vsub.s32 0, %v249
    %v251 = vrot.slane %v213, %v250
    %v252 = vlaneseq
    %v253 = vshrl.u32 %v252, 7
    %v254 = vsub.s32 1, %v253
    %v255 = vrot.slane %v213, %v254
    %v256 = vlaneseq
    %v257 = vshrl.u32 %v256, 7
    %v258 = vsub.s32 2, %v257
    %v259 = vrot.slane %v213, %v258
    %v260 = vlaneseq
    %v261 = vshrl.u32 %v260, 7
    %v262 = vsub.s32 3, %v261
    %v263 = vrot.slane %v213, %v262
    %v278 = vunpack.c.l.b16 %v114
    %v279 = vunpack.c.l.b16 %v115
    %v280 = vpack.c.b16 %v279, %v278
    %v378 = vunpack.c.l.b16 %v116
    %v379 = vunpack.c.h.b16 %v116
    %v380 = vunpack.c.l.b16 %v117
    %v381 = vunpack.c.h.b16 %v117
    %v382 = vunpack.c.l.b16 %v118
    %v383 = vunpack.c.h.b16 %v118
    %v384 = vunpack.c.l.b16 %v119
    %v385 = vunpack.c.h.b16 %v119
    %v386 = vunpack.c.l.b16 %v120
    %v387 = vunpack.c.h.b16 %v120
    %v388 = vunpack.c.l.b16 %v121
    %v389 = vunpack.c.h.b16 %v121
    %v390 = vunpack.c.l.b16 %v122
    %v391 = vunpack.c.h.b16 %v122
    %v392 = vunpack.c.l.b16 %v123
    %v393 = vunpack.c.h.b16 %v123
    %v394 = vunpack.c.l.b16 %v124
    %v395 = vunpack.c.h.b16 %v124
    %v396 = vunpack.c.l.b16 %v125
    %v397 = vunpack.c.h.b16 %v125
    %v398 = vunpack.c.l.b16 %v126
    %v399 = vunpack.c.h.b16 %v126
    %v400 = vunpack.c.l.b16 %v127
    %v401 = vunpack.c.h.b16 %v127
    %v402 = vunpack.c.l.b16 %v128
    %v403 = vunpack.c.h.b16 %v128
    %v404 = vunpack.c.l.b16 %v129
    %v405 = vunpack.c.h.b16 %v129
    %v406 = vunpack.c.l.b16 %v130
    %v407 = vunpack.c.h.b16 %v130
    %v408 = vunpack.c.l.b16 %v131
    %v409 = vunpack.c.h.b16 %v131
    %v410 = vunpack.c.l.b16 %v132
    %v411 = vunpack.c.h.b16 %v132
    %v412 = vunpack.c.l.b16 %v133
    %v413 = vunpack.c.h.b16 %v133
    %v414 = vunpack.c.l.b16 %v134
    %v415 = vunpack.c.h.b16 %v134
    %v416 = vunpack.c.l.b16 %v135
    %v417 = vunpack.c.h.b16 %v135
    %v418 = vunpack.c.l.b16 %v136
    %v419 = vunpack.c.h.b16 %v136
    %v420 = vunpack.c.l.b16 %v137
    %v421 = vunpack.c.h.b16 %v137
    %v422 = vunpack.c.l.b16 %v138
    %v423 = vunpack.c.h.b16 %v138
    %v424 = vunpack.c.l.b16 %v139
    %v425 = vunpack.c.h.b16 %v139
    %v426 = vunpack.c.l.b16 %v140
    %v427 = vunpack.c.h.b16 %v140
    %v428 = vunpack.c.l.b16 %v141
    %v429 = vunpack.c.h.b16 %v141
    %v430 = vunpack.c.l.b16 %v142
    %v431 = vunpack.c.h.b16 %v142
    %v432 = vunpack.c.l.b16 %v143
    %v433 = vunpack.c.h.b16 %v143
    %v434 = vunpack.c.l.b16 %v144
    %v435 = vunpack.c.h.b16 %v144
    %v436 = vunpack.c.l.b16 %v145
    %v437 = vunpack.c.h.b16 %v145
    %v438 = vunpack.c.l.b16 %v146
    %v439 = vunpack.c.h.b16 %v146
    %v440 = vunpack.c.l.b16 %v147
    %v441 = vunpack.c.h.b16 %v147
    %v442 = vunpack.c.l.b16 %v148
    %v443 = vunpack.c.h.b16 %v148
    %v444 = vunpack.c.l.b16 %v149
    %v445 = vunpack.c.h.b16 %v149
    %v446 = vunpack.c.l.b16 %v150
    %v447 = vunpack.c.h.b16 %v150
    %v448 = vunpack.c.l.b16 %v151
    %v449 = vunpack.c.h.b16 %v151
    %v450 = vunpack.c.l.b16 %v152
    %v451 = vunpack.c.h.b16 %v152
    %v452 = vunpack.c.l.b16 %v153
    %v453 = vunpack.c.h.b16 %v153
    %v454 = vunpack.c.l.b16 %v154
    %v455 = vunpack.c.h.b16 %v154
    %v456 = vunpack.c.l.b16 %v155
    %v457 = vunpack.c.h.b16 %v155
    %v458 = vunpack.c.l.b16 %v156
    %v459 = vunpack.c.h.b16 %v156
    %v460 = vunpack.c.l.b16 %v157
    %v461 = vunpack.c.h.b16 %v157
    %v462 = vunpack.c.l.b16 %v158
    %v463 = vunpack.c.h.b16 %v158
    %v464 = vunpack.c.l.b16 %v159
    %v465 = vunpack.c.h.b16 %v159
    %v466 = vunpack.c.l.b16 %v160
    %v467 = vunpack.c.h.b16 %v160
    %v468 = vunpack.c.l.b16 %v161
    %v469 = vunpack.c.h.b16 %v161
    %v470 = vunpack.c.l.b16 %v162
    %v471 = vunpack.c.h.b16 %v162
    %v472 = vunpack.c.l.b16 %v163
    %v473 = vunpack.c.h.b16 %v163
    %v474 = vunpack.c.l.b16 %v164
    %v475 = vunpack.c.h.b16 %v164
    %v476 = vunpack.c.l.b16 %v165
    %v477 = vunpack.c.h.b16 %v165
    %v478 = vunpack.c.l.b16 %v166
    %v479 = vunpack.c.h.b16 %v166
    %v480 = vunpack.c.l.b16 %v167
    %v481 = vunpack.c.h.b16 %v167
    %v482 = vunpack.c.l.b16 %v168
    %v483 = vunpack.c.h.b16 %v168
    %v484 = vunpack.c.l.b16 %v169
    %v485 = vunpack.c.h.b16 %v169
    %v486 = vunpack.c.l.b16 %v170
    %v487 = vunpack.c.h.b16 %v170
    %v488 = vunpack.c.l.b16 %v171
    %v489 = vunpack.c.h.b16 %v171
    %v490 = vunpack.c.l.b16 %v172
    %v491 = vunpack.c.h.b16 %v172
    %v492 = vunpack.c.l.b16 %v173
    %v493 = vunpack.c.h.b16 %v173
    %v494 = vunpack.c.l.b16 %v174
    %v495 = vunpack.c.h.b16 %v174
    %v496 = vunpack.c.l.b16 %v175
    %v497 = vunpack.c.h.b16 %v175
    %v498 = vunpack.c.l.b16 %v176
    %v499 = vunpack.c.h.b16 %v176
    %v500 = vunpack.c.l.b16 %v177
    %v501 = vunpack.c.h.b16 %v177
    %v502 = vunpack.c.l.b16 %v178
    %v503 = vunpack.c.h.b16 %v178
    %v504 = vunpack.c.l.b16 %v179
    %v505 = vunpack.c.h.b16 %v179
    %v506 = vunpack.c.l.b16 %v180
    %v507 = vunpack.c.h.b16 %v180
    %v508 = vunpack.c.l.b16 %v181
    %v509 = vunpack.c.h.b16 %v181
    %v510 = vunpack.c.l.b16 %v182
    %v511 = vunpack.c.h.b16 %v182
    %v512 = vunpack.c.l.b16 %v183
    %v513 = vunpack.c.h.b16 %v183
    %v514 = vunpack.c.l.b16 %v184
    %v515 = vunpack.c.h.b16 %v184
    %v516 = vunpack.c.l.b16 %v185
    %v517 = vunpack.c.h.b16 %v185
    %v518 = vunpack.c.l.b16 %v186
    %v519 = vunpack.c.h.b16 %v186
    %v520 = vunpack.c.l.b16 %v187
    %v521 = vunpack.c.h.b16 %v187
    %v522 = vunpack.c.l.b16 %v188
    %v523 = vunpack.c.h.b16 %v188
    %v524 = vunpack.c.l.b16 %v189
    %v525 = vunpack.c.h.b16 %v189
    %v526 = vunpack.c.l.b16 %v190
    %v527 = vunpack.c.h.b16 %v190
    %v528 = vunpack.c.l.b16 %v191
    %v529 = vunpack.c.h.b16 %v191
    %v530 = vunpack.c.l.b16 %v192
    %v531 = vunpack.c.h.b16 %v192
    %v532 = vunpack.c.l.b16 %v193
    %v533 = vunpack.c.h.b16 %v193
    %v534 = vunpack.c.l.b16 %v194
    %v535 = vunpack.c.h.b16 %v194
    %v536 = vunpack.c.l.b16 %v195
    %v537 = vunpack.c.h.b16 %v195
    %v538 = vunpack.c.l.b16 %v196
    %v539 = vunpack.c.h.b16 %v196
    %v540 = vunpack.c.l.b16 %v197
    %v541 = vunpack.c.h.b16 %v197
    %v542 = vunpack.c.l.b16 %v198
    %v543 = vunpack.c.h.b16 %v198
    %v544 = vunpack.c.l.b16 %v199
    %v545 = vunpack.c.h.b16 %v199
    %v546 = vunpack.c.l.b16 %v200
    %v547 = vunpack.c.h.b16 %v200
    %v548 = vunpack.c.l.b16 %v201
    %v549 = vunpack.c.h.b16 %v201
    %v550 = vunpack.c.l.b16 %v202
    %v551 = vunpack.c.h.b16 %v202
    %v552 = vunpack.c.l.b16 %v203
    %v553 = vunpack.c.h.b16 %v203
    %v554 = vunpack.c.l.b16 %v204
    %v555 = vunpack.c.h.b16 %v204
    %v556 = vunpack.c.l.b16 %v205
    %v557 = vunpack.c.h.b16 %v205
    %v558 = vunpack.c.l.b16 %v206
    %v559 = vunpack.c.h.b16 %v206
    %v560 = vunpack.c.l.b16 %v207
    %v561 = vunpack.c.h.b16 %v207
    %v562 = vunpack.c.l.b16 %v208
    %v563 = vunpack.c.h.b16 %v208
    %v564 = vunpack.c.l.b16 %v209
    %v565 = vunpack.c.h.b16 %v209
    %v566 = vunpack.c.l.b16 %v210
    %v567 = vunpack.c.h.b16 %v210
    %v568 = vunpack.c.l.b16 %v211
    %v569 = vunpack.c.h.b16 %v211
    %v570 = vpack.c.b16 %v390, %v378
    %v571 = vpack.c.b16 %v391, %v379
    %v572 = vpack.c.b16 %v392, %v380
    %v573 = vpack.c.b16 %v393, %v381
    %v574 = vpack.c.b16 %v394, %v382
    %v575 = vpack.c.b16 %v395, %v383
    %v576 = vpack.c.b16 %v396, %v384
    %v577 = vpack.c.b16 %v397, %v385
    %v578 = vpack.c.b16 %v398, %v386
    %v579 = vpack.c.b16 %v399, %v387
    %v580 = vpack.c.b16 %v400, %v388
    %v581 = vpack.c.b16 %v401, %v389
    %v582 = vpack.c.b16 %v414, %v402
    %v583 = vpack.c.b16 %v415, %v403
    %v584 = vpack.c.b16 %v416, %v404
    %v585 = vpack.c.b16 %v417, %v405
    %v586 = vpack.c.b16 %v418, %v406
    %v587 = vpack.c.b16 %v419, %v407
    %v588 = vpack.c.b16 %v420, %v408
    %v589 = vpack.c.b16 %v421, %v409
    %v590 = vpack.c.b16 %v422, %v410
    %v591 = vpack.c.b16 %v423, %v411
    %v592 = vpack.c.b16 %v424, %v412
    %v593 = vpack.c.b16 %v425, %v413
    %v594 = vpack.c.b16 %v438, %v426
    %v595 = vpack.c.b16 %v439, %v427
    %v596 = vpack.c.b16 %v440, %v428
    %v597 = vpack.c.b16 %v441, %v429
    %v598 = vpack.c.b16 %v442, %v430
    %v599 = vpack.c.b16 %v443, %v431
    %v600 = vpack.c.b16 %v444, %v432
    %v601 = vpack.c.b16 %v445, %v433
    %v602 = vpack.c.b16 %v446, %v434
    %v603 = vpack.c.b16 %v447, %v435
    %v604 = vpack.c.b16 %v448, %v436
    %v605 = vpack.c.b16 %v449, %v437
    %v606 = vpack.c.b16 %v462, %v450
    %v607 = vpack.c.b16 %v463, %v451
    %v608 = vpack.c.b16 %v464, %v452
    %v609 = vpack.c.b16 %v465, %v453
    %v610 = vpack.c.b16 %v466, %v454
    %v611 = vpack.c.b16 %v467, %v455
    %v612 = vpack.c.b16 %v468, %v456
    %v613 = vpack.c.b16 %v469, %v457
    %v614 = vpack.c.b16 %v470, %v458
    %v615 = vpack.c.b16 %v471, %v459
    %v616 = vpack.c.b16 %v472, %v460
    %v617 = vpack.c.b16 %v473, %v461
    %v618 = vpack.c.b16 %v486, %v474
    %v619 = vpack.c.b16 %v487, %v475
    %v620 = vpack.c.b16 %v488, %v476
    %v621 = vpack.c.b16 %v489, %v477
    %v622 = vpack.c.b16 %v490, %v478
    %v623 = vpack.c.b16 %v491, %v479
    %v624 = vpack.c.b16 %v492, %v480
    %v625 = vpack.c.b16 %v493, %v481
    %v626 = vpack.c.b16 %v494, %v482
    %v627 = vpack.c.b16 %v495, %v483
    %v628 = vpack.c.b16 %v496, %v484
    %v629 = vpack.c.b16 %v497, %v485
    %v630 = vpack.c.b16 %v510, %v498
    %v631 = vpack.c.b16 %v511, %v499
    %v632 = vpack.c.b16 %v512, %v500
    %v633 = vpack.c.b16 %v513, %v501
    %v634 = vpack.c.b16 %v514, %v502
    %v635 = vpack.c.b16 %v515, %v503
    %v636 = vpack.c.b16 %v516, %v504
    %v637 = vpack.c.b16 %v517, %v505
    %v638 = vpack.c.b16 %v518, %v506
    %v639 = vpack.c.b16 %v519, %v507
    %v640 = vpack.c.b16 %v520, %v508
    %v641 = vpack.c.b16 %v521, %v509
    %v642 = vpack.c.b16 %v534, %v522
    %v643 = vpack.c.b16 %v535, %v523
    %v644 = vpack.c.b16 %v536, %v524
    %v645 = vpack.c.b16 %v537, %v525
    %v646 = vpack.c.b16 %v538, %v526
    %v647 = vpack.c.b16 %v539, %v527
    %v648 = vpack.c.b16 %v540, %v528
    %v649 = vpack.c.b16 %v541, %v529
    %v650 = vpack.c.b16 %v542, %v530
    %v651 = vpack.c.b16 %v543, %v531
    %v652 = vpack.c.b16 %v544, %v532
    %v653 = vpack.c.b16 %v545, %v533
    %v654 = vpack.c.b16 %v558, %v546
    %v655 = vpack.c.b16 %v559, %v547
    %v656 = vpack.c.b16 %v560, %v548
    %v657 = vpack.c.b16 %v561, %v549
    %v658 = vpack.c.b16 %v562, %v550
    %v659 = vpack.c.b16 %v563, %v551
    %v660 = vpack.c.b16 %v564, %v552
    %v661 = vpack.c.b16 %v565, %v553
    %v662 = vpack.c.b16 %v566, %v554
    %v663 = vpack.c.b16 %v567, %v555
    %v664 = vpack.c.b16 %v568, %v556
    %v665 = vpack.c.b16 %v569, %v557
    %762 = vmatprep.subr.bf16.mxu0 %v655
    %763 = vmatpush1.bf16.msra.mxu0 %v654
    %764 = vmatprep.subr.bf16.mxu0 %v643
    %765 = vmatpush1.bf16.msra.mxu0 %v642
    %766 = vmatprep.subr.bf16.mxu0 %v631
    %767 = vmatpush1.bf16.msra.mxu0 %v630
    %768 = vmatprep.subr.bf16.mxu0 %v619
    %769 = vmatpush1.bf16.msra.mxu0 %v618
    %770 = vmatprep.subr.bf16.mxu0 %v607
    %771 = vmatpush1.bf16.msra.mxu0 %v606
    %772 = vmatprep.subr.bf16.mxu0 %v595
    %773 = vmatpush1.bf16.msra.mxu0 %v594
    %774 = vmatprep.subr.bf16.mxu0 %v583
    %775 = vmatpush1.bf16.msra.mxu0 %v582
    %776 = vmatprep.subr.bf16.mxu0 %v571
    %777 = vmatpush1.bf16.msra.mxu0 %v570
    %778 = vmatprep.subr.bf16.mxu0 0
    %779 = vmatpush2.bf16.msra.mxu0 0
    %780 = vmatprep.subr.bf16.mxu0 0
    %781 = vmatpush2.bf16.msra.mxu0 0
    %782 = vmatprep.subr.bf16.mxu0 0
    %783 = vmatpush2.bf16.msra.mxu0 0
    %784 = vmatprep.subr.bf16.mxu0 0
    %785 = vmatpush2.bf16.msra.mxu0 0
    %786 = vmatprep.subr.bf16.mxu0 0
    %787 = vmatpush2.bf16.msra.mxu0 0
    %788 = vmatprep.subr.bf16.mxu0 0
    %789 = vmatpush2.bf16.msra.mxu0 0
    %790 = vmatprep.subr.bf16.mxu0 0
    %791 = vmatpush2.bf16.msra.mxu0 0
    %792 = vmatprep.subr.bf16.mxu0 0
    %793 = vmatpush2.bf16.msra.mxu0 0
    %794 = vmatprep.mubr.bf16.mxu0 0
    %795 = vmatmul.mubr.bf16.gmra.mxu0 %v280
    %v796 = vpop.f32.mrf.mxu0
    %v797 = vadd.f32 %v219, %v796
    %v798 = vpop.f32.mrf.mxu0
    %v799 = vadd.f32 %v223, %v798
    %v800 = vpop.f32.mrf.mxu0
    %v801 = vadd.f32 %v219, %v800
    %v802 = vpop.f32.mrf.mxu0
    %v803 = vadd.f32 %v223, %v802
    %804 = vdwg.mxu0
    %805 = vmatprep.subr.bf16.mxu0 %v657
    %806 = vmatpush1.bf16.msra.mxu0 %v656
    %807 = vmatprep.subr.bf16.mxu0 %v645
    %808 = vmatpush1.bf16.msra.mxu0 %v644
    %809 = vmatprep.subr.bf16.mxu0 %v633
    %810 = vmatpush1.bf16.msra.mxu0 %v632
    %811 = vmatprep.subr.bf16.mxu0 %v621
    %812 = vmatpush1.bf16.msra.mxu0 %v620
    %813 = vmatprep.subr.bf16.mxu0 %v609
    %814 = vmatpush1.bf16.msra.mxu0 %v608
    %815 = vmatprep.subr.bf16.mxu0 %v597
    %816 = vmatpush1.bf16.msra.mxu0 %v596
    %817 = vmatprep.subr.bf16.mxu0 %v585
    %818 = vmatpush1.bf16.msra.mxu0 %v584
    %819 = vmatprep.subr.bf16.mxu0 %v573
    %820 = vmatpush1.bf16.msra.mxu0 %v572
    %821 = vmatprep.subr.bf16.mxu0 0
    %822 = vmatpush2.bf16.msra.mxu0 0
    %823 = vmatprep.subr.bf16.mxu0 0
    %824 = vmatpush2.bf16.msra.mxu0 0
    %825 = vmatprep.subr.bf16.mxu0 0
    %826 = vmatpush2.bf16.msra.mxu0 0
    %827 = vmatprep.subr.bf16.mxu0 0
    %828 = vmatpush2.bf16.msra.mxu0 0
    %829 = vmatprep.subr.bf16.mxu0 0
    %830 = vmatpush2.bf16.msra.mxu0 0
    %831 = vmatprep.subr.bf16.mxu0 0
    %832 = vmatpush2.bf16.msra.mxu0 0
    %833 = vmatprep.subr.bf16.mxu0 0
    %834 = vmatpush2.bf16.msra.mxu0 0
    %835 = vmatprep.subr.bf16.mxu0 0
    %836 = vmatpush2.bf16.msra.mxu0 0
    %837 = vmatprep.mubr.bf16.mxu0 0
    %838 = vmatmul.mubr.bf16.gmra.mxu0 %v280
    %v839 = vpop.f32.mrf.mxu0
    %v840 = vadd.f32 %v227, %v839
    %v841 = vpop.f32.mrf.mxu0
    %v842 = vadd.f32 %v231, %v841
    %v843 = vpop.f32.mrf.mxu0
    %v844 = vadd.f32 %v227, %v843
    %v845 = vpop.f32.mrf.mxu0
    %v846 = vadd.f32 %v231, %v845
    %847 = vdwg.mxu0
    %848 = vmatprep.subr.bf16.mxu0 %v659
    %849 = vmatpush1.bf16.msra.mxu0 %v658
    %850 = vmatprep.subr.bf16.mxu0 %v647
    %851 = vmatpush1.bf16.msra.mxu0 %v646
    %852 = vmatprep.subr.bf16.mxu0 %v635
    %853 = vmatpush1.bf16.msra.mxu0 %v634
    %854 = vmatprep.subr.bf16.mxu0 %v623
    %855 = vmatpush1.bf16.msra.mxu0 %v622
    %856 = vmatprep.subr.bf16.mxu0 %v611
    %857 = vmatpush1.bf16.msra.mxu0 %v610
    %858 = vmatprep.subr.bf16.mxu0 %v599
    %859 = vmatpush1.bf16.msra.mxu0 %v598
    %860 = vmatprep.subr.bf16.mxu0 %v587
    %861 = vmatpush1.bf16.msra.mxu0 %v586
    %862 = vmatprep.subr.bf16.mxu0 %v575
    %863 = vmatpush1.bf16.msra.mxu0 %v574
    %864 = vmatprep.subr.bf16.mxu0 0
    %865 = vmatpush2.bf16.msra.mxu0 0
    %866 = vmatprep.subr.bf16.mxu0 0
    %867 = vmatpush2.bf16.msra.mxu0 0
    %868 = vmatprep.subr.bf16.mxu0 0
    %869 = vmatpush2.bf16.msra.mxu0 0
    %870 = vmatprep.subr.bf16.mxu0 0
    %871 = vmatpush2.bf16.msra.mxu0 0
    %872 = vmatprep.subr.bf16.mxu0 0
    %873 = vmatpush2.bf16.msra.mxu0 0
    %874 = vmatprep.subr.bf16.mxu0 0
    %875 = vmatpush2.bf16.msra.mxu0 0
    %876 = vmatprep.subr.bf16.mxu0 0
    %877 = vmatpush2.bf16.msra.mxu0 0
    %878 = vmatprep.subr.bf16.mxu0 0
    %879 = vmatpush2.bf16.msra.mxu0 0
    %880 = vmatprep.mubr.bf16.mxu0 0
    %881 = vmatmul.mubr.bf16.gmra.mxu0 %v280
    %v882 = vpop.f32.mrf.mxu0
    %v883 = vadd.f32 %v235, %v882
    %v884 = vpop.f32.mrf.mxu0
    %v885 = vadd.f32 %v239, %v884
    %v886 = vpop.f32.mrf.mxu0
    %v887 = vadd.f32 %v235, %v886
    %v888 = vpop.f32.mrf.mxu0
    %v889 = vadd.f32 %v239, %v888
    %890 = vdwg.mxu0
    %891 = vmatprep.subr.bf16.mxu0 %v661
    %892 = vmatpush1.bf16.msra.mxu0 %v660
    %893 = vmatprep.subr.bf16.mxu0 %v649
    %894 = vmatpush1.bf16.msra.mxu0 %v648
    %895 = vmatprep.subr.bf16.mxu0 %v637
    %896 = vmatpush1.bf16.msra.mxu0 %v636
    %897 = vmatprep.subr.bf16.mxu0 %v625
    %898 = vmatpush1.bf16.msra.mxu0 %v624
    %899 = vmatprep.subr.bf16.mxu0 %v613
    %900 = vmatpush1.bf16.msra.mxu0 %v612
    %901 = vmatprep.subr.bf16.mxu0 %v601
    %902 = vmatpush1.bf16.msra.mxu0 %v600
    %903 = vmatprep.subr.bf16.mxu0 %v589
    %904 = vmatpush1.bf16.msra.mxu0 %v588
    %905 = vmatprep.subr.bf16.mxu0 %v577
    %906 = vmatpush1.bf16.msra.mxu0 %v576
    %907 = vmatprep.subr.bf16.mxu0 0
    %908 = vmatpush2.bf16.msra.mxu0 0
    %909 = vmatprep.subr.bf16.mxu0 0
    %910 = vmatpush2.bf16.msra.mxu0 0
    %911 = vmatprep.subr.bf16.mxu0 0
    %912 = vmatpush2.bf16.msra.mxu0 0
    %913 = vmatprep.subr.bf16.mxu0 0
    %914 = vmatpush2.bf16.msra.mxu0 0
    %915 = vmatprep.subr.bf16.mxu0 0
    %916 = vmatpush2.bf16.msra.mxu0 0
    %917 = vmatprep.subr.bf16.mxu0 0
    %918 = vmatpush2.bf16.msra.mxu0 0
    %919 = vmatprep.subr.bf16.mxu0 0
    %920 = vmatpush2.bf16.msra.mxu0 0
    %921 = vmatprep.subr.bf16.mxu0 0
    %922 = vmatpush2.bf16.msra.mxu0 0
    %923 = vmatprep.mubr.bf16.mxu0 0
    %924 = vmatmul.mubr.bf16.gmra.mxu0 %v280
    %v925 = vpop.f32.mrf.mxu0
    %v926 = vadd.f32 %v243, %v925
    %v927 = vpop.f32.mrf.mxu0
    %v928 = vadd.f32 %v247, %v927
    %v929 = vpop.f32.mrf.mxu0
    %v930 = vadd.f32 %v243, %v929
    %v931 = vpop.f32.mrf.mxu0
    %v932 = vadd.f32 %v247, %v931
    %933 = vdwg.mxu0
    %934 = vmatprep.subr.bf16.mxu0 %v663
    %935 = vmatpush1.bf16.msra.mxu0 %v662
    %936 = vmatprep.subr.bf16.mxu0 %v651
    %937 = vmatpush1.bf16.msra.mxu0 %v650
    %938 = vmatprep.subr.bf16.mxu0 %v639
    %939 = vmatpush1.bf16.msra.mxu0 %v638
    %940 = vmatprep.subr.bf16.mxu0 %v627
    %941 = vmatpush1.bf16.msra.mxu0 %v626
    %942 = vmatprep.subr.bf16.mxu0 %v615
    %943 = vmatpush1.bf16.msra.mxu0 %v614
    %944 = vmatprep.subr.bf16.mxu0 %v603
    %945 = vmatpush1.bf16.msra.mxu0 %v602
    %946 = vmatprep.subr.bf16.mxu0 %v591
    %947 = vmatpush1.bf16.msra.mxu0 %v590
    %948 = vmatprep.subr.bf16.mxu0 %v579
    %949 = vmatpush1.bf16.msra.mxu0 %v578
    %950 = vmatprep.subr.bf16.mxu0 0
    %951 = vmatpush2.bf16.msra.mxu0 0
    %952 = vmatprep.subr.bf16.mxu0 0
    %953 = vmatpush2.bf16.msra.mxu0 0
    %954 = vmatprep.subr.bf16.mxu0 0
    %955 = vmatpush2.bf16.msra.mxu0 0
    %956 = vmatprep.subr.bf16.mxu0 0
    %957 = vmatpush2.bf16.msra.mxu0 0
    %958 = vmatprep.subr.bf16.mxu0 0
    %959 = vmatpush2.bf16.msra.mxu0 0
    %960 = vmatprep.subr.bf16.mxu0 0
    %961 = vmatpush2.bf16.msra.mxu0 0
    %962 = vmatprep.subr.bf16.mxu0 0
    %963 = vmatpush2.bf16.msra.mxu0 0
    %964 = vmatprep.subr.bf16.mxu0 0
    %965 = vmatpush2.bf16.msra.mxu0 0
    %966 = vmatprep.mubr.bf16.mxu0 0
    %967 = vmatmul.mubr.bf16.gmra.mxu0 %v280
    %v968 = vpop.f32.mrf.mxu0
    %v969 = vadd.f32 %v251, %v968
    %v970 = vpop.f32.mrf.mxu0
    %v971 = vadd.f32 %v255, %v970
    %v972 = vpop.f32.mrf.mxu0
    %v973 = vadd.f32 %v251, %v972
    %v974 = vpop.f32.mrf.mxu0
    %v975 = vadd.f32 %v255, %v974
    %976 = vdwg.mxu0
    %977 = vmatprep.subr.bf16.mxu0 %v665
    %978 = vmatpush1.bf16.msra.mxu0 %v664
    %979 = vmatprep.subr.bf16.mxu0 %v653
    %980 = vmatpush1.bf16.msra.mxu0 %v652
    %981 = vmatprep.subr.bf16.mxu0 %v641
    %982 = vmatpush1.bf16.msra.mxu0 %v640
    %983 = vmatprep.subr.bf16.mxu0 %v629
    %984 = vmatpush1.bf16.msra.mxu0 %v628
    %985 = vmatprep.subr.bf16.mxu0 %v617
    %986 = vmatpush1.bf16.msra.mxu0 %v616
    %987 = vmatprep.subr.bf16.mxu0 %v605
    %988 = vmatpush1.bf16.msra.mxu0 %v604
    %989 = vmatprep.subr.bf16.mxu0 %v593
    %990 = vmatpush1.bf16.msra.mxu0 %v592
    %991 = vmatprep.subr.bf16.mxu0 %v581
    %992 = vmatpush1.bf16.msra.mxu0 %v580
    %993 = vmatprep.subr.bf16.mxu0 0
    %994 = vmatpush2.bf16.msra.mxu0 0
    %995 = vmatprep.subr.bf16.mxu0 0
    %996 = vmatpush2.bf16.msra.mxu0 0
    %997 = vmatprep.subr.bf16.mxu0 0
    %998 = vmatpush2.bf16.msra.mxu0 0
    %999 = vmatprep.subr.bf16.mxu0 0
    %1000 = vmatpush2.bf16.msra.mxu0 0
    %1001 = vmatprep.subr.bf16.mxu0 0
    %1002 = vmatpush2.bf16.msra.mxu0 0
    %1003 = vmatprep.subr.bf16.mxu0 0
    %1004 = vmatpush2.bf16.msra.mxu0 0
    %1005 = vmatprep.subr.bf16.mxu0 0
    %1006 = vmatpush2.bf16.msra.mxu0 0
    %1007 = vmatprep.subr.bf16.mxu0 0
    %1008 = vmatpush2.bf16.msra.mxu0 0
    %1009 = vmatprep.mubr.bf16.mxu0 0
    %1010 = vmatmul.mubr.bf16.gmra.mxu0 %v280
    %v1011 = vpop.f32.mrf.mxu0
    %v1012 = vadd.f32 %v259, %v1011
    %v1013 = vpop.f32.mrf.mxu0
    %v1014 = vadd.f32 %v263, %v1013
    %v1015 = vpop.f32.mrf.mxu0
    %v1016 = vadd.f32 %v259, %v1015
    %v1017 = vpop.f32.mrf.mxu0
    %v1018 = vadd.f32 %v263, %v1017
    %1019 = vdwg.mxu0
    %1020 = vst [vmem:[#allocation2] sm:$0xff] %v797
    %1021 = vst [vmem:[#allocation2 + $0x8] sm:$0xff] %v799
    %1022 = vst [vmem:[#allocation2 + $0x10] sm:$0xff] %v840
    %1023 = vst [vmem:[#allocation2 + $0x18] sm:$0xff] %v842
    %1024 = vst [vmem:[#allocation2 + $0x20] sm:$0xff] %v883
    %1025 = vst [vmem:[#allocation2 + $0x28] sm:$0xff] %v885
    %1026 = vst [vmem:[#allocation2 + $0x30] sm:$0xff] %v926
    %1027 = vst [vmem:[#allocation2 + $0x38] sm:$0xff] %v928
    %1028 = vst [vmem:[#allocation2 + $0x40] sm:$0xff] %v969
    %1029 = vst [vmem:[#allocation2 + $0x48] sm:$0xff] %v971
    %1030 = vst [vmem:[#allocation2 + $0x50] sm:$0xff] %v1012
    %1031 = vst [vmem:[#allocation2 + $0x58] sm:$0xff] %v1014
    %1032 = vst [vmem:[#allocation2 + $0x60] sm:$0xff] %v801
    %1033 = vst [vmem:[#allocation2 + $0x68] sm:$0xff] %v803
    %1034 = vst [vmem:[#allocation2 + $0x70] sm:$0xff] %v844
    %1035 = vst [vmem:[#allocation2 + $0x78] sm:$0xff] %v846
    %1036 = vst [vmem:[#allocation2 + $0x80] sm:$0xff] %v887
    %1037 = vst [vmem:[#allocation2 + $0x88] sm:$0xff] %v889
    %1038 = vst [vmem:[#allocation2 + $0x90] sm:$0xff] %v930
    %1039 = vst [vmem:[#allocation2 + $0x98] sm:$0xff] %v932
    %1040 = vst [vmem:[#allocation2 + $0xa0] sm:$0xff] %v973
    %1041 = vst [vmem:[#allocation2 + $0xa8] sm:$0xff] %v975
    %1042 = vst [vmem:[#allocation2 + $0xb0] sm:$0xff] %v1016
    %1043 = vst [vmem:[#allocation2 + $0xb8] sm:$0xff] %v1018
    %v1044 = vld [vmem:[#allocation2] sm:$0xff]
    %v1045 = vld [vmem:[#allocation2 + $0x8] sm:$0xff]
    %v1046 = vld [vmem:[#allocation2 + $0x10] sm:$0xff]
    %v1047 = vld [vmem:[#allocation2 + $0x18] sm:$0xff]
    %v1048 = vld [vmem:[#allocation2 + $0x60] sm:$0xff]
    %v1049 = vld [vmem:[#allocation2 + $0x68] sm:$0xff]
    %v1050 = vld [vmem:[#allocation2 + $0x70] sm:$0xff]
    %v1051 = vld [vmem:[#allocation2 + $0x78] sm:$0xff]
    %v1052 = vld [vmem:[#allocation2 + $0x20] sm:$0xff]
    %v1053 = vld [vmem:[#allocation2 + $0x28] sm:$0xff]
    %v1054 = vld [vmem:[#allocation2 + $0x30] sm:$0xff]
    %v1055 = vld [vmem:[#allocation2 + $0x38] sm:$0xff]
    %v1056 = vld [vmem:[#allocation2 + $0x80] sm:$0xff]
    %v1057 = vld [vmem:[#allocation2 + $0x88] sm:$0xff]
    %v1058 = vld [vmem:[#allocation2 + $0x90] sm:$0xff]
    %v1059 = vld [vmem:[#allocation2 + $0x98] sm:$0xff]
    %v1060 = vmul.f32 %v1044, %v1052
    %v1061 = vmul.f32 %v1045, %v1053
    %v1062 = vmul.f32 %v1046, %v1054
    %v1063 = vmul.f32 %v1047, %v1055
    %v1064 = vmul.f32 %v1048, %v1056
    %v1065 = vmul.f32 %v1049, %v1057
    %v1066 = vmul.f32 %v1050, %v1058
    %v1067 = vmul.f32 %v1051, %v1059
    %v1068 = vld [vmem:[%s3] sm:$0xff]
    %v1069 = vld [vmem:[%s3 + $0x8] sm:$0xff]
    %v1070 = vld [vmem:[%s3 + $0x10] sm:$0xff]
    %v1071 = vld [vmem:[%s3 + $0x18] sm:$0xff]
    %v1072 = vld [vmem:[%s3 + $0x20] sm:$0xff]
    %v1073 = vld [vmem:[%s3 + $0x28] sm:$0xff]
    %v1074 = vld [vmem:[%s3 + $0x30] sm:$0xff]
    %v1075 = vld [vmem:[%s3 + $0x38] sm:$0xff]
    %v1076 = vld [vmem:[%s3 + $0x40] sm:$0xff]
    %v1077 = vld [vmem:[%s3 + $0x48] sm:$0xff]
    %v1078 = vld [vmem:[%s3 + $0x50] sm:$0xff]
    %v1079 = vld [vmem:[%s3 + $0x58] sm:$0xff]
    %v1080 = vld [vmem:[%s3 + $0x60] sm:$0xff]
    %v1081 = vld [vmem:[%s3 + $0x68] sm:$0xff]
    %v1082 = vld [vmem:[%s3 + $0x70] sm:$0xff]
    %v1083 = vld [vmem:[%s3 + $0x78] sm:$0xff]
    %v1084 = vld [vmem:[%s3 + $0x80] sm:$0xff]
    %v1085 = vld [vmem:[%s3 + $0x88] sm:$0xff]
    %v1086 = vld [vmem:[%s3 + $0x90] sm:$0xff]
    %v1087 = vld [vmem:[%s3 + $0x98] sm:$0xff]
    %v1088 = vld [vmem:[%s3 + $0xa0] sm:$0xff]
    %v1089 = vld [vmem:[%s3 + $0xa8] sm:$0xff]
    %v1090 = vld [vmem:[%s3 + $0xb0] sm:$0xff]
    %v1091 = vld [vmem:[%s3 + $0xb8] sm:$0xff]
    %v1092 = vld [vmem:[%s3 + $0xc0] sm:$0xff]
    %v1093 = vld [vmem:[%s3 + $0xc8] sm:$0xff]
    %v1094 = vld [vmem:[%s3 + $0xd0] sm:$0xff]
    %v1095 = vld [vmem:[%s3 + $0xd8] sm:$0xff]
    %v1096 = vld [vmem:[%s3 + $0xe0] sm:$0xff]
    %v1097 = vld [vmem:[%s3 + $0xe8] sm:$0xff]
    %v1098 = vld [vmem:[%s3 + $0xf0] sm:$0xff]
    %v1099 = vld [vmem:[%s3 + $0xf8] sm:$0xff]
    %v1100 = vld [vmem:[%s3 + $0x100] sm:$0xff]
    %v1101 = vld [vmem:[%s3 + $0x108] sm:$0xff]
    %v1102 = vld [vmem:[%s3 + $0x110] sm:$0xff]
    %v1103 = vld [vmem:[%s3 + $0x118] sm:$0xff]
    %v1104 = vld [vmem:[%s3 + $0x120] sm:$0xff]
    %v1105 = vld [vmem:[%s3 + $0x128] sm:$0xff]
    %v1106 = vld [vmem:[%s3 + $0x130] sm:$0xff]
    %v1107 = vld [vmem:[%s3 + $0x138] sm:$0xff]
    %v1108 = vld [vmem:[%s3 + $0x140] sm:$0xff]
    %v1109 = vld [vmem:[%s3 + $0x148] sm:$0xff]
    %v1110 = vld [vmem:[%s3 + $0x150] sm:$0xff]
    %v1111 = vld [vmem:[%s3 + $0x158] sm:$0xff]
    %v1112 = vld [vmem:[%s3 + $0x160] sm:$0xff]
    %v1113 = vld [vmem:[%s3 + $0x168] sm:$0xff]
    %v1114 = vld [vmem:[%s3 + $0x170] sm:$0xff]
    %v1115 = vld [vmem:[%s3 + $0x178] sm:$0xff]
    %v1116 = vld [vmem:[%s3 + $0x180] sm:$0xff]
    %v1117 = vld [vmem:[%s3 + $0x188] sm:$0xff]
    %v1118 = vld [vmem:[%s3 + $0x190] sm:$0xff]
    %v1119 = vld [vmem:[%s3 + $0x198] sm:$0xff]
    %v1120 = vld [vmem:[%s3 + $0x1a0] sm:$0xff]
    %v1121 = vld [vmem:[%s3 + $0x1a8] sm:$0xff]
    %v1122 = vld [vmem:[%s3 + $0x1b0] sm:$0xff]
    %v1123 = vld [vmem:[%s3 + $0x1b8] sm:$0xff]
    %v1124 = vld [vmem:[%s3 + $0x1c0] sm:$0xff]
    %v1125 = vld [vmem:[%s3 + $0x1c8] sm:$0xff]
    %v1126 = vld [vmem:[%s3 + $0x1d0] sm:$0xff]
    %v1127 = vld [vmem:[%s3 + $0x1d8] sm:$0xff]
    %v1128 = vld [vmem:[%s3 + $0x1e0] sm:$0xff]
    %v1129 = vld [vmem:[%s3 + $0x1e8] sm:$0xff]
    %v1130 = vld [vmem:[%s3 + $0x1f0] sm:$0xff]
    %v1131 = vld [vmem:[%s3 + $0x1f8] sm:$0xff]
    %1132 = vmatprep.subr.mxu0 0.0
    %1133 = vmatpush1.msra.mxu0 %v1083
    %1134 = vmatprep.subr.mxu0 0.0
    %1135 = vmatpush1.msra.mxu0 %v1082
    %1136 = vmatprep.subr.mxu0 0.0
    %1137 = vmatpush1.msra.mxu0 %v1081
    %1138 = vmatprep.subr.mxu0 0.0
    %1139 = vmatpush1.msra.mxu0 %v1080
    %1140 = vmatprep.subr.mxu0 0.0
    %1141 = vmatpush1.msra.mxu0 %v1079
    %1142 = vmatprep.subr.mxu0 0.0
    %1143 = vmatpush1.msra.mxu0 %v1078
    %1144 = vmatprep.subr.mxu0 0.0
    %1145 = vmatpush1.msra.mxu0 %v1077
    %1146 = vmatprep.subr.mxu0 0.0
    %1147 = vmatpush1.msra.mxu0 %v1076
    %1148 = vmatprep.subr.mxu0 0.0
    %1149 = vmatpush1.msra.mxu0 %v1075
    %1150 = vmatprep.subr.mxu0 0.0
    %1151 = vmatpush1.msra.mxu0 %v1074
    %1152 = vmatprep.subr.mxu0 0.0
    %1153 = vmatpush1.msra.mxu0 %v1073
    %1154 = vmatprep.subr.mxu0 0.0
    %1155 = vmatpush1.msra.mxu0 %v1072
    %1156 = vmatprep.subr.mxu0 0.0
    %1157 = vmatpush1.msra.mxu0 %v1071
    %1158 = vmatprep.subr.mxu0 0.0
    %1159 = vmatpush1.msra.mxu0 %v1070
    %1160 = vmatprep.subr.mxu0 0.0
    %1161 = vmatpush1.msra.mxu0 %v1069
    %1162 = vmatprep.subr.mxu0 0.0
    %1163 = vmatpush1.msra.mxu0 %v1068
    %1164 = vmatprep.subr.mxu0 0.0
    %1165 = vmatpush2.msra.mxu0 %v1099
    %1166 = vmatprep.subr.mxu0 0.0
    %1167 = vmatpush2.msra.mxu0 %v1098
    %1168 = vmatprep.subr.mxu0 0.0
    %1169 = vmatpush2.msra.mxu0 %v1097
    %1170 = vmatprep.subr.mxu0 0.0
    %1171 = vmatpush2.msra.mxu0 %v1096
    %1172 = vmatprep.subr.mxu0 0.0
    %1173 = vmatpush2.msra.mxu0 %v1095
    %1174 = vmatprep.subr.mxu0 0.0
    %1175 = vmatpush2.msra.mxu0 %v1094
    %1176 = vmatprep.subr.mxu0 0.0
    %1177 = vmatpush2.msra.mxu0 %v1093
    %1178 = vmatprep.subr.mxu0 0.0
    %1179 = vmatpush2.msra.mxu0 %v1092
    %1180 = vmatprep.subr.mxu0 0.0
    %1181 = vmatpush2.msra.mxu0 %v1091
    %1182 = vmatprep.subr.mxu0 0.0
    %1183 = vmatpush2.msra.mxu0 %v1090
    %1184 = vmatprep.subr.mxu0 0.0
    %1185 = vmatpush2.msra.mxu0 %v1089
    %1186 = vmatprep.subr.mxu0 0.0
    %1187 = vmatpush2.msra.mxu0 %v1088
    %1188 = vmatprep.subr.mxu0 0.0
    %1189 = vmatpush2.msra.mxu0 %v1087
    %1190 = vmatprep.subr.mxu0 0.0
    %1191 = vmatpush2.msra.mxu0 %v1086
    %1192 = vmatprep.subr.mxu0 0.0
    %1193 = vmatpush2.msra.mxu0 %v1085
    %1194 = vmatprep.subr.mxu0 0.0
    %1195 = vmatpush2.msra.mxu0 %v1084
    %1196 = vmatprep.mubr.f32.mxu0 %v1061
    %1197 = vmatmul.mubr.f32.gmra.mxu0 %v1060
    %v1198 = vpop.f32.mrf.mxu0
    %v1199 = vadd.f32 0.0, %v1198
    %v1200 = vpop.f32.mrf.mxu0
    %1201 = vmatprep.mubr.f32.mxu0 %v1065
    %1202 = vmatmul.mubr.f32.gmra.mxu0 %v1064
    %v1203 = vpop.f32.mrf.mxu0
    %v1204 = vadd.f32 0.0, %v1203
    %v1205 = vpop.f32.mrf.mxu0
    %1206 = vdwg.mxu0
    %1207 = vmatprep.subr.mxu0 0.0
    %1208 = vmatpush1.msra.mxu0 %v1115
    %1209 = vmatprep.subr.mxu0 0.0
    %1210 = vmatpush1.msra.mxu0 %v1114
    %1211 = vmatprep.subr.mxu0 0.0
    %1212 = vmatpush1.msra.mxu0 %v1113
    %1213 = vmatprep.subr.mxu0 0.0
    %1214 = vmatpush1.msra.mxu0 %v1112
    %1215 = vmatprep.subr.mxu0 0.0
    %1216 = vmatpush1.msra.mxu0 %v1111
    %1217 = vmatprep.subr.mxu0 0.0
    %1218 = vmatpush1.msra.mxu0 %v1110
    %1219 = vmatprep.subr.mxu0 0.0
    %1220 = vmatpush1.msra.mxu0 %v1109
    %1221 = vmatprep.subr.mxu0 0.0
    %1222 = vmatpush1.msra.mxu0 %v1108
    %1223 = vmatprep.subr.mxu0 0.0
    %1224 = vmatpush1.msra.mxu0 %v1107
    %1225 = vmatprep.subr.mxu0 0.0
    %1226 = vmatpush1.msra.mxu0 %v1106
    %1227 = vmatprep.subr.mxu0 0.0
    %1228 = vmatpush1.msra.mxu0 %v1105
    %1229 = vmatprep.subr.mxu0 0.0
    %1230 = vmatpush1.msra.mxu0 %v1104
    %1231 = vmatprep.subr.mxu0 0.0
    %1232 = vmatpush1.msra.mxu0 %v1103
    %1233 = vmatprep.subr.mxu0 0.0
    %1234 = vmatpush1.msra.mxu0 %v1102
    %1235 = vmatprep.subr.mxu0 0.0
    %1236 = vmatpush1.msra.mxu0 %v1101
    %1237 = vmatprep.subr.mxu0 0.0
    %1238 = vmatpush1.msra.mxu0 %v1100
    %1239 = vmatprep.subr.mxu0 0.0
    %1240 = vmatpush2.msra.mxu0 %v1131
    %1241 = vmatprep.subr.mxu0 0.0
    %1242 = vmatpush2.msra.mxu0 %v1130
    %1243 = vmatprep.subr.mxu0 0.0
    %1244 = vmatpush2.msra.mxu0 %v1129
    %1245 = vmatprep.subr.mxu0 0.0
    %1246 = vmatpush2.msra.mxu0 %v1128
    %1247 = vmatprep.subr.mxu0 0.0
    %1248 = vmatpush2.msra.mxu0 %v1127
    %1249 = vmatprep.subr.mxu0 0.0
    %1250 = vmatpush2.msra.mxu0 %v1126
    %1251 = vmatprep.subr.mxu0 0.0
    %1252 = vmatpush2.msra.mxu0 %v1125
    %1253 = vmatprep.subr.mxu0 0.0
    %1254 = vmatpush2.msra.mxu0 %v1124
    %1255 = vmatprep.subr.mxu0 0.0
    %1256 = vmatpush2.msra.mxu0 %v1123
    %1257 = vmatprep.subr.mxu0 0.0
    %1258 = vmatpush2.msra.mxu0 %v1122
    %1259 = vmatprep.subr.mxu0 0.0
    %1260 = vmatpush2.msra.mxu0 %v1121
    %1261 = vmatprep.subr.mxu0 0.0
    %1262 = vmatpush2.msra.mxu0 %v1120
    %1263 = vmatprep.subr.mxu0 0.0
    %1264 = vmatpush2.msra.mxu0 %v1119
    %1265 = vmatprep.subr.mxu0 0.0
    %1266 = vmatpush2.msra.mxu0 %v1118
    %1267 = vmatprep.subr.mxu0 0.0
    %1268 = vmatpush2.msra.mxu0 %v1117
    %1269 = vmatprep.subr.mxu0 0.0
    %1270 = vmatpush2.msra.mxu0 %v1116
    %1271 = vmatprep.mubr.f32.mxu0 %v1063
    %1272 = vmatmul.mubr.f32.gmra.mxu0 %v1062
    %v1273 = vpop.f32.mrf.mxu0
    %v1274 = vadd.f32 %v1199, %v1273
    %v1275 = vpop.f32.mrf.mxu0
    %1276 = vmatprep.mubr.f32.mxu0 %v1067
    %1277 = vmatmul.mubr.f32.gmra.mxu0 %v1066
    %v1278 = vpop.f32.mrf.mxu0
    %v1279 = vadd.f32 %v1204, %v1278
    %v1280 = vpop.f32.mrf.mxu0
    %1281 = vdwg.mxu0
    %v1282 = vld [vmem:[#allocation9] sm:$0xff]
    %v1283 = vld [vmem:[#allocation9 + $0x8] sm:$0xff]
    %v1284 = vld [vmem:[#allocation9 + $0x10] sm:$0xff]
    %v1285 = vld [vmem:[#allocation9 + $0x18] sm:$0xff]
    %v1286 = vld [vmem:[#allocation9 + $0x20] sm:$0xff]
    %v1287 = vld [vmem:[#allocation9 + $0x28] sm:$0xff]
    %v1288 = vld [vmem:[#allocation9 + $0x30] sm:$0xff]
    %v1289 = vld [vmem:[#allocation9 + $0x38] sm:$0xff]
    %vm1290 = vcmask 523264
    %v1292 = vsel %vm1290, %v1274, 0
    %v1295 = vsel %vm1290, %v1279, 0
    %1297 = vmatprep.subr.mxu0 0.0
    %1298 = vmatpush1.msra.mxu0 0.0
    %1299 = vmatprep.subr.mxu0 0.0
    %1300 = vmatpush1.msra.mxu0 0.0
    %1301 = vmatprep.subr.mxu0 0.0
    %1302 = vmatpush1.msra.mxu0 0.0
    %1303 = vmatprep.subr.mxu0 0.0
    %1304 = vmatpush1.msra.mxu0 0.0
    %1305 = vmatprep.subr.mxu0 0.0
    %1306 = vmatpush1.msra.mxu0 0.0
    %1307 = vmatprep.subr.mxu0 0.0
    %1308 = vmatpush1.msra.mxu0 0.0
    %1309 = vmatprep.subr.mxu0 0.0
    %1310 = vmatpush1.msra.mxu0 0.0
    %1311 = vmatprep.subr.mxu0 0.0
    %1312 = vmatpush1.msra.mxu0 0.0
    %1313 = vmatprep.subr.mxu0 0.0
    %1314 = vmatpush1.msra.mxu0 %v1289
    %1315 = vmatprep.subr.mxu0 0.0
    %1316 = vmatpush1.msra.mxu0 %v1288
    %1317 = vmatprep.subr.mxu0 0.0
    %1318 = vmatpush1.msra.mxu0 %v1287
    %1319 = vmatprep.subr.mxu0 0.0
    %1320 = vmatpush1.msra.mxu0 %v1286
    %1321 = vmatprep.subr.mxu0 0.0
    %1322 = vmatpush1.msra.mxu0 %v1285
    %1323 = vmatprep.subr.mxu0 0.0
    %1324 = vmatpush1.msra.mxu0 %v1284
    %1325 = vmatprep.subr.mxu0 0.0
    %1326 = vmatpush1.msra.mxu0 %v1283
    %1327 = vmatprep.subr.mxu0 0.0
    %1328 = vmatpush1.msra.mxu0 %v1282
    %1329 = vmatprep.subr.mxu0 0.0
    %1330 = vmatpush2.msra.mxu0 0.0
    %1331 = vmatprep.subr.mxu0 0.0
    %1332 = vmatpush2.msra.mxu0 0.0
    %1333 = vmatprep.subr.mxu0 0.0
    %1334 = vmatpush2.msra.mxu0 0.0
    %1335 = vmatprep.subr.mxu0 0.0
    %1336 = vmatpush2.msra.mxu0 0.0
    %1337 = vmatprep.subr.mxu0 0.0
    %1338 = vmatpush2.msra.mxu0 0.0
    %1339 = vmatprep.subr.mxu0 0.0
    %1340 = vmatpush2.msra.mxu0 0.0
    %1341 = vmatprep.subr.mxu0 0.0
    %1342 = vmatpush2.msra.mxu0 0.0
    %1343 = vmatprep.subr.mxu0 0.0
    %1344 = vmatpush2.msra.mxu0 0.0
    %1345 = vmatprep.subr.mxu0 0.0
    %1346 = vmatpush2.msra.mxu0 0.0
    %1347 = vmatprep.subr.mxu0 0.0
    %1348 = vmatpush2.msra.mxu0 0.0
    %1349 = vmatprep.subr.mxu0 0.0
    %1350 = vmatpush2.msra.mxu0 0.0
    %1351 = vmatprep.subr.mxu0 0.0
    %1352 = vmatpush2.msra.mxu0 0.0
    %1353 = vmatprep.subr.mxu0 0.0
    %1354 = vmatpush2.msra.mxu0 0.0
    %1355 = vmatprep.subr.mxu0 0.0
    %1356 = vmatpush2.msra.mxu0 0.0
    %1357 = vmatprep.subr.mxu0 0.0
    %1358 = vmatpush2.msra.mxu0 0.0
    %1359 = vmatprep.subr.mxu0 0.0
    %1360 = vmatpush2.msra.mxu0 0.0
    %1361 = vmatprep.mubr.f32.mxu0 0.0
    %1362 = vmatmul.mubr.f32.gmra.mxu0 %v1292
    %v1363 = vpop.f32.mrf.mxu0
    %v1364 = vadd.f32 0.0, %v1363
    %v1365 = vpop.f32.mrf.mxu0
    %1366 = vmatprep.mubr.f32.mxu0 0.0
    %1367 = vmatmul.mubr.f32.gmra.mxu0 %v1295
    %v1368 = vpop.f32.mrf.mxu0
    %v1369 = vadd.f32 0.0, %v1368
    %v1370 = vpop.f32.mrf.mxu0
    %1371 = vdwg.mxu0
    %v1372 = vmax.f32 %v1274, %v1364
    %v1373 = vmax.f32 %v1279, %v1369
    %s1374 = scalar_lea.vmem [#allocation9], 64
    %v1375 = vld [vmem:[%s1374] sm:$0xff]
    %v1376 = vld [vmem:[%s1374 + $0x8] sm:$0xff]
    %v1377 = vld [vmem:[%s1374 + $0x10] sm:$0xff]
    %v1378 = vld [vmem:[%s1374 + $0x18] sm:$0xff]
    %v1379 = vld [vmem:[%s1374 + $0x20] sm:$0xff]
    %v1380 = vld [vmem:[%s1374 + $0x28] sm:$0xff]
    %v1381 = vld [vmem:[%s1374 + $0x30] sm:$0xff]
    %v1382 = vld [vmem:[%s1374 + $0x38] sm:$0xff]
    %v1384 = vsel %vm1290, %v1372, 0
    %v1387 = vsel %vm1290, %v1373, 0
    %1389 = vmatprep.subr.mxu0 0.0
    %1390 = vmatpush1.msra.mxu0 0.0
    %1391 = vmatprep.subr.mxu0 0.0
    %1392 = vmatpush1.msra.mxu0 0.0
    %1393 = vmatprep.subr.mxu0 0.0
    %1394 = vmatpush1.msra.mxu0 0.0
    %1395 = vmatprep.subr.mxu0 0.0
    %1396 = vmatpush1.msra.mxu0 0.0
    %1397 = vmatprep.subr.mxu0 0.0
    %1398 = vmatpush1.msra.mxu0 0.0
    %1399 = vmatprep.subr.mxu0 0.0
    %1400 = vmatpush1.msra.mxu0 0.0
    %1401 = vmatprep.subr.mxu0 0.0
    %1402 = vmatpush1.msra.mxu0 0.0
    %1403 = vmatprep.subr.mxu0 0.0
    %1404 = vmatpush1.msra.mxu0 0.0
    %1405 = vmatprep.subr.mxu0 0.0
    %1406 = vmatpush1.msra.mxu0 %v1382
    %1407 = vmatprep.subr.mxu0 0.0
    %1408 = vmatpush1.msra.mxu0 %v1381
    %1409 = vmatprep.subr.mxu0 0.0
    %1410 = vmatpush1.msra.mxu0 %v1380
    %1411 = vmatprep.subr.mxu0 0.0
    %1412 = vmatpush1.msra.mxu0 %v1379
    %1413 = vmatprep.subr.mxu0 0.0
    %1414 = vmatpush1.msra.mxu0 %v1378
    %1415 = vmatprep.subr.mxu0 0.0
    %1416 = vmatpush1.msra.mxu0 %v1377
    %1417 = vmatprep.subr.mxu0 0.0
    %1418 = vmatpush1.msra.mxu0 %v1376
    %1419 = vmatprep.subr.mxu0 0.0
    %1420 = vmatpush1.msra.mxu0 %v1375
    %1421 = vmatprep.subr.mxu0 0.0
    %1422 = vmatpush2.msra.mxu0 0.0
    %1423 = vmatprep.subr.mxu0 0.0
    %1424 = vmatpush2.msra.mxu0 0.0
    %1425 = vmatprep.subr.mxu0 0.0
    %1426 = vmatpush2.msra.mxu0 0.0
    %1427 = vmatprep.subr.mxu0 0.0
    %1428 = vmatpush2.msra.mxu0 0.0
    %1429 = vmatprep.subr.mxu0 0.0
    %1430 = vmatpush2.msra.mxu0 0.0
    %1431 = vmatprep.subr.mxu0 0.0
    %1432 = vmatpush2.msra.mxu0 0.0
    %1433 = vmatprep.subr.mxu0 0.0
    %1434 = vmatpush2.msra.mxu0 0.0
    %1435 = vmatprep.subr.mxu0 0.0
    %1436 = vmatpush2.msra.mxu0 0.0
    %1437 = vmatprep.subr.mxu0 0.0
    %1438 = vmatpush2.msra.mxu0 0.0
    %1439 = vmatprep.subr.mxu0 0.0
    %1440 = vmatpush2.msra.mxu0 0.0
    %1441 = vmatprep.subr.mxu0 0.0
    %1442 = vmatpush2.msra.mxu0 0.0
    %1443 = vmatprep.subr.mxu0 0.0
    %1444 = vmatpush2.msra.mxu0 0.0
    %1445 = vmatprep.subr.mxu0 0.0
    %1446 = vmatpush2.msra.mxu0 0.0
    %1447 = vmatprep.subr.mxu0 0.0
    %1448 = vmatpush2.msra.mxu0 0.0
    %1449 = vmatprep.subr.mxu0 0.0
    %1450 = vmatpush2.msra.mxu0 0.0
    %1451 = vmatprep.subr.mxu0 0.0
    %1452 = vmatpush2.msra.mxu0 0.0
    %1453 = vmatprep.mubr.f32.mxu0 0.0
    %1454 = vmatmul.mubr.f32.gmra.mxu0 %v1384
    %v1455 = vpop.f32.mrf.mxu0
    %v1456 = vadd.f32 0.0, %v1455
    %v1457 = vpop.f32.mrf.mxu0
    %1458 = vmatprep.mubr.f32.mxu0 0.0
    %1459 = vmatmul.mubr.f32.gmra.mxu0 %v1387
    %v1460 = vpop.f32.mrf.mxu0
    %v1461 = vadd.f32 0.0, %v1460
    %v1462 = vpop.f32.mrf.mxu0
    %1463 = vdwg.mxu0
    %v1464 = vmax.f32 %v1372, %v1456
    %v1465 = vmax.f32 %v1373, %v1461
    %v1466 = vsub.f32 %v1274, %v1464
    %v1467 = vsub.f32 %v1279, %v1465
    %v1468 = vmul.f32 %v1466, 1.442695
    %v1469 = vpow.pop %v1468
    %v1470 = vmul.f32 %v1467, 1.442695
    %v1471 = vpow.pop %v1470
    %v1472 = vld [vmem:[#allocation8] sm:$0xff]
    %v1473 = vld [vmem:[#allocation8 + $0x8] sm:$0xff]
    %v1474 = vld [vmem:[#allocation8 + $0x10] sm:$0xff]
    %v1475 = vld [vmem:[#allocation8 + $0x18] sm:$0xff]
    %v1476 = vld [vmem:[#allocation8 + $0x20] sm:$0xff]
    %v1477 = vld [vmem:[#allocation8 + $0x28] sm:$0xff]
    %v1478 = vld [vmem:[#allocation8 + $0x30] sm:$0xff]
    %v1479 = vld [vmem:[#allocation8 + $0x38] sm:$0xff]
    %v1481 = vsel %vm1290, %v1469, 0
    %v1484 = vsel %vm1290, %v1471, 0
    %1486 = vmatprep.subr.mxu0 0.0
    %1487 = vmatpush1.msra.mxu0 0.0
    %1488 = vmatprep.subr.mxu0 0.0
    %1489 = vmatpush1.msra.mxu0 0.0
    %1490 = vmatprep.subr.mxu0 0.0
    %1491 = vmatpush1.msra.mxu0 0.0
    %1492 = vmatprep.subr.mxu0 0.0
    %1493 = vmatpush1.msra.mxu0 0.0
    %1494 = vmatprep.subr.mxu0 0.0
    %1495 = vmatpush1.msra.mxu0 0.0
    %1496 = vmatprep.subr.mxu0 0.0
    %1497 = vmatpush1.msra.mxu0 0.0
    %1498 = vmatprep.subr.mxu0 0.0
    %1499 = vmatpush1.msra.mxu0 0.0
    %1500 = vmatprep.subr.mxu0 0.0
    %1501 = vmatpush1.msra.mxu0 0.0
    %1502 = vmatprep.subr.mxu0 0.0
    %1503 = vmatpush1.msra.mxu0 %v1479
    %1504 = vmatprep.subr.mxu0 0.0
    %1505 = vmatpush1.msra.mxu0 %v1478
    %1506 = vmatprep.subr.mxu0 0.0
    %1507 = vmatpush1.msra.mxu0 %v1477
    %1508 = vmatprep.subr.mxu0 0.0
    %1509 = vmatpush1.msra.mxu0 %v1476
    %1510 = vmatprep.subr.mxu0 0.0
    %1511 = vmatpush1.msra.mxu0 %v1475
    %1512 = vmatprep.subr.mxu0 0.0
    %1513 = vmatpush1.msra.mxu0 %v1474
    %1514 = vmatprep.subr.mxu0 0.0
    %1515 = vmatpush1.msra.mxu0 %v1473
    %1516 = vmatprep.subr.mxu0 0.0
    %1517 = vmatpush1.msra.mxu0 %v1472
    %1518 = vmatprep.subr.mxu0 0.0
    %1519 = vmatpush2.msra.mxu0 0.0
    %1520 = vmatprep.subr.mxu0 0.0
    %1521 = vmatpush2.msra.mxu0 0.0
    %1522 = vmatprep.subr.mxu0 0.0
    %1523 = vmatpush2.msra.mxu0 0.0
    %1524 = vmatprep.subr.mxu0 0.0
    %1525 = vmatpush2.msra.mxu0 0.0
    %1526 = vmatprep.subr.mxu0 0.0
    %1527 = vmatpush2.msra.mxu0 0.0
    %1528 = vmatprep.subr.mxu0 0.0
    %1529 = vmatpush2.msra.mxu0 0.0
    %1530 = vmatprep.subr.mxu0 0.0
    %1531 = vmatpush2.msra.mxu0 0.0
    %1532 = vmatprep.subr.mxu0 0.0
    %1533 = vmatpush2.msra.mxu0 0.0
    %1534 = vmatprep.subr.mxu0 0.0
    %1535 = vmatpush2.msra.mxu0 0.0
    %1536 = vmatprep.subr.mxu0 0.0
    %1537 = vmatpush2.msra.mxu0 0.0
    %1538 = vmatprep.subr.mxu0 0.0
    %1539 = vmatpush2.msra.mxu0 0.0
    %1540 = vmatprep.subr.mxu0 0.0
    %1541 = vmatpush2.msra.mxu0 0.0
    %1542 = vmatprep.subr.mxu0 0.0
    %1543 = vmatpush2.msra.mxu0 0.0
    %1544 = vmatprep.subr.mxu0 0.0
    %1545 = vmatpush2.msra.mxu0 0.0
    %1546 = vmatprep.subr.mxu0 0.0
    %1547 = vmatpush2.msra.mxu0 0.0
    %1548 = vmatprep.subr.mxu0 0.0
    %1549 = vmatpush2.msra.mxu0 0.0
    %1550 = vmatprep.mubr.f32.mxu0 0.0
    %1551 = vmatmul.mubr.f32.gmra.mxu0 %v1481
    %v1552 = vpop.f32.mrf.mxu0
    %v1553 = vadd.f32 0.0, %v1552
    %v1554 = vpop.f32.mrf.mxu0
    %1555 = vmatprep.mubr.f32.mxu0 0.0
    %1556 = vmatmul.mubr.f32.gmra.mxu0 %v1484
    %v1557 = vpop.f32.mrf.mxu0
    %v1558 = vadd.f32 0.0, %v1557
    %v1559 = vpop.f32.mrf.mxu0
    %1560 = vdwg.mxu0
    %v1561 = vrcp.pop %v1553
    %v1562 = vrcp.pop %v1558
    %v1563 = vmul.f32 %v1469, %v1561
    %v1564 = vmul.f32 %v1471, %v1562
    %v1565 = vld [vmem:[#allocation11] sm:$0xff]
    %v1566 = vld [vmem:[#allocation11 + $0x8] sm:$0xff]
    %v1567 = vld [vmem:[#allocation11 + $0x10] sm:$0xff]
    %v1568 = vld [vmem:[#allocation11 + $0x18] sm:$0xff]
    %v1569 = vld [vmem:[#allocation11 + $0x20] sm:$0xff]
    %v1570 = vld [vmem:[#allocation11 + $0x28] sm:$0xff]
    %v1571 = vld [vmem:[#allocation11 + $0x30] sm:$0xff]
    %v1572 = vld [vmem:[#allocation11 + $0x38] sm:$0xff]
    %v1573 = vld [vmem:[#allocation11 + $0x40] sm:$0xff]
    %v1574 = vld [vmem:[#allocation11 + $0x48] sm:$0xff]
    %v1575 = vld [vmem:[#allocation11 + $0x50] sm:$0xff]
    %v1576 = vld [vmem:[#allocation11 + $0x58] sm:$0xff]
    %v1577 = vld [vmem:[#allocation11 + $0x60] sm:$0xff]
    %v1578 = vld [vmem:[#allocation11 + $0x68] sm:$0xff]
    %v1579 = vld [vmem:[#allocation11 + $0x70] sm:$0xff]
    %v1580 = vld [vmem:[#allocation11 + $0x78] sm:$0xff]
    %v1581 = vld [vmem:[#allocation11 + $0x80] sm:$0xff]
    %v1582 = vld [vmem:[#allocation11 + $0x88] sm:$0xff]
    %v1583 = vld [vmem:[#allocation11 + $0x90] sm:$0xff]
    %v1584 = vld [vmem:[#allocation11 + $0x98] sm:$0xff]
    %v1585 = vld [vmem:[#allocation11 + $0xa0] sm:$0xff]
    %v1586 = vld [vmem:[#allocation11 + $0xa8] sm:$0xff]
    %v1587 = vld [vmem:[#allocation11 + $0xb0] sm:$0xff]
    %v1588 = vld [vmem:[#allocation11 + $0xb8] sm:$0xff]
    %v1589 = vld [vmem:[#allocation11 + $0xc0] sm:$0xff]
    %v1590 = vld [vmem:[#allocation11 + $0xc8] sm:$0xff]
    %v1591 = vld [vmem:[#allocation11 + $0xd0] sm:$0xff]
    %v1592 = vld [vmem:[#allocation11 + $0xd8] sm:$0xff]
    %v1593 = vld [vmem:[#allocation11 + $0xe0] sm:$0xff]
    %v1594 = vld [vmem:[#allocation11 + $0xe8] sm:$0xff]
    %v1595 = vld [vmem:[#allocation11 + $0xf0] sm:$0xff]
    %v1596 = vld [vmem:[#allocation11 + $0xf8] sm:$0xff]
    %v1598 = vsel %vm1290, %v1563, 0
    %v1601 = vsel %vm1290, %v1564, 0
    %1603 = vmatprep.subr.mxu0 0.0
    %1604 = vmatpush1.msra.mxu0 0.0
    %1605 = vmatprep.subr.mxu0 0.0
    %1606 = vmatpush1.msra.mxu0 0.0
    %1607 = vmatprep.subr.mxu0 0.0
    %1608 = vmatpush1.msra.mxu0 0.0
    %1609 = vmatprep.subr.mxu0 0.0
    %1610 = vmatpush1.msra.mxu0 0.0
    %1611 = vmatprep.subr.mxu0 0.0
    %1612 = vmatpush1.msra.mxu0 0.0
    %1613 = vmatprep.subr.mxu0 0.0
    %1614 = vmatpush1.msra.mxu0 0.0
    %1615 = vmatprep.subr.mxu0 0.0
    %1616 = vmatpush1.msra.mxu0 0.0
    %1617 = vmatprep.subr.mxu0 0.0
    %1618 = vmatpush1.msra.mxu0 0.0
    %1619 = vmatprep.subr.mxu0 %v1594
    %1620 = vmatpush1.msra.mxu0 %v1593
    %1621 = vmatprep.subr.mxu0 %v1590
    %1622 = vmatpush1.msra.mxu0 %v1589
    %1623 = vmatprep.subr.mxu0 %v1586
    %1624 = vmatpush1.msra.mxu0 %v1585
    %1625 = vmatprep.subr.mxu0 %v1582
    %1626 = vmatpush1.msra.mxu0 %v1581
    %1627 = vmatprep.subr.mxu0 %v1578
    %1628 = vmatpush1.msra.mxu0 %v1577
    %1629 = vmatprep.subr.mxu0 %v1574
    %1630 = vmatpush1.msra.mxu0 %v1573
    %1631 = vmatprep.subr.mxu0 %v1570
    %1632 = vmatpush1.msra.mxu0 %v1569
    %1633 = vmatprep.subr.mxu0 %v1566
    %1634 = vmatpush1.msra.mxu0 %v1565
    %1635 = vmatprep.subr.mxu0 0.0
    %1636 = vmatpush2.msra.mxu0 0.0
    %1637 = vmatprep.subr.mxu0 0.0
    %1638 = vmatpush2.msra.mxu0 0.0
    %1639 = vmatprep.subr.mxu0 0.0
    %1640 = vmatpush2.msra.mxu0 0.0
    %1641 = vmatprep.subr.mxu0 0.0
    %1642 = vmatpush2.msra.mxu0 0.0
    %1643 = vmatprep.subr.mxu0 0.0
    %1644 = vmatpush2.msra.mxu0 0.0
    %1645 = vmatprep.subr.mxu0 0.0
    %1646 = vmatpush2.msra.mxu0 0.0
    %1647 = vmatprep.subr.mxu0 0.0
    %1648 = vmatpush2.msra.mxu0 0.0
    %1649 = vmatprep.subr.mxu0 0.0
    %1650 = vmatpush2.msra.mxu0 0.0
    %1651 = vmatprep.subr.mxu0 0.0
    %1652 = vmatpush2.msra.mxu0 0.0
    %1653 = vmatprep.subr.mxu0 0.0
    %1654 = vmatpush2.msra.mxu0 0.0
    %1655 = vmatprep.subr.mxu0 0.0
    %1656 = vmatpush2.msra.mxu0 0.0
    %1657 = vmatprep.subr.mxu0 0.0
    %1658 = vmatpush2.msra.mxu0 0.0
    %1659 = vmatprep.subr.mxu0 0.0
    %1660 = vmatpush2.msra.mxu0 0.0
    %1661 = vmatprep.subr.mxu0 0.0
    %1662 = vmatpush2.msra.mxu0 0.0
    %1663 = vmatprep.subr.mxu0 0.0
    %1664 = vmatpush2.msra.mxu0 0.0
    %1665 = vmatprep.subr.mxu0 0.0
    %1666 = vmatpush2.msra.mxu0 0.0
    %1667 = vmatprep.mubr.f32.mxu0 0.0
    %1668 = vmatmul.mubr.f32.gmra.mxu0 %v1598
    %v1669 = vpop.f32.mrf.mxu0
    %v1670 = vadd.f32 0.0, %v1669
    %v1671 = vpop.f32.mrf.mxu0
    %v1672 = vadd.f32 0.0, %v1671
    %1673 = vmatprep.mubr.f32.mxu0 0.0
    %1674 = vmatmul.mubr.f32.gmra.mxu0 %v1601
    %v1675 = vpop.f32.mrf.mxu0
    %v1676 = vadd.f32 0.0, %v1675
    %v1677 = vpop.f32.mrf.mxu0
    %v1678 = vadd.f32 0.0, %v1677
    %1679 = vdwg.mxu0
    %1680 = vmatprep.subr.mxu0 0.0
    %1681 = vmatpush1.msra.mxu0 0.0
    %1682 = vmatprep.subr.mxu0 0.0
    %1683 = vmatpush1.msra.mxu0 0.0
    %1684 = vmatprep.subr.mxu0 0.0
    %1685 = vmatpush1.msra.mxu0 0.0
    %1686 = vmatprep.subr.mxu0 0.0
    %1687 = vmatpush1.msra.mxu0 0.0
    %1688 = vmatprep.subr.mxu0 0.0
    %1689 = vmatpush1.msra.mxu0 0.0
    %1690 = vmatprep.subr.mxu0 0.0
    %1691 = vmatpush1.msra.mxu0 0.0
    %1692 = vmatprep.subr.mxu0 0.0
    %1693 = vmatpush1.msra.mxu0 0.0
    %1694 = vmatprep.subr.mxu0 0.0
    %1695 = vmatpush1.msra.mxu0 0.0
    %1696 = vmatprep.subr.mxu0 %v1596
    %1697 = vmatpush1.msra.mxu0 %v1595
    %1698 = vmatprep.subr.mxu0 %v1592
    %1699 = vmatpush1.msra.mxu0 %v1591
    %1700 = vmatprep.subr.mxu0 %v1588
    %1701 = vmatpush1.msra.mxu0 %v1587
    %1702 = vmatprep.subr.mxu0 %v1584
    %1703 = vmatpush1.msra.mxu0 %v1583
    %1704 = vmatprep.subr.mxu0 %v1580
    %1705 = vmatpush1.msra.mxu0 %v1579
    %1706 = vmatprep.subr.mxu0 %v1576
    %1707 = vmatpush1.msra.mxu0 %v1575
    %1708 = vmatprep.subr.mxu0 %v1572
    %1709 = vmatpush1.msra.mxu0 %v1571
    %1710 = vmatprep.subr.mxu0 %v1568
    %1711 = vmatpush1.msra.mxu0 %v1567
    %1712 = vmatprep.subr.mxu0 0.0
    %1713 = vmatpush2.msra.mxu0 0.0
    %1714 = vmatprep.subr.mxu0 0.0
    %1715 = vmatpush2.msra.mxu0 0.0
    %1716 = vmatprep.subr.mxu0 0.0
    %1717 = vmatpush2.msra.mxu0 0.0
    %1718 = vmatprep.subr.mxu0 0.0
    %1719 = vmatpush2.msra.mxu0 0.0
    %1720 = vmatprep.subr.mxu0 0.0
    %1721 = vmatpush2.msra.mxu0 0.0
    %1722 = vmatprep.subr.mxu0 0.0
    %1723 = vmatpush2.msra.mxu0 0.0
    %1724 = vmatprep.subr.mxu0 0.0
    %1725 = vmatpush2.msra.mxu0 0.0
    %1726 = vmatprep.subr.mxu0 0.0
    %1727 = vmatpush2.msra.mxu0 0.0
    %1728 = vmatprep.subr.mxu0 0.0
    %1729 = vmatpush2.msra.mxu0 0.0
    %1730 = vmatprep.subr.mxu0 0.0
    %1731 = vmatpush2.msra.mxu0 0.0
    %1732 = vmatprep.subr.mxu0 0.0
    %1733 = vmatpush2.msra.mxu0 0.0
    %1734 = vmatprep.subr.mxu0 0.0
    %1735 = vmatpush2.msra.mxu0 0.0
    %1736 = vmatprep.subr.mxu0 0.0
    %1737 = vmatpush2.msra.mxu0 0.0
    %1738 = vmatprep.subr.mxu0 0.0
    %1739 = vmatpush2.msra.mxu0 0.0
    %1740 = vmatprep.subr.mxu0 0.0
    %1741 = vmatpush2.msra.mxu0 0.0
    %1742 = vmatprep.subr.mxu0 0.0
    %1743 = vmatpush2.msra.mxu0 0.0
    %1744 = vmatprep.mubr.f32.mxu0 0.0
    %1745 = vmatmul.mubr.f32.gmra.mxu0 %v1598
    %v1746 = vpop.f32.mrf.mxu0
    %v1747 = vadd.f32 0.0, %v1746
    %v1748 = vpop.f32.mrf.mxu0
    %v1749 = vadd.f32 0.0, %v1748
    %1750 = vmatprep.mubr.f32.mxu0 0.0
    %1751 = vmatmul.mubr.f32.gmra.mxu0 %v1601
    %v1752 = vpop.f32.mrf.mxu0
    %v1753 = vadd.f32 0.0, %v1752
    %v1754 = vpop.f32.mrf.mxu0
    %v1755 = vadd.f32 0.0, %v1754
    %1756 = vdwg.mxu0
    %v1757 = vld [vmem:[#allocation2 + $0x40] sm:$0xff]
    %v1758 = vld [vmem:[#allocation2 + $0x48] sm:$0xff]
    %v1759 = vld [vmem:[#allocation2 + $0x50] sm:$0xff]
    %v1760 = vld [vmem:[#allocation2 + $0x58] sm:$0xff]
    %v1761 = vld [vmem:[#allocation2 + $0xa0] sm:$0xff]
    %v1762 = vld [vmem:[#allocation2 + $0xa8] sm:$0xff]
    %v1763 = vld [vmem:[#allocation2 + $0xb0] sm:$0xff]
    %v1764 = vld [vmem:[#allocation2 + $0xb8] sm:$0xff]
    %v1765 = vmul.f32 %v1670, %v1757
    %v1766 = vmul.f32 %v1672, %v1758
    %v1767 = vmul.f32 %v1747, %v1759
    %v1768 = vmul.f32 %v1749, %v1760
    %v1769 = vmul.f32 %v1676, %v1761
    %v1770 = vmul.f32 %v1678, %v1762
    %v1771 = vmul.f32 %v1753, %v1763
    %v1772 = vmul.f32 %v1755, %v1764
    %v1773 = vpack.c.bf16 %v1769, %v1765
    %v1774 = vpack.c.bf16 %v1770, %v1766
    %v1775 = vpack.c.bf16 %v1771, %v1767
    %v1776 = vpack.c.bf16 %v1772, %v1768
    %v1777 = vld [vmem:[#allocation12] sm:$0xf]
    %v1778 = vld [vmem:[#allocation12 + $0x4] sm:$0xf]
    %v1779 = vld [vmem:[#allocation12 + $0x8] sm:$0xf]
    %v1780 = vld [vmem:[#allocation12 + $0xc] sm:$0xf]
    %v1781 = vld [vmem:[#allocation12 + $0x10] sm:$0xf]
    %v1782 = vld [vmem:[#allocation12 + $0x14] sm:$0xf]
    %v1783 = vld [vmem:[#allocation12 + $0x18] sm:$0xf]
    %v1784 = vld [vmem:[#allocation12 + $0x1c] sm:$0xf]
    %v1785 = vld [vmem:[#allocation12 + $0x20] sm:$0xf]
    %v1786 = vld [vmem:[#allocation12 + $0x24] sm:$0xf]
    %v1787 = vld [vmem:[#allocation12 + $0x28] sm:$0xf]
    %v1788 = vld [vmem:[#allocation12 + $0x2c] sm:$0xf]
    %v1789 = vld [vmem:[#allocation12 + $0x30] sm:$0xf]
    %v1790 = vld [vmem:[#allocation12 + $0x34] sm:$0xf]
    %v1791 = vld [vmem:[#allocation12 + $0x38] sm:$0xf]
    %v1792 = vld [vmem:[#allocation12 + $0x3c] sm:$0xf]
    %v1793 = vld [vmem:[#allocation12 + $0x40] sm:$0xf]
    %v1794 = vld [vmem:[#allocation12 + $0x44] sm:$0xf]
    %v1795 = vld [vmem:[#allocation12 + $0x48] sm:$0xf]
    %v1796 = vld [vmem:[#allocation12 + $0x4c] sm:$0xf]
    %v1797 = vld [vmem:[#allocation12 + $0x50] sm:$0xf]
    %v1798 = vld [vmem:[#allocation12 + $0x54] sm:$0xf]
    %v1799 = vld [vmem:[#allocation12 + $0x58] sm:$0xf]
    %v1800 = vld [vmem:[#allocation12 + $0x5c] sm:$0xf]
    %v1801 = vld [vmem:[#allocation12 + $0x60] sm:$0xf]
    %v1802 = vld [vmem:[#allocation12 + $0x64] sm:$0xf]
    %v1803 = vld [vmem:[#allocation12 + $0x68] sm:$0xf]
    %v1804 = vld [vmem:[#allocation12 + $0x6c] sm:$0xf]
    %v1805 = vld [vmem:[#allocation12 + $0x70] sm:$0xf]
    %v1806 = vld [vmem:[#allocation12 + $0x74] sm:$0xf]
    %v1807 = vld [vmem:[#allocation12 + $0x78] sm:$0xf]
    %v1808 = vld [vmem:[#allocation12 + $0x7c] sm:$0xf]
    %v1809 = vld [vmem:[#allocation12 + $0x80] sm:$0xf]
    %v1810 = vld [vmem:[#allocation12 + $0x84] sm:$0xf]
    %v1811 = vld [vmem:[#allocation12 + $0x88] sm:$0xf]
    %v1812 = vld [vmem:[#allocation12 + $0x8c] sm:$0xf]
    %v1813 = vld [vmem:[#allocation12 + $0x90] sm:$0xf]
    %v1814 = vld [vmem:[#allocation12 + $0x94] sm:$0xf]
    %v1815 = vld [vmem:[#allocation12 + $0x98] sm:$0xf]
    %v1816 = vld [vmem:[#allocation12 + $0x9c] sm:$0xf]
    %v1817 = vld [vmem:[#allocation12 + $0xa0] sm:$0xf]
    %v1818 = vld [vmem:[#allocation12 + $0xa4] sm:$0xf]
    %v1819 = vld [vmem:[#allocation12 + $0xa8] sm:$0xf]
    %v1820 = vld [vmem:[#allocation12 + $0xac] sm:$0xf]
    %v1821 = vld [vmem:[#allocation12 + $0xb0] sm:$0xf]
    %v1822 = vld [vmem:[#allocation12 + $0xb4] sm:$0xf]
    %v1823 = vld [vmem:[#allocation12 + $0xb8] sm:$0xf]
    %v1824 = vld [vmem:[#allocation12 + $0xbc] sm:$0xf]
    %v1825 = vld [vmem:[#allocation12 + $0xc0] sm:$0xf]
    %v1826 = vld [vmem:[#allocation12 + $0xc4] sm:$0xf]
    %v1827 = vld [vmem:[#allocation12 + $0xc8] sm:$0xf]
    %v1828 = vld [vmem:[#allocation12 + $0xcc] sm:$0xf]
    %v1829 = vld [vmem:[#allocation12 + $0xd0] sm:$0xf]
    %v1830 = vld [vmem:[#allocation12 + $0xd4] sm:$0xf]
    %v1831 = vld [vmem:[#allocation12 + $0xd8] sm:$0xf]
    %v1832 = vld [vmem:[#allocation12 + $0xdc] sm:$0xf]
    %v1833 = vld [vmem:[#allocation12 + $0xe0] sm:$0xf]
    %v1834 = vld [vmem:[#allocation12 + $0xe4] sm:$0xf]
    %v1835 = vld [vmem:[#allocation12 + $0xe8] sm:$0xf]
    %v1836 = vld [vmem:[#allocation12 + $0xec] sm:$0xf]
    %v1837 = vld [vmem:[#allocation12 + $0xf0] sm:$0xf]
    %v1838 = vld [vmem:[#allocation12 + $0xf4] sm:$0xf]
    %v1839 = vld [vmem:[#allocation12 + $0xf8] sm:$0xf]
    %v1840 = vld [vmem:[#allocation12 + $0xfc] sm:$0xf]
    %v1841 = vld [vmem:[%s8] sm:$0x1]
    %v1843 = vlaneseq
    %v1844 = vshrl.u32 %v1843, 7
    %v1845 = vsub.s32 0, %v1844
    %v1846 = vrot.slane %v1841, %v1845
    %v1912 = vunpack.c.l.b16 %v1777
    %v1913 = vunpack.c.l.b16 %v1778
    %v1914 = vunpack.c.l.b16 %v1779
    %v1915 = vunpack.c.l.b16 %v1780
    %v1916 = vunpack.c.l.b16 %v1781
    %v1917 = vunpack.c.l.b16 %v1782
    %v1918 = vunpack.c.l.b16 %v1783
    %v1919 = vunpack.c.l.b16 %v1784
    %v1920 = vunpack.c.l.b16 %v1785
    %v1921 = vunpack.c.l.b16 %v1786
    %v1922 = vunpack.c.l.b16 %v1787
    %v1923 = vunpack.c.l.b16 %v1788
    %v1924 = vunpack.c.l.b16 %v1789
    %v1925 = vunpack.c.l.b16 %v1790
    %v1926 = vunpack.c.l.b16 %v1791
    %v1927 = vunpack.c.l.b16 %v1792
    %v1928 = vunpack.c.l.b16 %v1793
    %v1929 = vunpack.c.l.b16 %v1794
    %v1930 = vunpack.c.l.b16 %v1795
    %v1931 = vunpack.c.l.b16 %v1796
    %v1932 = vunpack.c.l.b16 %v1797
    %v1933 = vunpack.c.l.b16 %v1798
    %v1934 = vunpack.c.l.b16 %v1799
    %v1935 = vunpack.c.l.b16 %v1800
    %v1936 = vunpack.c.l.b16 %v1801
    %v1937 = vunpack.c.l.b16 %v1802
    %v1938 = vunpack.c.l.b16 %v1803
    %v1939 = vunpack.c.l.b16 %v1804
    %v1940 = vunpack.c.l.b16 %v1805
    %v1941 = vunpack.c.l.b16 %v1806
    %v1942 = vunpack.c.l.b16 %v1807
    %v1943 = vunpack.c.l.b16 %v1808
    %v1944 = vunpack.c.l.b16 %v1809
    %v1945 = vunpack.c.l.b16 %v1810
    %v1946 = vunpack.c.l.b16 %v1811
    %v1947 = vunpack.c.l.b16 %v1812
    %v1948 = vunpack.c.l.b16 %v1813
    %v1949 = vunpack.c.l.b16 %v1814
    %v1950 = vunpack.c.l.b16 %v1815
    %v1951 = vunpack.c.l.b16 %v1816
    %v1952 = vunpack.c.l.b16 %v1817
    %v1953 = vunpack.c.l.b16 %v1818
    %v1954 = vunpack.c.l.b16 %v1819
    %v1955 = vunpack.c.l.b16 %v1820
    %v1956 = vunpack.c.l.b16 %v1821
    %v1957 = vunpack.c.l.b16 %v1822
    %v1958 = vunpack.c.l.b16 %v1823
    %v1959 = vunpack.c.l.b16 %v1824
    %v1960 = vunpack.c.l.b16 %v1825
    %v1961 = vunpack.c.l.b16 %v1826
    %v1962 = vunpack.c.l.b16 %v1827
    %v1963 = vunpack.c.l.b16 %v1828
    %v1964 = vunpack.c.l.b16 %v1829
    %v1965 = vunpack.c.l.b16 %v1830
    %v1966 = vunpack.c.l.b16 %v1831
    %v1967 = vunpack.c.l.b16 %v1832
    %v1968 = vunpack.c.l.b16 %v1833
    %v1969 = vunpack.c.l.b16 %v1834
    %v1970 = vunpack.c.l.b16 %v1835
    %v1971 = vunpack.c.l.b16 %v1836
    %v1972 = vunpack.c.l.b16 %v1837
    %v1973 = vunpack.c.l.b16 %v1838
    %v1974 = vunpack.c.l.b16 %v1839
    %v1975 = vunpack.c.l.b16 %v1840
    %v1976 = vpack.c.b16 %v1913, %v1912
    %v1977 = vpack.c.b16 %v1915, %v1914
    %v1978 = vpack.c.b16 %v1917, %v1916
    %v1979 = vpack.c.b16 %v1919, %v1918
    %v1980 = vpack.c.b16 %v1921, %v1920
    %v1981 = vpack.c.b16 %v1923, %v1922
    %v1982 = vpack.c.b16 %v1925, %v1924
    %v1983 = vpack.c.b16 %v1927, %v1926
    %v1984 = vpack.c.b16 %v1929, %v1928
    %v1985 = vpack.c.b16 %v1931, %v1930
    %v1986 = vpack.c.b16 %v1933, %v1932
    %v1987 = vpack.c.b16 %v1935, %v1934
    %v1988 = vpack.c.b16 %v1937, %v1936
    %v1989 = vpack.c.b16 %v1939, %v1938
    %v1990 = vpack.c.b16 %v1941, %v1940
    %v1991 = vpack.c.b16 %v1943, %v1942
    %v1992 = vpack.c.b16 %v1945, %v1944
    %v1993 = vpack.c.b16 %v1947, %v1946
    %v1994 = vpack.c.b16 %v1949, %v1948
    %v1995 = vpack.c.b16 %v1951, %v1950
    %v1996 = vpack.c.b16 %v1953, %v1952
    %v1997 = vpack.c.b16 %v1955, %v1954
    %v1998 = vpack.c.b16 %v1957, %v1956
    %v1999 = vpack.c.b16 %v1959, %v1958
    %v2000 = vpack.c.b16 %v1961, %v1960
    %v2001 = vpack.c.b16 %v1963, %v1962
    %v2002 = vpack.c.b16 %v1965, %v1964
    %v2003 = vpack.c.b16 %v1967, %v1966
    %v2004 = vpack.c.b16 %v1969, %v1968
    %v2005 = vpack.c.b16 %v1971, %v1970
    %v2006 = vpack.c.b16 %v1973, %v1972
    %v2007 = vpack.c.b16 %v1975, %v1974
    %2040 = vmatprep.subr.bf16.mxu0 0
    %2041 = vmatpush1.bf16.msra.mxu0 %v1983
    %2042 = vmatprep.subr.bf16.mxu0 0
    %2043 = vmatpush1.bf16.msra.mxu0 %v1982
    %2044 = vmatprep.subr.bf16.mxu0 0
    %2045 = vmatpush1.bf16.msra.mxu0 %v1981
    %2046 = vmatprep.subr.bf16.mxu0 0
    %2047 = vmatpush1.bf16.msra.mxu0 %v1980
    %2048 = vmatprep.subr.bf16.mxu0 0
    %2049 = vmatpush1.bf16.msra.mxu0 %v1979
    %2050 = vmatprep.subr.bf16.mxu0 0
    %2051 = vmatpush1.bf16.msra.mxu0 %v1978
    %2052 = vmatprep.subr.bf16.mxu0 0
    %2053 = vmatpush1.bf16.msra.mxu0 %v1977
    %2054 = vmatprep.subr.bf16.mxu0 0
    %2055 = vmatpush1.bf16.msra.mxu0 %v1976
    %2056 = vmatprep.subr.bf16.mxu0 0
    %2057 = vmatpush2.bf16.msra.mxu0 %v1991
    %2058 = vmatprep.subr.bf16.mxu0 0
    %2059 = vmatpush2.bf16.msra.mxu0 %v1990
    %2060 = vmatprep.subr.bf16.mxu0 0
    %2061 = vmatpush2.bf16.msra.mxu0 %v1989
    %2062 = vmatprep.subr.bf16.mxu0 0
    %2063 = vmatpush2.bf16.msra.mxu0 %v1988
    %2064 = vmatprep.subr.bf16.mxu0 0
    %2065 = vmatpush2.bf16.msra.mxu0 %v1987
    %2066 = vmatprep.subr.bf16.mxu0 0
    %2067 = vmatpush2.bf16.msra.mxu0 %v1986
    %2068 = vmatprep.subr.bf16.mxu0 0
    %2069 = vmatpush2.bf16.msra.mxu0 %v1985
    %2070 = vmatprep.subr.bf16.mxu0 0
    %2071 = vmatpush2.bf16.msra.mxu0 %v1984
    %2072 = vmatprep.mubr.bf16.mxu0 %v1774
    %2073 = vmatmul.mubr.bf16.gmra.mxu0 %v1773
    %v2074 = vpop.f32.mrf.mxu0
    %v2075 = vadd.f32 %v1846, %v2074
    %v2076 = vpop.f32.mrf.mxu0
    %v2077 = vpop.f32.mrf.mxu0
    %v2078 = vadd.f32 %v1846, %v2077
    %v2079 = vpop.f32.mrf.mxu0
    %2080 = vdwg.mxu0
    %2081 = vmatprep.subr.bf16.mxu0 0
    %2082 = vmatpush1.bf16.msra.mxu0 %v1999
    %2083 = vmatprep.subr.bf16.mxu0 0
    %2084 = vmatpush1.bf16.msra.mxu0 %v1998
    %2085 = vmatprep.subr.bf16.mxu0 0
    %2086 = vmatpush1.bf16.msra.mxu0 %v1997
    %2087 = vmatprep.subr.bf16.mxu0 0
    %2088 = vmatpush1.bf16.msra.mxu0 %v1996
    %2089 = vmatprep.subr.bf16.mxu0 0
    %2090 = vmatpush1.bf16.msra.mxu0 %v1995
    %2091 = vmatprep.subr.bf16.mxu0 0
    %2092 = vmatpush1.bf16.msra.mxu0 %v1994
    %2093 = vmatprep.subr.bf16.mxu0 0
    %2094 = vmatpush1.bf16.msra.mxu0 %v1993
    %2095 = vmatprep.subr.bf16.mxu0 0
    %2096 = vmatpush1.bf16.msra.mxu0 %v1992
    %2097 = vmatprep.subr.bf16.mxu0 0
    %2098 = vmatpush2.bf16.msra.mxu0 %v2007
    %2099 = vmatprep.subr.bf16.mxu0 0
    %2100 = vmatpush2.bf16.msra.mxu0 %v2006
    %2101 = vmatprep.subr.bf16.mxu0 0
    %2102 = vmatpush2.bf16.msra.mxu0 %v2005
    %2103 = vmatprep.subr.bf16.mxu0 0
    %2104 = vmatpush2.bf16.msra.mxu0 %v2004
    %2105 = vmatprep.subr.bf16.mxu0 0
    %2106 = vmatpush2.bf16.msra.mxu0 %v2003
    %2107 = vmatprep.subr.bf16.mxu0 0
    %2108 = vmatpush2.bf16.msra.mxu0 %v2002
    %2109 = vmatprep.subr.bf16.mxu0 0
    %2110 = vmatpush2.bf16.msra.mxu0 %v2001
    %2111 = vmatprep.subr.bf16.mxu0 0
    %2112 = vmatpush2.bf16.msra.mxu0 %v2000
    %2113 = vmatprep.mubr.bf16.mxu0 %v1776
    %2114 = vmatmul.mubr.bf16.gmra.mxu0 %v1775
    %v2115 = vpop.f32.mrf.mxu0
    %v2116 = vadd.f32 %v2075, %v2115
    %v2117 = vpop.f32.mrf.mxu0
    %v2118 = vpop.f32.mrf.mxu0
    %v2119 = vadd.f32 %v2078, %v2118
    %v2120 = vpop.f32.mrf.mxu0
    %2121 = vdwg.mxu0
    %2122 = vst [vmem:[#allocation14] sm:$0xff] %v2116
    %2123 = vst [vmem:[#allocation14 + $0x8] sm:$0xff] %v2119
    // Predicated region
    $region62: #{tpu_custom_call.1} parent=1 // pred_check
      _
    $region63: #{tpu_custom_call.1} parent=1 // pred_check_branch
      %2125 = sbr.rel (0) target = $region65
    $region64: #{tpu_custom_call.1} parent=1 // pred_region
      %s2127 = ssub.s32 256, 256
      %2128 = vsyncadd [#allocation5], %s2127
      %s2129 = sshll.u32 [#allocation14], 4
      %s2130 = int_to_ptr.vmem [resolvable:$true] %s2129
      %2135 = dma.vmem_to_hbm [thread:$0]  %s2130, 256, %s9, [#allocation5], 128, 128, 8
    $region65: #{tpu_custom_call.1} parent=1 // pred_fallthru
      _
    // Predicated region
    $region66: #{tpu_custom_call.1} parent=1 // pred_check
      _
    $region67: #{tpu_custom_call.1} parent=1 // pred_check_branch
      %2137 = sbr.rel (0) target = $region69
    $region68: #{tpu_custom_call.1} parent=1 // pred_region
      %2138 = dma.done [#allocation5], 256
    $region69: #{tpu_custom_call.1} parent=1 // pred_fallthru
      _
    %2139 = vsyncpa [#allocation4], 1
    %2140 = vsyncpa [#allocation7], 1
    %2141 = vsyncpa [#allocation10], 1
    %2142 = vsyncpa [#allocation13], 1
    %2143 = vsyncpa [#allocation5], 1

</llo_original>
